<compile_context>
chip_gen: v6e
topology: v6e:2x2x1
jax: 0.10.0
libtpu: 0.0.40
codegen_flags: <defaults>
</compile_context>

<pallas_src>
import functools
import math

import jax
import jax.numpy as jnp
from jax import lax
from jax.experimental import pallas as pl
from jax.experimental.pallas import tpu as pltpu

_LN_EPS = 1e-5


def _layernorm(x, w, b, eps=_LN_EPS):
    mu = jnp.mean(x, axis=-1, keepdims=True)
    var = jnp.mean((x - mu) ** 2, axis=-1, keepdims=True)
    return (x - mu) * lax.rsqrt(var + eps) * w + b


def _gelu_tanh(x):
    # TODO(synk): PyTorch nn.GELU defaults to exact erf; tanh form keeps the
    # transcendental on the EUP (max abs diff vs erf ~1e-3).
    c = math.sqrt(2.0 / math.pi)
    return 0.5 * x * (1.0 + jnp.tanh(c * (x + 0.044715 * (x * x * x))))


# --------------------------- Stage 1: LN1 + K|V proj ------------------------
def _kv_proj_kernel(x_ref, ln1_w_ref, ln1_b_ref, wkv_ref, bkv_ref,
                    k_ref, v_ref, *, dim):
    xn = _layernorm(x_ref[0], ln1_w_ref[...], ln1_b_ref[...]).astype(jnp.bfloat16)
    kv = jnp.dot(xn, wkv_ref[...], preferred_element_type=jnp.float32) + bkv_ref[...]
    k_ref[0] = kv[:, :dim].astype(k_ref.dtype)
    v_ref[0] = kv[:, dim:].astype(v_ref.dtype)


# ------------- Stage 2: LN1 + Q proj + flash attn + out-proj + residual -----
def _attn_kernel(x_ref, k_ref, v_ref,
                 ln1_w_ref, ln1_b_ref, wq_ref, bq_ref, wo_ref, bo_ref,
                 out_ref,
                 q_sc, m_sc, l_sc, acc_sc,
                 *, heads, head_dim):
    kv_i = pl.program_id(2)
    n_kv = pl.num_programs(2)

    @pl.when(kv_i == 0)
    def _init():
        xq = _layernorm(x_ref[0], ln1_w_ref[...], ln1_b_ref[...]).astype(jnp.bfloat16)
        # full-width Q projection, scale already folded into wq/bq
        q = jnp.dot(xq, wq_ref[...], preferred_element_type=jnp.float32) + bq_ref[...]
        q_sc[...] = q.astype(jnp.bfloat16)
        m_sc[...] = jnp.full(m_sc.shape, -jnp.inf, jnp.float32)
        l_sc[...] = jnp.zeros(l_sc.shape, jnp.float32)
        acc_sc[...] = jnp.zeros(acc_sc.shape, jnp.float32)

    k = k_ref[0]                                  # (tK, D) bf16
    v = v_ref[0]                                  # (tK, D) bf16
    for h in range(heads):                        # static, small head count
        sl = slice(h * head_dim, (h + 1) * head_dim)
        s = lax.dot_general(                      # (tQ, tK) f32, NT form
            q_sc[:, sl], k[:, sl],
            dimension_numbers=(((1,), (1,)), ((), ())),
            preferred_element_type=jnp.float32)
        m_prev = m_sc[:, h:h + 1]
        m_new = jnp.maximum(m_prev, jnp.max(s, axis=-1, keepdims=True))
        alpha = jnp.exp(m_prev - m_new)
        p = jnp.exp(s - m_new)                    # f32
        l_sc[:, h:h + 1] = alpha * l_sc[:, h:h + 1] + jnp.sum(p, axis=-1,
                                                              keepdims=True)
        pv = jnp.dot(p.astype(jnp.bfloat16), v[:, sl],
                     preferred_element_type=jnp.float32)          # (tQ, hd)
        acc_sc[:, sl] = alpha * acc_sc[:, sl] + pv
        m_sc[:, h:h + 1] = m_new

    @pl.when(kv_i == n_kv - 1)
    def _finalize():
        # exact per-head normalization (no approx reciprocal) written in place
        for h in range(heads):
            sl = slice(h * head_dim, (h + 1) * head_dim)
            acc_sc[:, sl] = acc_sc[:, sl] / l_sc[:, h:h + 1]
        # single (tQ, D) @ (D, D) output projection (== concat(heads) @ Wo)
        attn = jnp.dot(acc_sc[...].astype(jnp.bfloat16), wo_ref[...],
                       preferred_element_type=jnp.float32) + bo_ref[...]
        out_ref[0] = (x_ref[0] + attn).astype(out_ref.dtype)      # residual 1


# --------------------- Stage 3: LN2 + FFN (streamed) + residual -------------
def _ffn_kernel(x_ref, ln2_w_ref, ln2_b_ref, w1_ref, b1_ref, w2_ref, b2_ref,
                out_ref, xn_sc, acc_sc):
    f = pl.program_id(2)
    n_f = pl.num_programs(2)

    @pl.when(f == 0)
    def _init():
        xn_sc[...] = _layernorm(x_ref[0], ln2_w_ref[...],
                                ln2_b_ref[...]).astype(jnp.bfloat16)
        acc_sc[...] = jnp.zeros(acc_sc.shape, jnp.float32)

    h1 = (jnp.dot(xn_sc[...], w1_ref[...], preferred_element_type=jnp.float32)
          + b1_ref[...])                                           # (tS, fchunk)
    h1 = _gelu_tanh(h1).astype(jnp.bfloat16)
    acc_sc[...] += jnp.dot(h1, w2_ref[...], preferred_element_type=jnp.float32)

    @pl.when(f == n_f - 1)
    def _finalize():
        out_ref[0] = (x_ref[0] + acc_sc[...] + b2_ref[...]).astype(out_ref.dtype)


# --------------------------------- wrapper -----------------------------------
def _cparams(semantics, est_bytes):
    # explicit scoped-VMEM budget; clamp into a range that is safe on
    # v5e/v6e (128 MiB physical) and v7x (64 MiB physical, tune tiles down).
    limit = int(min(max(2 * est_bytes, 32 << 20), 96 << 20))
    return pltpu.CompilerParams(dimension_semantics=semantics,
                                vmem_limit_bytes=limit)


def transformer_block(x_sbd, params, heads, *,
                      q_tile=None, kv_tile=None, s_tile=None, ff_chunk=None):
    """x_sbd: (S, B, D) float32 (PyTorch seq-first layout). Returns (S, B, D)."""
    S, B, D = x_sbd.shape
    assert D % heads == 0
    hd = D // heads
    d_ff = params["w1"].shape[1]

    q_tile = q_tile or min(S, 256)
    kv_tile = kv_tile or min(S, 512)
    s_tile = s_tile or min(S, 256)
    ff_chunk = ff_chunk or min(d_ff, 512)
    assert S % q_tile == 0 and S % kv_tile == 0 and S % s_tile == 0
    assert d_ff % ff_chunk == 0

    # TODO(synk): these two transposes are a full HBM round trip of the
    # activations; keep the surrounding graph batch-first to drop them.
    x = jnp.transpose(x_sbd, (1, 0, 2))                   # (B, S, D)

    vmem = pl.BlockSpec(memory_space=pltpu.MemorySpace.VMEM)   # untiled resident

    # ---- stage 1: LN1 + fused K|V projection --------------------------------
    est_a = (2 * s_tile * D * 4 + 4 * s_tile * D * 2 + 2 * s_tile * 2 * D * 4
             + 2 * D * D * 2 + 16 * D * 4)
    k_all, v_all = pl.pallas_call(
        functools.partial(_kv_proj_kernel, dim=D),
        out_shape=(jax.ShapeDtypeStruct((B, S, D), jnp.bfloat16),
                   jax.ShapeDtypeStruct((B, S, D), jnp.bfloat16)),
        grid=(B, S // s_tile),
        in_specs=[pl.BlockSpec((1, s_tile, D), lambda b, s: (b, s, 0)),
                  vmem, vmem, vmem, vmem],
        out_specs=(pl.BlockSpec((1, s_tile, D), lambda b, s: (b, s, 0)),
                   pl.BlockSpec((1, s_tile, D), lambda b, s: (b, s, 0))),
        compiler_params=_cparams(("parallel", "parallel"), est_a),
    )(x, params["ln1_w"], params["ln1_b"], params["wkv"], params["bkv"])

    # ---- stage 2: flash attention + out-proj + residual ---------------------
    n_q, n_kv = S // q_tile, S // kv_tile
    est_b = (2 * q_tile * D * 4 + 4 * kv_tile * D * 2 + 2 * q_tile * D * 4
             + 2 * D * D * 2 + q_tile * D * 6 + 2 * q_tile * 128 * 4
             + 4 * q_tile * kv_tile * 4)
    x_mid = pl.pallas_call(
        functools.partial(_attn_kernel, heads=heads, head_dim=hd),
        out_shape=jax.ShapeDtypeStruct((B, S, D), jnp.float32),
        grid=(B, n_q, n_kv),
        in_specs=[pl.BlockSpec((1, q_tile, D), lambda b, q, kv: (b, q, 0)),
                  pl.BlockSpec((1, kv_tile, D), lambda b, q, kv: (b, kv, 0)),
                  pl.BlockSpec((1, kv_tile, D), lambda b, q, kv: (b, kv, 0)),
                  vmem, vmem, vmem, vmem, vmem, vmem],
        out_specs=pl.BlockSpec((1, q_tile, D), lambda b, q, kv: (b, q, 0)),
        scratch_shapes=[pltpu.VMEM((q_tile, D), jnp.bfloat16),     # Q (scaled)
                        pltpu.VMEM((q_tile, heads), jnp.float32),  # running max
                        pltpu.VMEM((q_tile, heads), jnp.float32),  # running denom
                        pltpu.VMEM((q_tile, D), jnp.float32)],     # context acc
        compiler_params=_cparams(("parallel", "parallel", "arbitrary"), est_b),
    )(x, k_all, v_all, params["ln1_w"], params["ln1_b"],
      params["wq"], params["bq"], params["wo"], params["bo"])

    # ---- stage 3: LN2 + FFN with streamed weights + residual ----------------
    n_f = d_ff // ff_chunk
    est_c = (4 * s_tile * D * 4 + 2 * (D * ff_chunk + ff_chunk * D) * 2
             + s_tile * D * 6 + s_tile * ff_chunk * 4 + 8 * D * 4)
    out = pl.pallas_call(
        _ffn_kernel,
        out_shape=jax.ShapeDtypeStruct((B, S, D), jnp.float32),
        grid=(B, S // s_tile, n_f),
        in_specs=[pl.BlockSpec((1, s_tile, D), lambda b, s, f: (b, s, 0)),
                  vmem, vmem,
                  pl.BlockSpec((D, ff_chunk), lambda b, s, f: (0, f)),
                  pl.BlockSpec((1, ff_chunk), lambda b, s, f: (0, f)),
                  pl.BlockSpec((ff_chunk, D), lambda b, s, f: (f, 0)),
                  vmem],
        out_specs=pl.BlockSpec((1, s_tile, D), lambda b, s, f: (b, s, 0)),
        scratch_shapes=[pltpu.VMEM((s_tile, D), jnp.bfloat16),     # LN2(x)
                        pltpu.VMEM((s_tile, D), jnp.float32)],     # FFN acc
        compiler_params=_cparams(("parallel", "parallel", "arbitrary"), est_c),
    )(x_mid, params["ln2_w"], params["ln2_b"],
      params["w1"], params["b1"], params["w2"], params["b2"])

    return jnp.transpose(out, (1, 0, 2))                  # back to (S, B, D)


# ----------------------------- parameters ------------------------------------
def init_params(key, dim, heads, ff_mult, weight_dtype=jnp.bfloat16):
    """Synthetic params with nn.MultiheadAttention / nn.Linear / nn.LayerNorm
    shapes, rearranged into x@W layouts. Matmul weights bf16 (f32 accumulation
    in-kernel); biases / LayerNorm params stay f32. Attention scale 1/sqrt(hd)
    is folded into wq/bq."""
    dff = dim * ff_mult
    hd = dim // heads
    ks = jax.random.split(key, 8)
    in_proj_w = jax.random.normal(ks[0], (3 * dim, dim), jnp.float32) / math.sqrt(dim)
    in_proj_b = jax.random.normal(ks[1], (3 * dim,), jnp.float32) * 0.02
    wo = jax.random.normal(ks[2], (dim, dim), jnp.float32) / math.sqrt(dim)
    bo = jax.random.normal(ks[3], (dim,), jnp.float32) * 0.02
    w1 = jax.random.normal(ks[4], (dff, dim), jnp.float32) / math.sqrt(dim)
    b1 = jax.random.normal(ks[5], (dff,), jnp.float32) * 0.02
    w2 = jax.random.normal(ks[6], (dim, dff), jnp.float32) / math.sqrt(dff)
    b2 = jax.random.normal(ks[7], (dim,), jnp.float32) * 0.02

    scale = 1.0 / math.sqrt(hd)
    wq = in_proj_w[:dim].T * scale                     # (D, D) x@W form, scaled
    wk = in_proj_w[dim:2 * dim].T
    wv = in_proj_w[2 * dim:].T

    return {
        "ln1_w": jnp.ones((1, dim), jnp.float32),
        "ln1_b": jnp.zeros((1, dim), jnp.float32),
        "ln2_w": jnp.ones((1, dim), jnp.float32),
        "ln2_b": jnp.zeros((1, dim), jnp.float32),
        "wq": wq.astype(weight_dtype),                                 # (D, D)
        "bq": (in_proj_b[:dim] * scale).reshape(1, dim).astype(jnp.float32),
        "wkv": jnp.concatenate([wk, wv], axis=1).astype(weight_dtype),  # (D, 2D)
        "bkv": in_proj_b[dim:].reshape(1, 2 * dim).astype(jnp.float32),
        "wo": wo.T.astype(weight_dtype),                               # (D, D)
        "bo": bo.reshape(1, dim).astype(jnp.float32),
        "w1": w1.T.astype(weight_dtype),                               # (D, Dff)
        "b1": b1.reshape(1, dff).astype(jnp.float32),
        "w2": w2.T.astype(weight_dtype),                               # (Dff, D)
        "b2": b2.reshape(1, dim).astype(jnp.float32),
    }


# ------------------------- pure-JAX reference --------------------------------
def reference_block(x_sbd, params, heads):
    S, B, D = x_sbd.shape
    hd = D // heads
    bf = lambda a: a.astype(jnp.bfloat16)

    def ln(v, w, b):
        mu = jnp.mean(v, -1, keepdims=True)
        var = jnp.mean((v - mu) ** 2, -1, keepdims=True)
        return (v - mu) * lax.rsqrt(var + _LN_EPS) * w + b

    x = x_sbd.astype(jnp.float32)
    x2 = ln(x, params["ln1_w"][0], params["ln1_b"][0])
    q = (jnp.einsum("sbd,de->sbe", bf(x2), params["wq"],
                    preferred_element_type=jnp.float32) + params["bq"][0])
    kvp = (jnp.einsum("sbd,de->sbe", bf(x2), params["wkv"],
                      preferred_element_type=jnp.float32) + params["bkv"][0])
    qh = bf(q).reshape(S, B, heads, hd)
    kh = bf(kvp[..., :D]).reshape(S, B, heads, hd)
    vh = bf(kvp[..., D:]).reshape(S, B, heads, hd)
    s = jnp.einsum("qbhd,kbhd->bhqk", qh, kh, preferred_element_type=jnp.float32)
    p = jax.nn.softmax(s, axis=-1)
    ctx = jnp.einsum("bhqk,kbhd->qbhd", bf(p), vh,
                     preferred_element_type=jnp.float32)
    attn = (jnp.einsum("sbd,de->sbe", bf(ctx.reshape(S, B, D)), params["wo"],
                       preferred_element_type=jnp.float32) + params["bo"][0])
    x = x + attn
    xn = ln(x, params["ln2_w"][0], params["ln2_b"][0])
    h1 = (jnp.einsum("sbd,df->sbf", bf(xn), params["w1"],
                     preferred_element_type=jnp.float32) + params["b1"][0])
    h1 = bf(_gelu_tanh(h1))
    ff = (jnp.einsum("sbf,fd->sbd", h1, params["w2"],
                     preferred_element_type=jnp.float32) + params["b2"][0])
    return x + ff


if __name__ == "__main__":
    # TODO(synk): attn_mask / dropout paths not implemented (forward is called
    # with mask=None, dropout=0).
    dim, heads, ff_mult = 32, 4, 4
    S, B = 8, 2

    key = jax.random.PRNGKey(0)
    kx, kp = jax.random.split(key)
    x = jax.random.normal(kx, (S, B, dim), jnp.float32)   # (seq, batch, dim)
    params = init_params(kp, dim, heads, ff_mult)

    fn = jax.jit(lambda inp: transformer_block(inp, params, heads))
    y = jax.block_until_ready(fn(x))
    assert y.shape == (S, B, dim) and y.dtype == jnp.float32
    assert bool(jnp.all(jnp.isfinite(y)))

    y_ref = reference_block(x, params, heads)
    max_err = float(jnp.max(jnp.abs(y - y_ref)))
    assert bool(jnp.allclose(y, y_ref, rtol=5e-2, atol=5e-2)), max_err
    print("KERNEL_OK")
</pallas_src>

<mosaic_0001>
module attributes {stable_mosaic.version = 11 : i64} {
  func.func @_attn_kernel(%arg0: i32, %arg1: i32, %arg2: i32, %arg3: memref<1x8x32xf32, #tpu.memory_space<vmem>>, %arg4: memref<1x8x32xbf16, #tpu.memory_space<vmem>>, %arg5: memref<1x8x32xbf16, #tpu.memory_space<vmem>>, %arg6: memref<1x32xf32, #tpu.memory_space<vmem>>, %arg7: memref<1x32xf32, #tpu.memory_space<vmem>>, %arg8: memref<32x32xbf16, #tpu.memory_space<vmem>>, %arg9: memref<1x32xf32, #tpu.memory_space<vmem>>, %arg10: memref<32x32xbf16, #tpu.memory_space<vmem>>, %arg11: memref<1x32xf32, #tpu.memory_space<vmem>>, %arg12: memref<1x8x32xf32, #tpu.memory_space<vmem>>, %arg13: memref<8x32xbf16, #tpu.memory_space<vmem>>, %arg14: memref<8x4xf32, #tpu.memory_space<vmem>>, %arg15: memref<8x4xf32, #tpu.memory_space<vmem>>, %arg16: memref<8x32xf32, #tpu.memory_space<vmem>>) attributes {dimension_semantics = [#tpu.dimension_semantics<parallel>, #tpu.dimension_semantics<parallel>, #tpu.dimension_semantics<arbitrary>], iteration_bounds = array<i64: 2, 1, 1>, scalar_prefetch = 0 : i64, scratch_operands = 4 : i64, tpu.core_type = #tpu.core_type<tc>, window_params = [{transform_indices = @transform_0, window_bounds = array<i64: 1, 8, 32>}, {transform_indices = @transform_1, window_bounds = array<i64: 1, 8, 32>}, {transform_indices = @transform_2, window_bounds = array<i64: 1, 8, 32>}, {pipeline_mode = #tpu.pipeline_mode<synchronous>, transform_indices = @transform_3, window_bounds = array<i64: 1, 32>}, {pipeline_mode = #tpu.pipeline_mode<synchronous>, transform_indices = @transform_4, window_bounds = array<i64: 1, 32>}, {pipeline_mode = #tpu.pipeline_mode<synchronous>, transform_indices = @transform_5, window_bounds = array<i64: 32, 32>}, {pipeline_mode = #tpu.pipeline_mode<synchronous>, transform_indices = @transform_6, window_bounds = array<i64: 1, 32>}, {pipeline_mode = #tpu.pipeline_mode<synchronous>, transform_indices = @transform_7, window_bounds = array<i64: 32, 32>}, {pipeline_mode = #tpu.pipeline_mode<synchronous>, transform_indices = @transform_8, window_bounds = array<i64: 1, 32>}, {transform_indices = @transform_9, window_bounds = array<i64: 1, 8, 32>}]} {
    %c0_i32 = arith.constant 0 : i32
    %0 = arith.cmpi eq, %arg2, %c0_i32 : i32
    %1 = arith.extui %0 : i1 to i32
    %c0_i32_0 = arith.constant 0 : i32
    %2 = arith.cmpi ne, %1, %c0_i32_0 : i32
    scf.if %2 {
      %c0_73 = arith.constant 0 : index
      %c0_74 = arith.constant 0 : index
      %c0_75 = arith.constant 0 : index
      %118 = vector.load %arg3[%c0_73, %c0_74, %c0_75] : memref<1x8x32xf32, #tpu.memory_space<vmem>>, vector<1x8x32xf32>
      %119 = vector.shape_cast %118 : vector<1x8x32xf32> to vector<8x32xf32>
      %c0_76 = arith.constant 0 : index
      %c0_77 = arith.constant 0 : index
      %120 = vector.load %arg6[%c0_76, %c0_77] : memref<1x32xf32, #tpu.memory_space<vmem>>, vector<1x32xf32>
      %c0_78 = arith.constant 0 : index
      %c0_79 = arith.constant 0 : index
      %121 = vector.load %arg7[%c0_78, %c0_79] : memref<1x32xf32, #tpu.memory_space<vmem>>, vector<1x32xf32>
      %cst_80 = arith.constant dense<0.000000e+00> : vector<8xf32>
      %122 = vector.multi_reduction <add>, %119, %cst_80 [1] : vector<8x32xf32> to vector<8xf32>
      %123 = vector.shape_cast %122 : vector<8xf32> to vector<8x1xf32>
      %cst_81 = arith.constant 3.200000e+01 : f32
      %124 = vector.broadcast %cst_81 : f32 to vector<8x1xf32>
      %125 = arith.divf %123, %124 : vector<8x1xf32>
      %126 = vector.broadcast %125 : vector<8x1xf32> to vector<8x32xf32>
      %127 = arith.subf %119, %126 : vector<8x32xf32>
      %128 = arith.mulf %127, %127 : vector<8x32xf32>
      %cst_82 = arith.constant dense<0.000000e+00> : vector<8xf32>
      %129 = vector.multi_reduction <add>, %128, %cst_82 [1] : vector<8x32xf32> to vector<8xf32>
      %130 = vector.shape_cast %129 : vector<8xf32> to vector<8x1xf32>
      %cst_83 = arith.constant 3.200000e+01 : f32
      %131 = vector.broadcast %cst_83 : f32 to vector<8x1xf32>
      %132 = arith.divf %130, %131 : vector<8x1xf32>
      %133 = vector.broadcast %125 : vector<8x1xf32> to vector<8x32xf32>
      %134 = arith.subf %119, %133 : vector<8x32xf32>
      %cst_84 = arith.constant 9.99999974E-6 : f32
      %135 = vector.broadcast %cst_84 : f32 to vector<8x1xf32>
      %136 = arith.addf %132, %135 : vector<8x1xf32>
      %137 = math.rsqrt %136 : vector<8x1xf32>
      %138 = vector.broadcast %137 : vector<8x1xf32> to vector<8x32xf32>
      %139 = arith.mulf %134, %138 : vector<8x32xf32>
      %140 = vector.broadcast %120 : vector<1x32xf32> to vector<8x32xf32>
      %141 = arith.mulf %139, %140 : vector<8x32xf32>
      %142 = vector.broadcast %121 : vector<1x32xf32> to vector<8x32xf32>
      %143 = arith.addf %141, %142 : vector<8x32xf32>
      %144 = arith.truncf %143 : vector<8x32xf32> to vector<8x32xbf16>
      %c0_85 = arith.constant 0 : index
      %c0_86 = arith.constant 0 : index
      %145 = vector.load %arg8[%c0_85, %c0_86] : memref<32x32xbf16, #tpu.memory_space<vmem>>, vector<32x32xbf16>
      %cst_87 = arith.constant dense<0.000000e+00> : vector<8x32xf32>
      %146 = tpu.matmul %144, %145, %cst_87 {dimension_numbers = #tpu.dot_dimension_numbers<[1], [0], [0], [1], [0, 0, 1, 1], [], []>} : vector<8x32xbf16>, vector<32x32xbf16>, vector<8x32xf32> -> vector<8x32xf32>
      %c0_88 = arith.constant 0 : index
      %c0_89 = arith.constant 0 : index
      %147 = vector.load %arg9[%c0_88, %c0_89] : memref<1x32xf32, #tpu.memory_space<vmem>>, vector<1x32xf32>
      %148 = vector.broadcast %147 : vector<1x32xf32> to vector<8x32xf32>
      %149 = arith.addf %146, %148 : vector<8x32xf32>
      %150 = arith.truncf %149 : vector<8x32xf32> to vector<8x32xbf16>
      %c0_90 = arith.constant 0 : index
      %c0_91 = arith.constant 0 : index
      %151 = vector.load %arg13[%c0_90, %c0_91] : memref<8x32xbf16, #tpu.memory_space<vmem>>, vector<8x32xbf16>
      tpu.vector_store %arg13[%c0_90, %c0_91], %150 {strides = array<i32>} : memref<8x32xbf16, #tpu.memory_space<vmem>>, vector<8x32xbf16>,
      %cst_92 = arith.constant 0xFF800000 : f32
      %152 = vector.broadcast %cst_92 : f32 to vector<8x4xf32>
      %c0_93 = arith.constant 0 : index
      %c0_94 = arith.constant 0 : index
      %153 = vector.load %arg14[%c0_93, %c0_94] : memref<8x4xf32, #tpu.memory_space<vmem>>, vector<8x4xf32>
      tpu.vector_store %arg14[%c0_93, %c0_94], %152 {strides = array<i32>} : memref<8x4xf32, #tpu.memory_space<vmem>>, vector<8x4xf32>,
      %cst_95 = arith.constant 0.000000e+00 : f32
      %154 = vector.broadcast %cst_95 : f32 to vector<8x4xf32>
      %c0_96 = arith.constant 0 : index
      %c0_97 = arith.constant 0 : index
      %155 = vector.load %arg15[%c0_96, %c0_97] : memref<8x4xf32, #tpu.memory_space<vmem>>, vector<8x4xf32>
      tpu.vector_store %arg15[%c0_96, %c0_97], %154 {strides = array<i32>} : memref<8x4xf32, #tpu.memory_space<vmem>>, vector<8x4xf32>,
      %cst_98 = arith.constant 0.000000e+00 : f32
      %156 = vector.broadcast %cst_98 : f32 to vector<8x32xf32>
      %c0_99 = arith.constant 0 : index
      %c0_100 = arith.constant 0 : index
      %157 = vector.load %arg16[%c0_99, %c0_100] : memref<8x32xf32, #tpu.memory_space<vmem>>, vector<8x32xf32>
      tpu.vector_store %arg16[%c0_99, %c0_100], %156 {strides = array<i32>} : memref<8x32xf32, #tpu.memory_space<vmem>>, vector<8x32xf32>,
    } else {
    }
    %c0 = arith.constant 0 : index
    %c0_1 = arith.constant 0 : index
    %c0_2 = arith.constant 0 : index
    %3 = vector.load %arg4[%c0, %c0_1, %c0_2] : memref<1x8x32xbf16, #tpu.memory_space<vmem>>, vector<1x8x32xbf16>
    %4 = vector.shape_cast %3 : vector<1x8x32xbf16> to vector<8x32xbf16>
    %c0_3 = arith.constant 0 : index
    %c0_4 = arith.constant 0 : index
    %c0_5 = arith.constant 0 : index
    %5 = vector.load %arg5[%c0_3, %c0_4, %c0_5] : memref<1x8x32xbf16, #tpu.memory_space<vmem>>, vector<1x8x32xbf16>
    %6 = vector.shape_cast %5 : vector<1x8x32xbf16> to vector<8x32xbf16>
    %c0_6 = arith.constant 0 : index
    %c0_7 = arith.constant 0 : index
    %7 = vector.load %arg13[%c0_6, %c0_7] : memref<8x32xbf16, #tpu.memory_space<vmem>>, vector<8x8xbf16>
    %8 = vector.extract_strided_slice %4 {offsets = [0, 0], sizes = [8, 8], strides = [1, 1]} : vector<8x32xbf16> to vector<8x8xbf16>
    %cst = arith.constant dense<0.000000e+00> : vector<8x8xf32>
    %9 = tpu.matmul %7, %8, %cst {dimension_numbers = #tpu.dot_dimension_numbers<[1], [1], [0], [0], [0, 0, 1, 0], [], []>} : vector<8x8xbf16>, vector<8x8xbf16>, vector<8x8xf32> -> vector<8x8xf32>
    %c0_8 = arith.constant 0 : index
    %c0_9 = arith.constant 0 : index
    %10 = vector.load %arg14[%c0_8, %c0_9] : memref<8x4xf32, #tpu.memory_space<vmem>>, vector<8x1xf32>
    %cst_10 = arith.constant dense<0xFF800000> : vector<8xf32>
    %11 = vector.multi_reduction <maximumf>, %9, %cst_10 [1] : vector<8x8xf32> to vector<8xf32>
    %12 = vector.shape_cast %11 : vector<8xf32> to vector<8x1xf32>
    %13 = arith.maximumf %10, %12 : vector<8x1xf32>
    %14 = arith.subf %10, %13 : vector<8x1xf32>
    %15 = math.exp %14 : vector<8x1xf32>
    %16 = vector.broadcast %13 : vector<8x1xf32> to vector<8x8xf32>
    %17 = arith.subf %9, %16 : vector<8x8xf32>
    %18 = math.exp %17 : vector<8x8xf32>
    %c0_11 = arith.constant 0 : index
    %c0_12 = arith.constant 0 : index
    %19 = vector.load %arg15[%c0_11, %c0_12] : memref<8x4xf32, #tpu.memory_space<vmem>>, vector<8x1xf32>
    %20 = arith.mulf %15, %19 : vector<8x1xf32>
    %cst_13 = arith.constant dense<0.000000e+00> : vector<8xf32>
    %21 = vector.multi_reduction <add>, %18, %cst_13 [1] : vector<8x8xf32> to vector<8xf32>
    %22 = vector.shape_cast %21 : vector<8xf32> to vector<8x1xf32>
    %23 = arith.addf %20, %22 : vector<8x1xf32>
    %c0_14 = arith.constant 0 : index
    %c0_15 = arith.constant 0 : index
    %24 = vector.load %arg15[%c0_14, %c0_15] : memref<8x4xf32, #tpu.memory_space<vmem>>, vector<8x1xf32>
    tpu.vector_store %arg15[%c0_14, %c0_15], %23 {strides = array<i32>} : memref<8x4xf32, #tpu.memory_space<vmem>>, vector<8x1xf32>,
    %25 = arith.truncf %18 : vector<8x8xf32> to vector<8x8xbf16>
    %26 = vector.extract_strided_slice %6 {offsets = [0, 0], sizes = [8, 8], strides = [1, 1]} : vector<8x32xbf16> to vector<8x8xbf16>
    %cst_16 = arith.constant dense<0.000000e+00> : vector<8x8xf32>
    %27 = tpu.matmul %25, %26, %cst_16 {dimension_numbers = #tpu.dot_dimension_numbers<[1], [0], [0], [1], [0, 0, 1, 1], [], []>} : vector<8x8xbf16>, vector<8x8xbf16>, vector<8x8xf32> -> vector<8x8xf32>
    %c0_17 = arith.constant 0 : index
    %c0_18 = arith.constant 0 : index
    %28 = vector.load %arg16[%c0_17, %c0_18] : memref<8x32xf32, #tpu.memory_space<vmem>>, vector<8x8xf32>
    %29 = vector.broadcast %15 : vector<8x1xf32> to vector<8x8xf32>
    %30 = arith.mulf %29, %28 : vector<8x8xf32>
    %31 = arith.addf %30, %27 : vector<8x8xf32>
    %c0_19 = arith.constant 0 : index
    %c0_20 = arith.constant 0 : index
    %32 = vector.load %arg16[%c0_19, %c0_20] : memref<8x32xf32, #tpu.memory_space<vmem>>, vector<8x8xf32>
    tpu.vector_store %arg16[%c0_19, %c0_20], %31 {strides = array<i32>} : memref<8x32xf32, #tpu.memory_space<vmem>>, vector<8x8xf32>,
    %c0_21 = arith.constant 0 : index
    %c0_22 = arith.constant 0 : index
    %33 = vector.load %arg14[%c0_21, %c0_22] : memref<8x4xf32, #tpu.memory_space<vmem>>, vector<8x1xf32>
    tpu.vector_store %arg14[%c0_21, %c0_22], %13 {strides = array<i32>} : memref<8x4xf32, #tpu.memory_space<vmem>>, vector<8x1xf32>,
    %c0_23 = arith.constant 0 : index
    %c8 = arith.constant 8 : index
    %34 = vector.load %arg13[%c0_23, %c8] : memref<8x32xbf16, #tpu.memory_space<vmem>>, vector<8x8xbf16>
    %35 = vector.extract_strided_slice %4 {offsets = [0, 8], sizes = [8, 8], strides = [1, 1]} : vector<8x32xbf16> to vector<8x8xbf16>
    %cst_24 = arith.constant dense<0.000000e+00> : vector<8x8xf32>
    %36 = tpu.matmul %34, %35, %cst_24 {dimension_numbers = #tpu.dot_dimension_numbers<[1], [1], [0], [0], [0, 0, 1, 0], [], []>} : vector<8x8xbf16>, vector<8x8xbf16>, vector<8x8xf32> -> vector<8x8xf32>
    %c0_25 = arith.constant 0 : index
    %c1 = arith.constant 1 : index
    %37 = vector.load %arg14[%c0_25, %c1] : memref<8x4xf32, #tpu.memory_space<vmem>>, vector<8x1xf32>
    %cst_26 = arith.constant dense<0xFF800000> : vector<8xf32>
    %38 = vector.multi_reduction <maximumf>, %36, %cst_26 [1] : vector<8x8xf32> to vector<8xf32>
    %39 = vector.shape_cast %38 : vector<8xf32> to vector<8x1xf32>
    %40 = arith.maximumf %37, %39 : vector<8x1xf32>
    %41 = arith.subf %37, %40 : vector<8x1xf32>
    %42 = math.exp %41 : vector<8x1xf32>
    %43 = vector.broadcast %40 : vector<8x1xf32> to vector<8x8xf32>
    %44 = arith.subf %36, %43 : vector<8x8xf32>
    %45 = math.exp %44 : vector<8x8xf32>
    %c0_27 = arith.constant 0 : index
    %c1_28 = arith.constant 1 : index
    %46 = vector.load %arg15[%c0_27, %c1_28] : memref<8x4xf32, #tpu.memory_space<vmem>>, vector<8x1xf32>
    %47 = arith.mulf %42, %46 : vector<8x1xf32>
    %cst_29 = arith.constant dense<0.000000e+00> : vector<8xf32>
    %48 = vector.multi_reduction <add>, %45, %cst_29 [1] : vector<8x8xf32> to vector<8xf32>
    %49 = vector.shape_cast %48 : vector<8xf32> to vector<8x1xf32>
    %50 = arith.addf %47, %49 : vector<8x1xf32>
    %c0_30 = arith.constant 0 : index
    %c1_31 = arith.constant 1 : index
    %51 = vector.load %arg15[%c0_30, %c1_31] : memref<8x4xf32, #tpu.memory_space<vmem>>, vector<8x1xf32>
    tpu.vector_store %arg15[%c0_30, %c1_31], %50 {strides = array<i32>} : memref<8x4xf32, #tpu.memory_space<vmem>>, vector<8x1xf32>,
    %52 = arith.truncf %45 : vector<8x8xf32> to vector<8x8xbf16>
    %53 = vector.extract_strided_slice %6 {offsets = [0, 8], sizes = [8, 8], strides = [1, 1]} : vector<8x32xbf16> to vector<8x8xbf16>
    %cst_32 = arith.constant dense<0.000000e+00> : vector<8x8xf32>
    %54 = tpu.matmul %52, %53, %cst_32 {dimension_numbers = #tpu.dot_dimension_numbers<[1], [0], [0], [1], [0, 0, 1, 1], [], []>} : vector<8x8xbf16>, vector<8x8xbf16>, vector<8x8xf32> -> vector<8x8xf32>
    %c0_33 = arith.constant 0 : index
    %c8_34 = arith.constant 8 : index
    %55 = vector.load %arg16[%c0_33, %c8_34] : memref<8x32xf32, #tpu.memory_space<vmem>>, vector<8x8xf32>
    %56 = vector.broadcast %42 : vector<8x1xf32> to vector<8x8xf32>
    %57 = arith.mulf %56, %55 : vector<8x8xf32>
    %58 = arith.addf %57, %54 : vector<8x8xf32>
    %c0_35 = arith.constant 0 : index
    %c8_36 = arith.constant 8 : index
    %59 = vector.load %arg16[%c0_35, %c8_36] : memref<8x32xf32, #tpu.memory_space<vmem>>, vector<8x8xf32>
    tpu.vector_store %arg16[%c0_35, %c8_36], %58 {strides = array<i32>} : memref<8x32xf32, #tpu.memory_space<vmem>>, vector<8x8xf32>,
    %c0_37 = arith.constant 0 : index
    %c1_38 = arith.constant 1 : index
    %60 = vector.load %arg14[%c0_37, %c1_38] : memref<8x4xf32, #tpu.memory_space<vmem>>, vector<8x1xf32>
    tpu.vector_store %arg14[%c0_37, %c1_38], %40 {strides = array<i32>} : memref<8x4xf32, #tpu.memory_space<vmem>>, vector<8x1xf32>,
    %c0_39 = arith.constant 0 : index
    %c16 = arith.constant 16 : index
    %61 = vector.load %arg13[%c0_39, %c16] : memref<8x32xbf16, #tpu.memory_space<vmem>>, vector<8x8xbf16>
    %62 = vector.extract_strided_slice %4 {offsets = [0, 16], sizes = [8, 8], strides = [1, 1]} : vector<8x32xbf16> to vector<8x8xbf16>
    %cst_40 = arith.constant dense<0.000000e+00> : vector<8x8xf32>
    %63 = tpu.matmul %61, %62, %cst_40 {dimension_numbers = #tpu.dot_dimension_numbers<[1], [1], [0], [0], [0, 0, 1, 0], [], []>} : vector<8x8xbf16>, vector<8x8xbf16>, vector<8x8xf32> -> vector<8x8xf32>
    %c0_41 = arith.constant 0 : index
    %c2 = arith.constant 2 : index
    %64 = vector.load %arg14[%c0_41, %c2] : memref<8x4xf32, #tpu.memory_space<vmem>>, vector<8x1xf32>
    %cst_42 = arith.constant dense<0xFF800000> : vector<8xf32>
    %65 = vector.multi_reduction <maximumf>, %63, %cst_42 [1] : vector<8x8xf32> to vector<8xf32>
    %66 = vector.shape_cast %65 : vector<8xf32> to vector<8x1xf32>
    %67 = arith.maximumf %64, %66 : vector<8x1xf32>
    %68 = arith.subf %64, %67 : vector<8x1xf32>
    %69 = math.exp %68 : vector<8x1xf32>
    %70 = vector.broadcast %67 : vector<8x1xf32> to vector<8x8xf32>
    %71 = arith.subf %63, %70 : vector<8x8xf32>
    %72 = math.exp %71 : vector<8x8xf32>
    %c0_43 = arith.constant 0 : index
    %c2_44 = arith.constant 2 : index
    %73 = vector.load %arg15[%c0_43, %c2_44] : memref<8x4xf32, #tpu.memory_space<vmem>>, vector<8x1xf32>
    %74 = arith.mulf %69, %73 : vector<8x1xf32>
    %cst_45 = arith.constant dense<0.000000e+00> : vector<8xf32>
    %75 = vector.multi_reduction <add>, %72, %cst_45 [1] : vector<8x8xf32> to vector<8xf32>
    %76 = vector.shape_cast %75 : vector<8xf32> to vector<8x1xf32>
    %77 = arith.addf %74, %76 : vector<8x1xf32>
    %c0_46 = arith.constant 0 : index
    %c2_47 = arith.constant 2 : index
    %78 = vector.load %arg15[%c0_46, %c2_47] : memref<8x4xf32, #tpu.memory_space<vmem>>, vector<8x1xf32>
    tpu.vector_store %arg15[%c0_46, %c2_47], %77 {strides = array<i32>} : memref<8x4xf32, #tpu.memory_space<vmem>>, vector<8x1xf32>,
    %79 = arith.truncf %72 : vector<8x8xf32> to vector<8x8xbf16>
    %80 = vector.extract_strided_slice %6 {offsets = [0, 16], sizes = [8, 8], strides = [1, 1]} : vector<8x32xbf16> to vector<8x8xbf16>
    %cst_48 = arith.constant dense<0.000000e+00> : vector<8x8xf32>
    %81 = tpu.matmul %79, %80, %cst_48 {dimension_numbers = #tpu.dot_dimension_numbers<[1], [0], [0], [1], [0, 0, 1, 1], [], []>} : vector<8x8xbf16>, vector<8x8xbf16>, vector<8x8xf32> -> vector<8x8xf32>
    %c0_49 = arith.constant 0 : index
    %c16_50 = arith.constant 16 : index
    %82 = vector.load %arg16[%c0_49, %c16_50] : memref<8x32xf32, #tpu.memory_space<vmem>>, vector<8x8xf32>
    %83 = vector.broadcast %69 : vector<8x1xf32> to vector<8x8xf32>
    %84 = arith.mulf %83, %82 : vector<8x8xf32>
    %85 = arith.addf %84, %81 : vector<8x8xf32>
    %c0_51 = arith.constant 0 : index
    %c16_52 = arith.constant 16 : index
    %86 = vector.load %arg16[%c0_51, %c16_52] : memref<8x32xf32, #tpu.memory_space<vmem>>, vector<8x8xf32>
    tpu.vector_store %arg16[%c0_51, %c16_52], %85 {strides = array<i32>} : memref<8x32xf32, #tpu.memory_space<vmem>>, vector<8x8xf32>,
    %c0_53 = arith.constant 0 : index
    %c2_54 = arith.constant 2 : index
    %87 = vector.load %arg14[%c0_53, %c2_54] : memref<8x4xf32, #tpu.memory_space<vmem>>, vector<8x1xf32>
    tpu.vector_store %arg14[%c0_53, %c2_54], %67 {strides = array<i32>} : memref<8x4xf32, #tpu.memory_space<vmem>>, vector<8x1xf32>,
    %c0_55 = arith.constant 0 : index
    %c24 = arith.constant 24 : index
    %88 = vector.load %arg13[%c0_55, %c24] : memref<8x32xbf16, #tpu.memory_space<vmem>>, vector<8x8xbf16>
    %89 = vector.extract_strided_slice %4 {offsets = [0, 24], sizes = [8, 8], strides = [1, 1]} : vector<8x32xbf16> to vector<8x8xbf16>
    %cst_56 = arith.constant dense<0.000000e+00> : vector<8x8xf32>
    %90 = tpu.matmul %88, %89, %cst_56 {dimension_numbers = #tpu.dot_dimension_numbers<[1], [1], [0], [0], [0, 0, 1, 0], [], []>} : vector<8x8xbf16>, vector<8x8xbf16>, vector<8x8xf32> -> vector<8x8xf32>
    %c0_57 = arith.constant 0 : index
    %c3 = arith.constant 3 : index
    %91 = vector.load %arg14[%c0_57, %c3] : memref<8x4xf32, #tpu.memory_space<vmem>>, vector<8x1xf32>
    %cst_58 = arith.constant dense<0xFF800000> : vector<8xf32>
    %92 = vector.multi_reduction <maximumf>, %90, %cst_58 [1] : vector<8x8xf32> to vector<8xf32>
    %93 = vector.shape_cast %92 : vector<8xf32> to vector<8x1xf32>
    %94 = arith.maximumf %91, %93 : vector<8x1xf32>
    %95 = arith.subf %91, %94 : vector<8x1xf32>
    %96 = math.exp %95 : vector<8x1xf32>
    %97 = vector.broadcast %94 : vector<8x1xf32> to vector<8x8xf32>
    %98 = arith.subf %90, %97 : vector<8x8xf32>
    %99 = math.exp %98 : vector<8x8xf32>
    %c0_59 = arith.constant 0 : index
    %c3_60 = arith.constant 3 : index
    %100 = vector.load %arg15[%c0_59, %c3_60] : memref<8x4xf32, #tpu.memory_space<vmem>>, vector<8x1xf32>
    %101 = arith.mulf %96, %100 : vector<8x1xf32>
    %cst_61 = arith.constant dense<0.000000e+00> : vector<8xf32>
    %102 = vector.multi_reduction <add>, %99, %cst_61 [1] : vector<8x8xf32> to vector<8xf32>
    %103 = vector.shape_cast %102 : vector<8xf32> to vector<8x1xf32>
    %104 = arith.addf %101, %103 : vector<8x1xf32>
    %c0_62 = arith.constant 0 : index
    %c3_63 = arith.constant 3 : index
    %105 = vector.load %arg15[%c0_62, %c3_63] : memref<8x4xf32, #tpu.memory_space<vmem>>, vector<8x1xf32>
    tpu.vector_store %arg15[%c0_62, %c3_63], %104 {strides = array<i32>} : memref<8x4xf32, #tpu.memory_space<vmem>>, vector<8x1xf32>,
    %106 = arith.truncf %99 : vector<8x8xf32> to vector<8x8xbf16>
    %107 = vector.extract_strided_slice %6 {offsets = [0, 24], sizes = [8, 8], strides = [1, 1]} : vector<8x32xbf16> to vector<8x8xbf16>
    %cst_64 = arith.constant dense<0.000000e+00> : vector<8x8xf32>
    %108 = tpu.matmul %106, %107, %cst_64 {dimension_numbers = #tpu.dot_dimension_numbers<[1], [0], [0], [1], [0, 0, 1, 1], [], []>} : vector<8x8xbf16>, vector<8x8xbf16>, vector<8x8xf32> -> vector<8x8xf32>
    %c0_65 = arith.constant 0 : index
    %c24_66 = arith.constant 24 : index
    %109 = vector.load %arg16[%c0_65, %c24_66] : memref<8x32xf32, #tpu.memory_space<vmem>>, vector<8x8xf32>
    %110 = vector.broadcast %96 : vector<8x1xf32> to vector<8x8xf32>
    %111 = arith.mulf %110, %109 : vector<8x8xf32>
    %112 = arith.addf %111, %108 : vector<8x8xf32>
    %c0_67 = arith.constant 0 : index
    %c24_68 = arith.constant 24 : index
    %113 = vector.load %arg16[%c0_67, %c24_68] : memref<8x32xf32, #tpu.memory_space<vmem>>, vector<8x8xf32>
    tpu.vector_store %arg16[%c0_67, %c24_68], %112 {strides = array<i32>} : memref<8x32xf32, #tpu.memory_space<vmem>>, vector<8x8xf32>,
    %c0_69 = arith.constant 0 : index
    %c3_70 = arith.constant 3 : index
    %114 = vector.load %arg14[%c0_69, %c3_70] : memref<8x4xf32, #tpu.memory_space<vmem>>, vector<8x1xf32>
    tpu.vector_store %arg14[%c0_69, %c3_70], %94 {strides = array<i32>} : memref<8x4xf32, #tpu.memory_space<vmem>>, vector<8x1xf32>,
    %c0_i32_71 = arith.constant 0 : i32
    %115 = arith.cmpi eq, %arg2, %c0_i32_71 : i32
    %116 = arith.extui %115 : i1 to i32
    %c0_i32_72 = arith.constant 0 : i32
    %117 = arith.cmpi ne, %116, %c0_i32_72 : i32
    scf.if %117 {
      %c0_73 = arith.constant 0 : index
      %c0_74 = arith.constant 0 : index
      %118 = vector.load %arg16[%c0_73, %c0_74] : memref<8x32xf32, #tpu.memory_space<vmem>>, vector<8x8xf32>
      %c0_75 = arith.constant 0 : index
      %c0_76 = arith.constant 0 : index
      %119 = vector.load %arg15[%c0_75, %c0_76] : memref<8x4xf32, #tpu.memory_space<vmem>>, vector<8x1xf32>
      %120 = vector.broadcast %119 : vector<8x1xf32> to vector<8x8xf32>
      %121 = arith.divf %118, %120 : vector<8x8xf32>
      %c0_77 = arith.constant 0 : index
      %c0_78 = arith.constant 0 : index
      %122 = vector.load %arg16[%c0_77, %c0_78] : memref<8x32xf32, #tpu.memory_space<vmem>>, vector<8x8xf32>
      tpu.vector_store %arg16[%c0_77, %c0_78], %121 {strides = array<i32>} : memref<8x32xf32, #tpu.memory_space<vmem>>, vector<8x8xf32>,
      %c0_79 = arith.constant 0 : index
      %c8_80 = arith.constant 8 : index
      %123 = vector.load %arg16[%c0_79, %c8_80] : memref<8x32xf32, #tpu.memory_space<vmem>>, vector<8x8xf32>
      %c0_81 = arith.constant 0 : index
      %c1_82 = arith.constant 1 : index
      %124 = vector.load %arg15[%c0_81, %c1_82] : memref<8x4xf32, #tpu.memory_space<vmem>>, vector<8x1xf32>
      %125 = vector.broadcast %124 : vector<8x1xf32> to vector<8x8xf32>
      %126 = arith.divf %123, %125 : vector<8x8xf32>
      %c0_83 = arith.constant 0 : index
      %c8_84 = arith.constant 8 : index
      %127 = vector.load %arg16[%c0_83, %c8_84] : memref<8x32xf32, #tpu.memory_space<vmem>>, vector<8x8xf32>
      tpu.vector_store %arg16[%c0_83, %c8_84], %126 {strides = array<i32>} : memref<8x32xf32, #tpu.memory_space<vmem>>, vector<8x8xf32>,
      %c0_85 = arith.constant 0 : index
      %c16_86 = arith.constant 16 : index
      %128 = vector.load %arg16[%c0_85, %c16_86] : memref<8x32xf32, #tpu.memory_space<vmem>>, vector<8x8xf32>
      %c0_87 = arith.constant 0 : index
      %c2_88 = arith.constant 2 : index
      %129 = vector.load %arg15[%c0_87, %c2_88] : memref<8x4xf32, #tpu.memory_space<vmem>>, vector<8x1xf32>
      %130 = vector.broadcast %129 : vector<8x1xf32> to vector<8x8xf32>
      %131 = arith.divf %128, %130 : vector<8x8xf32>
      %c0_89 = arith.constant 0 : index
      %c16_90 = arith.constant 16 : index
      %132 = vector.load %arg16[%c0_89, %c16_90] : memref<8x32xf32, #tpu.memory_space<vmem>>, vector<8x8xf32>
      tpu.vector_store %arg16[%c0_89, %c16_90], %131 {strides = array<i32>} : memref<8x32xf32, #tpu.memory_space<vmem>>, vector<8x8xf32>,
      %c0_91 = arith.constant 0 : index
      %c24_92 = arith.constant 24 : index
      %133 = vector.load %arg16[%c0_91, %c24_92] : memref<8x32xf32, #tpu.memory_space<vmem>>, vector<8x8xf32>
      %c0_93 = arith.constant 0 : index
      %c3_94 = arith.constant 3 : index
      %134 = vector.load %arg15[%c0_93, %c3_94] : memref<8x4xf32, #tpu.memory_space<vmem>>, vector<8x1xf32>
      %135 = vector.broadcast %134 : vector<8x1xf32> to vector<8x8xf32>
      %136 = arith.divf %133, %135 : vector<8x8xf32>
      %c0_95 = arith.constant 0 : index
      %c24_96 = arith.constant 24 : index
      %137 = vector.load %arg16[%c0_95, %c24_96] : memref<8x32xf32, #tpu.memory_space<vmem>>, vector<8x8xf32>
      tpu.vector_store %arg16[%c0_95, %c24_96], %136 {strides = array<i32>} : memref<8x32xf32, #tpu.memory_space<vmem>>, vector<8x8xf32>,
      %c0_97 = arith.constant 0 : index
      %c0_98 = arith.constant 0 : index
      %138 = vector.load %arg16[%c0_97, %c0_98] : memref<8x32xf32, #tpu.memory_space<vmem>>, vector<8x32xf32>
      %139 = arith.truncf %138 : vector<8x32xf32> to vector<8x32xbf16>
      %c0_99 = arith.constant 0 : index
      %c0_100 = arith.constant 0 : index
      %140 = vector.load %arg10[%c0_99, %c0_100] : memref<32x32xbf16, #tpu.memory_space<vmem>>, vector<32x32xbf16>
      %cst_101 = arith.constant dense<0.000000e+00> : vector<8x32xf32>
      %141 = tpu.matmul %139, %140, %cst_101 {dimension_numbers = #tpu.dot_dimension_numbers<[1], [0], [0], [1], [0, 0, 1, 1], [], []>} : vector<8x32xbf16>, vector<32x32xbf16>, vector<8x32xf32> -> vector<8x32xf32>
      %c0_102 = arith.constant 0 : index
      %c0_103 = arith.constant 0 : index
      %142 = vector.load %arg11[%c0_102, %c0_103] : memref<1x32xf32, #tpu.memory_space<vmem>>, vector<1x32xf32>
      %143 = vector.broadcast %142 : vector<1x32xf32> to vector<8x32xf32>
      %144 = arith.addf %141, %143 : vector<8x32xf32>
      %c0_104 = arith.constant 0 : index
      %c0_105 = arith.constant 0 : index
      %c0_106 = arith.constant 0 : index
      %145 = vector.load %arg3[%c0_104, %c0_105, %c0_106] : memref<1x8x32xf32, #tpu.memory_space<vmem>>, vector<1x8x32xf32>
      %146 = vector.shape_cast %145 : vector<1x8x32xf32> to vector<8x32xf32>
      %147 = arith.addf %146, %144 : vector<8x32xf32>
      %c0_107 = arith.constant 0 : index
      %c0_108 = arith.constant 0 : index
      %c0_109 = arith.constant 0 : index
      %148 = vector.load %arg12[%c0_107, %c0_108, %c0_109] : memref<1x8x32xf32, #tpu.memory_space<vmem>>, vector<1x8x32xf32>
      %149 = vector.shape_cast %148 : vector<1x8x32xf32> to vector<8x32xf32>
      %150 = vector.shape_cast %147 : vector<8x32xf32> to vector<1x8x32xf32>
      tpu.vector_store %arg12[%c0_107, %c0_108, %c0_109], %150 {strides = array<i32>} : memref<1x8x32xf32, #tpu.memory_space<vmem>>, vector<1x8x32xf32>,
    } else {
    }
    return
  }
  func.func @transform_0(%arg0: i32, %arg1: i32, %arg2: i32) -> (i32, i32, i32) {
    %c0_i32 = arith.constant 0 : i32
    %c0_i32_0 = arith.constant 0 : i32
    return %arg0, %arg1, %c0_i32 : i32, i32, i32
  }
  func.func @transform_1(%arg0: i32, %arg1: i32, %arg2: i32) -> (i32, i32, i32) {
    %c0_i32 = arith.constant 0 : i32
    %c0_i32_0 = arith.constant 0 : i32
    return %arg0, %arg2, %c0_i32 : i32, i32, i32
  }
  func.func @transform_2(%arg0: i32, %arg1: i32, %arg2: i32) -> (i32, i32, i32) {
    %c0_i32 = arith.constant 0 : i32
    %c0_i32_0 = arith.constant 0 : i32
    return %arg0, %arg2, %c0_i32 : i32, i32, i32
  }
  func.func @transform_3(%arg0: i32, %arg1: i32, %arg2: i32) -> (i32, i32) {
    %c0_i32 = arith.constant 0 : i32
    %c0_i32_0 = arith.constant 0 : i32
    %c0_i32_1 = arith.constant 0 : i32
    return %c0_i32, %c0_i32_0 : i32, i32
  }
  func.func @transform_4(%arg0: i32, %arg1: i32, %arg2: i32) -> (i32, i32) {
    %c0_i32 = arith.constant 0 : i32
    %c0_i32_0 = arith.constant 0 : i32
    %c0_i32_1 = arith.constant 0 : i32
    return %c0_i32, %c0_i32_0 : i32, i32
  }
  func.func @transform_5(%arg0: i32, %arg1: i32, %arg2: i32) -> (i32, i32) {
    %c0_i32 = arith.constant 0 : i32
    %c0_i32_0 = arith.constant 0 : i32
    %c0_i32_1 = arith.constant 0 : i32
    return %c0_i32, %c0_i32_0 : i32, i32
  }
  func.func @transform_6(%arg0: i32, %arg1: i32, %arg2: i32) -> (i32, i32) {
    %c0_i32 = arith.constant 0 : i32
    %c0_i32_0 = arith.constant 0 : i32
    %c0_i32_1 = arith.constant 0 : i32
    return %c0_i32, %c0_i32_0 : i32, i32
  }
  func.func @transform_7(%arg0: i32, %arg1: i32, %arg2: i32) -> (i32, i32) {
    %c0_i32 = arith.constant 0 : i32
    %c0_i32_0 = arith.constant 0 : i32
    %c0_i32_1 = arith.constant 0 : i32
    return %c0_i32, %c0_i32_0 : i32, i32
  }
  func.func @transform_8(%arg0: i32, %arg1: i32, %arg2: i32) -> (i32, i32) {
    %c0_i32 = arith.constant 0 : i32
    %c0_i32_0 = arith.constant 0 : i32
    %c0_i32_1 = arith.constant 0 : i32
    return %c0_i32, %c0_i32_0 : i32, i32
  }
  func.func @transform_9(%arg0: i32, %arg1: i32, %arg2: i32) -> (i32, i32, i32) {
    %c0_i32 = arith.constant 0 : i32
    %c0_i32_0 = arith.constant 0 : i32
    return %arg0, %arg1, %c0_i32 : i32, i32, i32
  }
}

module attributes {stable_mosaic.version = 11 : i64} {
  func.func @_kv_proj_kernel(%arg0: i32, %arg1: i32, %arg2: memref<1x8x32xf32, #tpu.memory_space<vmem>>, %arg3: memref<1x32xf32, #tpu.memory_space<vmem>>, %arg4: memref<1x32xf32, #tpu.memory_space<vmem>>, %arg5: memref<32x64xbf16, #tpu.memory_space<vmem>>, %arg6: memref<1x64xf32, #tpu.memory_space<vmem>>, %arg7: memref<1x8x32xbf16, #tpu.memory_space<vmem>>, %arg8: memref<1x8x32xbf16, #tpu.memory_space<vmem>>) attributes {dimension_semantics = [#tpu.dimension_semantics<parallel>, #tpu.dimension_semantics<parallel>], iteration_bounds = array<i64: 2, 1>, scalar_prefetch = 0 : i64, scratch_operands = 0 : i64, tpu.core_type = #tpu.core_type<tc>, window_params = [{transform_indices = @transform_0, window_bounds = array<i64: 1, 8, 32>}, {pipeline_mode = #tpu.pipeline_mode<synchronous>, transform_indices = @transform_1, window_bounds = array<i64: 1, 32>}, {pipeline_mode = #tpu.pipeline_mode<synchronous>, transform_indices = @transform_2, window_bounds = array<i64: 1, 32>}, {pipeline_mode = #tpu.pipeline_mode<synchronous>, transform_indices = @transform_3, window_bounds = array<i64: 32, 64>}, {pipeline_mode = #tpu.pipeline_mode<synchronous>, transform_indices = @transform_4, window_bounds = array<i64: 1, 64>}, {transform_indices = @transform_5, window_bounds = array<i64: 1, 8, 32>}, {transform_indices = @transform_6, window_bounds = array<i64: 1, 8, 32>}]} {
    %c0 = arith.constant 0 : index
    %c0_0 = arith.constant 0 : index
    %c0_1 = arith.constant 0 : index
    %0 = vector.load %arg2[%c0, %c0_0, %c0_1] : memref<1x8x32xf32, #tpu.memory_space<vmem>>, vector<1x8x32xf32>
    %1 = vector.shape_cast %0 : vector<1x8x32xf32> to vector<8x32xf32>
    %c0_2 = arith.constant 0 : index
    %c0_3 = arith.constant 0 : index
    %2 = vector.load %arg3[%c0_2, %c0_3] : memref<1x32xf32, #tpu.memory_space<vmem>>, vector<1x32xf32>
    %c0_4 = arith.constant 0 : index
    %c0_5 = arith.constant 0 : index
    %3 = vector.load %arg4[%c0_4, %c0_5] : memref<1x32xf32, #tpu.memory_space<vmem>>, vector<1x32xf32>
    %cst = arith.constant dense<0.000000e+00> : vector<8xf32>
    %4 = vector.multi_reduction <add>, %1, %cst [1] : vector<8x32xf32> to vector<8xf32>
    %5 = vector.shape_cast %4 : vector<8xf32> to vector<8x1xf32>
    %cst_6 = arith.constant 3.200000e+01 : f32
    %6 = vector.broadcast %cst_6 : f32 to vector<8x1xf32>
    %7 = arith.divf %5, %6 : vector<8x1xf32>
    %8 = vector.broadcast %7 : vector<8x1xf32> to vector<8x32xf32>
    %9 = arith.subf %1, %8 : vector<8x32xf32>
    %10 = arith.mulf %9, %9 : vector<8x32xf32>
    %cst_7 = arith.constant dense<0.000000e+00> : vector<8xf32>
    %11 = vector.multi_reduction <add>, %10, %cst_7 [1] : vector<8x32xf32> to vector<8xf32>
    %12 = vector.shape_cast %11 : vector<8xf32> to vector<8x1xf32>
    %cst_8 = arith.constant 3.200000e+01 : f32
    %13 = vector.broadcast %cst_8 : f32 to vector<8x1xf32>
    %14 = arith.divf %12, %13 : vector<8x1xf32>
    %15 = vector.broadcast %7 : vector<8x1xf32> to vector<8x32xf32>
    %16 = arith.subf %1, %15 : vector<8x32xf32>
    %cst_9 = arith.constant 9.99999974E-6 : f32
    %17 = vector.broadcast %cst_9 : f32 to vector<8x1xf32>
    %18 = arith.addf %14, %17 : vector<8x1xf32>
    %19 = math.rsqrt %18 : vector<8x1xf32>
    %20 = vector.broadcast %19 : vector<8x1xf32> to vector<8x32xf32>
    %21 = arith.mulf %16, %20 : vector<8x32xf32>
    %22 = vector.broadcast %2 : vector<1x32xf32> to vector<8x32xf32>
    %23 = arith.mulf %21, %22 : vector<8x32xf32>
    %24 = vector.broadcast %3 : vector<1x32xf32> to vector<8x32xf32>
    %25 = arith.addf %23, %24 : vector<8x32xf32>
    %26 = arith.truncf %25 : vector<8x32xf32> to vector<8x32xbf16>
    %c0_10 = arith.constant 0 : index
    %c0_11 = arith.constant 0 : index
    %27 = vector.load %arg5[%c0_10, %c0_11] : memref<32x64xbf16, #tpu.memory_space<vmem>>, vector<32x64xbf16>
    %cst_12 = arith.constant dense<0.000000e+00> : vector<8x64xf32>
    %28 = tpu.matmul %26, %27, %cst_12 {dimension_numbers = #tpu.dot_dimension_numbers<[1], [0], [0], [1], [0, 0, 1, 1], [], []>} : vector<8x32xbf16>, vector<32x64xbf16>, vector<8x64xf32> -> vector<8x64xf32>
    %c0_13 = arith.constant 0 : index
    %c0_14 = arith.constant 0 : index
    %29 = vector.load %arg6[%c0_13, %c0_14] : memref<1x64xf32, #tpu.memory_space<vmem>>, vector<1x64xf32>
    %30 = vector.broadcast %29 : vector<1x64xf32> to vector<8x64xf32>
    %31 = arith.addf %28, %30 : vector<8x64xf32>
    %32 = vector.extract_strided_slice %31 {offsets = [0, 0], sizes = [8, 32], strides = [1, 1]} : vector<8x64xf32> to vector<8x32xf32>
    %33 = arith.truncf %32 : vector<8x32xf32> to vector<8x32xbf16>
    %c0_15 = arith.constant 0 : index
    %c0_16 = arith.constant 0 : index
    %c0_17 = arith.constant 0 : index
    %34 = vector.load %arg7[%c0_15, %c0_16, %c0_17] : memref<1x8x32xbf16, #tpu.memory_space<vmem>>, vector<1x8x32xbf16>
    %35 = vector.shape_cast %34 : vector<1x8x32xbf16> to vector<8x32xbf16>
    %36 = vector.shape_cast %33 : vector<8x32xbf16> to vector<1x8x32xbf16>
    tpu.vector_store %arg7[%c0_15, %c0_16, %c0_17], %36 {strides = array<i32>} : memref<1x8x32xbf16, #tpu.memory_space<vmem>>, vector<1x8x32xbf16>,
    %37 = vector.extract_strided_slice %31 {offsets = [0, 32], sizes = [8, 32], strides = [1, 1]} : vector<8x64xf32> to vector<8x32xf32>
    %38 = arith.truncf %37 : vector<8x32xf32> to vector<8x32xbf16>
    %c0_18 = arith.constant 0 : index
    %c0_19 = arith.constant 0 : index
    %c0_20 = arith.constant 0 : index
    %39 = vector.load %arg8[%c0_18, %c0_19, %c0_20] : memref<1x8x32xbf16, #tpu.memory_space<vmem>>, vector<1x8x32xbf16>
    %40 = vector.shape_cast %39 : vector<1x8x32xbf16> to vector<8x32xbf16>
    %41 = vector.shape_cast %38 : vector<8x32xbf16> to vector<1x8x32xbf16>
    tpu.vector_store %arg8[%c0_18, %c0_19, %c0_20], %41 {strides = array<i32>} : memref<1x8x32xbf16, #tpu.memory_space<vmem>>, vector<1x8x32xbf16>,
    return
  }
  func.func @transform_0(%arg0: i32, %arg1: i32) -> (i32, i32, i32) {
    %c0_i32 = arith.constant 0 : i32
    %c0_i32_0 = arith.constant 0 : i32
    return %arg0, %arg1, %c0_i32 : i32, i32, i32
  }
  func.func @transform_1(%arg0: i32, %arg1: i32) -> (i32, i32) {
    %c0_i32 = arith.constant 0 : i32
    %c0_i32_0 = arith.constant 0 : i32
    %c0_i32_1 = arith.constant 0 : i32
    return %c0_i32, %c0_i32_0 : i32, i32
  }
  func.func @transform_2(%arg0: i32, %arg1: i32) -> (i32, i32) {
    %c0_i32 = arith.constant 0 : i32
    %c0_i32_0 = arith.constant 0 : i32
    %c0_i32_1 = arith.constant 0 : i32
    return %c0_i32, %c0_i32_0 : i32, i32
  }
  func.func @transform_3(%arg0: i32, %arg1: i32) -> (i32, i32) {
    %c0_i32 = arith.constant 0 : i32
    %c0_i32_0 = arith.constant 0 : i32
    %c0_i32_1 = arith.constant 0 : i32
    return %c0_i32, %c0_i32_0 : i32, i32
  }
  func.func @transform_4(%arg0: i32, %arg1: i32) -> (i32, i32) {
    %c0_i32 = arith.constant 0 : i32
    %c0_i32_0 = arith.constant 0 : i32
    %c0_i32_1 = arith.constant 0 : i32
    return %c0_i32, %c0_i32_0 : i32, i32
  }
  func.func @transform_5(%arg0: i32, %arg1: i32) -> (i32, i32, i32) {
    %c0_i32 = arith.constant 0 : i32
    %c0_i32_0 = arith.constant 0 : i32
    return %arg0, %arg1, %c0_i32 : i32, i32, i32
  }
  func.func @transform_6(%arg0: i32, %arg1: i32) -> (i32, i32, i32) {
    %c0_i32 = arith.constant 0 : i32
    %c0_i32_0 = arith.constant 0 : i32
    return %arg0, %arg1, %c0_i32 : i32, i32, i32
  }
}

module attributes {stable_mosaic.version = 11 : i64} {
  func.func @_ffn_kernel(%arg0: i32, %arg1: i32, %arg2: i32, %arg3: memref<1x8x32xf32, #tpu.memory_space<vmem>>, %arg4: memref<1x32xf32, #tpu.memory_space<vmem>>, %arg5: memref<1x32xf32, #tpu.memory_space<vmem>>, %arg6: memref<32x128xbf16, #tpu.memory_space<vmem>>, %arg7: memref<1x128xf32, #tpu.memory_space<vmem>>, %arg8: memref<128x32xbf16, #tpu.memory_space<vmem>>, %arg9: memref<1x32xf32, #tpu.memory_space<vmem>>, %arg10: memref<1x8x32xf32, #tpu.memory_space<vmem>>, %arg11: memref<8x32xbf16, #tpu.memory_space<vmem>>, %arg12: memref<8x32xf32, #tpu.memory_space<vmem>>) attributes {dimension_semantics = [#tpu.dimension_semantics<parallel>, #tpu.dimension_semantics<parallel>, #tpu.dimension_semantics<arbitrary>], iteration_bounds = array<i64: 2, 1, 1>, scalar_prefetch = 0 : i64, scratch_operands = 2 : i64, tpu.core_type = #tpu.core_type<tc>, window_params = [{transform_indices = @transform_0, window_bounds = array<i64: 1, 8, 32>}, {pipeline_mode = #tpu.pipeline_mode<synchronous>, transform_indices = @transform_1, window_bounds = array<i64: 1, 32>}, {pipeline_mode = #tpu.pipeline_mode<synchronous>, transform_indices = @transform_2, window_bounds = array<i64: 1, 32>}, {transform_indices = @transform_3, window_bounds = array<i64: 32, 128>}, {transform_indices = @transform_4, window_bounds = array<i64: 1, 128>}, {transform_indices = @transform_5, window_bounds = array<i64: 128, 32>}, {pipeline_mode = #tpu.pipeline_mode<synchronous>, transform_indices = @transform_6, window_bounds = array<i64: 1, 32>}, {transform_indices = @transform_7, window_bounds = array<i64: 1, 8, 32>}]} {
    %c0_i32 = arith.constant 0 : i32
    %0 = arith.cmpi eq, %arg2, %c0_i32 : i32
    %1 = arith.extui %0 : i1 to i32
    %c0_i32_0 = arith.constant 0 : i32
    %2 = arith.cmpi ne, %1, %c0_i32_0 : i32
    scf.if %2 {
      %c0_19 = arith.constant 0 : index
      %c0_20 = arith.constant 0 : index
      %c0_21 = arith.constant 0 : index
      %31 = vector.load %arg3[%c0_19, %c0_20, %c0_21] : memref<1x8x32xf32, #tpu.memory_space<vmem>>, vector<1x8x32xf32>
      %32 = vector.shape_cast %31 : vector<1x8x32xf32> to vector<8x32xf32>
      %c0_22 = arith.constant 0 : index
      %c0_23 = arith.constant 0 : index
      %33 = vector.load %arg4[%c0_22, %c0_23] : memref<1x32xf32, #tpu.memory_space<vmem>>, vector<1x32xf32>
      %c0_24 = arith.constant 0 : index
      %c0_25 = arith.constant 0 : index
      %34 = vector.load %arg5[%c0_24, %c0_25] : memref<1x32xf32, #tpu.memory_space<vmem>>, vector<1x32xf32>
      %cst_26 = arith.constant dense<0.000000e+00> : vector<8xf32>
      %35 = vector.multi_reduction <add>, %32, %cst_26 [1] : vector<8x32xf32> to vector<8xf32>
      %36 = vector.shape_cast %35 : vector<8xf32> to vector<8x1xf32>
      %cst_27 = arith.constant 3.200000e+01 : f32
      %37 = vector.broadcast %cst_27 : f32 to vector<8x1xf32>
      %38 = arith.divf %36, %37 : vector<8x1xf32>
      %39 = vector.broadcast %38 : vector<8x1xf32> to vector<8x32xf32>
      %40 = arith.subf %32, %39 : vector<8x32xf32>
      %41 = arith.mulf %40, %40 : vector<8x32xf32>
      %cst_28 = arith.constant dense<0.000000e+00> : vector<8xf32>
      %42 = vector.multi_reduction <add>, %41, %cst_28 [1] : vector<8x32xf32> to vector<8xf32>
      %43 = vector.shape_cast %42 : vector<8xf32> to vector<8x1xf32>
      %cst_29 = arith.constant 3.200000e+01 : f32
      %44 = vector.broadcast %cst_29 : f32 to vector<8x1xf32>
      %45 = arith.divf %43, %44 : vector<8x1xf32>
      %46 = vector.broadcast %38 : vector<8x1xf32> to vector<8x32xf32>
      %47 = arith.subf %32, %46 : vector<8x32xf32>
      %cst_30 = arith.constant 9.99999974E-6 : f32
      %48 = vector.broadcast %cst_30 : f32 to vector<8x1xf32>
      %49 = arith.addf %45, %48 : vector<8x1xf32>
      %50 = math.rsqrt %49 : vector<8x1xf32>
      %51 = vector.broadcast %50 : vector<8x1xf32> to vector<8x32xf32>
      %52 = arith.mulf %47, %51 : vector<8x32xf32>
      %53 = vector.broadcast %33 : vector<1x32xf32> to vector<8x32xf32>
      %54 = arith.mulf %52, %53 : vector<8x32xf32>
      %55 = vector.broadcast %34 : vector<1x32xf32> to vector<8x32xf32>
      %56 = arith.addf %54, %55 : vector<8x32xf32>
      %57 = arith.truncf %56 : vector<8x32xf32> to vector<8x32xbf16>
      %c0_31 = arith.constant 0 : index
      %c0_32 = arith.constant 0 : index
      %58 = vector.load %arg11[%c0_31, %c0_32] : memref<8x32xbf16, #tpu.memory_space<vmem>>, vector<8x32xbf16>
      tpu.vector_store %arg11[%c0_31, %c0_32], %57 {strides = array<i32>} : memref<8x32xbf16, #tpu.memory_space<vmem>>, vector<8x32xbf16>,
      %cst_33 = arith.constant 0.000000e+00 : f32
      %59 = vector.broadcast %cst_33 : f32 to vector<8x32xf32>
      %c0_34 = arith.constant 0 : index
      %c0_35 = arith.constant 0 : index
      %60 = vector.load %arg12[%c0_34, %c0_35] : memref<8x32xf32, #tpu.memory_space<vmem>>, vector<8x32xf32>
      tpu.vector_store %arg12[%c0_34, %c0_35], %59 {strides = array<i32>} : memref<8x32xf32, #tpu.memory_space<vmem>>, vector<8x32xf32>,
    } else {
    }
    %c0 = arith.constant 0 : index
    %c0_1 = arith.constant 0 : index
    %3 = vector.load %arg11[%c0, %c0_1] : memref<8x32xbf16, #tpu.memory_space<vmem>>, vector<8x32xbf16>
    %c0_2 = arith.constant 0 : index
    %c0_3 = arith.constant 0 : index
    %4 = vector.load %arg6[%c0_2, %c0_3] : memref<32x128xbf16, #tpu.memory_space<vmem>>, vector<32x128xbf16>
    %cst = arith.constant dense<0.000000e+00> : vector<8x128xf32>
    %5 = tpu.matmul %3, %4, %cst {dimension_numbers = #tpu.dot_dimension_numbers<[1], [0], [0], [1], [0, 0, 1, 1], [], []>} : vector<8x32xbf16>, vector<32x128xbf16>, vector<8x128xf32> -> vector<8x128xf32>
    %c0_4 = arith.constant 0 : index
    %c0_5 = arith.constant 0 : index
    %6 = vector.load %arg7[%c0_4, %c0_5] : memref<1x128xf32, #tpu.memory_space<vmem>>, vector<1x128xf32>
    %7 = vector.broadcast %6 : vector<1x128xf32> to vector<8x128xf32>
    %8 = arith.addf %5, %7 : vector<8x128xf32>
    %cst_6 = arith.constant 5.000000e-01 : f32
    %9 = vector.broadcast %cst_6 : f32 to vector<8x128xf32>
    %10 = arith.mulf %9, %8 : vector<8x128xf32>
    %11 = arith.mulf %8, %8 : vector<8x128xf32>
    %12 = arith.mulf %11, %8 : vector<8x128xf32>
    %cst_7 = arith.constant 4.471500e-02 : f32
    %13 = vector.broadcast %cst_7 : f32 to vector<8x128xf32>
    %14 = arith.mulf %13, %12 : vector<8x128xf32>
    %15 = arith.addf %8, %14 : vector<8x128xf32>
    %cst_8 = arith.constant 0.797884583 : f32
    %16 = vector.broadcast %cst_8 : f32 to vector<8x128xf32>
    %17 = arith.mulf %16, %15 : vector<8x128xf32>
    %18 = math.tanh %17 : vector<8x128xf32>
    %cst_9 = arith.constant 1.000000e+00 : f32
    %19 = vector.broadcast %cst_9 : f32 to vector<8x128xf32>
    %20 = arith.addf %19, %18 : vector<8x128xf32>
    %21 = arith.mulf %10, %20 : vector<8x128xf32>
    %22 = arith.truncf %21 : vector<8x128xf32> to vector<8x128xbf16>
    %c0_10 = arith.constant 0 : index
    %c0_11 = arith.constant 0 : index
    %23 = vector.load %arg12[%c0_10, %c0_11] : memref<8x32xf32, #tpu.memory_space<vmem>>, vector<8x32xf32>
    %c0_12 = arith.constant 0 : index
    %c0_13 = arith.constant 0 : index
    %24 = vector.load %arg8[%c0_12, %c0_13] : memref<128x32xbf16, #tpu.memory_space<vmem>>, vector<128x32xbf16>
    %cst_14 = arith.constant dense<0.000000e+00> : vector<8x32xf32>
    %25 = tpu.matmul %22, %24, %cst_14 {dimension_numbers = #tpu.dot_dimension_numbers<[1], [0], [0], [1], [0, 0, 1, 1], [], []>} : vector<8x128xbf16>, vector<128x32xbf16>, vector<8x32xf32> -> vector<8x32xf32>
    %26 = arith.addf %23, %25 : vector<8x32xf32>
    %c0_15 = arith.constant 0 : index
    %c0_16 = arith.constant 0 : index
    %27 = vector.load %arg12[%c0_15, %c0_16] : memref<8x32xf32, #tpu.memory_space<vmem>>, vector<8x32xf32>
    tpu.vector_store %arg12[%c0_15, %c0_16], %26 {strides = array<i32>} : memref<8x32xf32, #tpu.memory_space<vmem>>, vector<8x32xf32>,
    %c0_i32_17 = arith.constant 0 : i32
    %28 = arith.cmpi eq, %arg2, %c0_i32_17 : i32
    %29 = arith.extui %28 : i1 to i32
    %c0_i32_18 = arith.constant 0 : i32
    %30 = arith.cmpi ne, %29, %c0_i32_18 : i32
    scf.if %30 {
      %c0_19 = arith.constant 0 : index
      %c0_20 = arith.constant 0 : index
      %c0_21 = arith.constant 0 : index
      %31 = vector.load %arg3[%c0_19, %c0_20, %c0_21] : memref<1x8x32xf32, #tpu.memory_space<vmem>>, vector<1x8x32xf32>
      %32 = vector.shape_cast %31 : vector<1x8x32xf32> to vector<8x32xf32>
      %c0_22 = arith.constant 0 : index
      %c0_23 = arith.constant 0 : index
      %33 = vector.load %arg12[%c0_22, %c0_23] : memref<8x32xf32, #tpu.memory_space<vmem>>, vector<8x32xf32>
      %34 = arith.addf %32, %33 : vector<8x32xf32>
      %c0_24 = arith.constant 0 : index
      %c0_25 = arith.constant 0 : index
      %35 = vector.load %arg9[%c0_24, %c0_25] : memref<1x32xf32, #tpu.memory_space<vmem>>, vector<1x32xf32>
      %36 = vector.broadcast %35 : vector<1x32xf32> to vector<8x32xf32>
      %37 = arith.addf %34, %36 : vector<8x32xf32>
      %c0_26 = arith.constant 0 : index
      %c0_27 = arith.constant 0 : index
      %c0_28 = arith.constant 0 : index
      %38 = vector.load %arg10[%c0_26, %c0_27, %c0_28] : memref<1x8x32xf32, #tpu.memory_space<vmem>>, vector<1x8x32xf32>
      %39 = vector.shape_cast %38 : vector<1x8x32xf32> to vector<8x32xf32>
      %40 = vector.shape_cast %37 : vector<8x32xf32> to vector<1x8x32xf32>
      tpu.vector_store %arg10[%c0_26, %c0_27, %c0_28], %40 {strides = array<i32>} : memref<1x8x32xf32, #tpu.memory_space<vmem>>, vector<1x8x32xf32>,
    } else {
    }
    return
  }
  func.func @transform_0(%arg0: i32, %arg1: i32, %arg2: i32) -> (i32, i32, i32) {
    %c0_i32 = arith.constant 0 : i32
    %c0_i32_0 = arith.constant 0 : i32
    return %arg0, %arg1, %c0_i32 : i32, i32, i32
  }
  func.func @transform_1(%arg0: i32, %arg1: i32, %arg2: i32) -> (i32, i32) {
    %c0_i32 = arith.constant 0 : i32
    %c0_i32_0 = arith.constant 0 : i32
    %c0_i32_1 = arith.constant 0 : i32
    return %c0_i32, %c0_i32_0 : i32, i32
  }
  func.func @transform_2(%arg0: i32, %arg1: i32, %arg2: i32) -> (i32, i32) {
    %c0_i32 = arith.constant 0 : i32
    %c0_i32_0 = arith.constant 0 : i32
    %c0_i32_1 = arith.constant 0 : i32
    return %c0_i32, %c0_i32_0 : i32, i32
  }
  func.func @transform_3(%arg0: i32, %arg1: i32, %arg2: i32) -> (i32, i32) {
    %c0_i32 = arith.constant 0 : i32
    %c0_i32_0 = arith.constant 0 : i32
    return %c0_i32, %arg2 : i32, i32
  }
  func.func @transform_4(%arg0: i32, %arg1: i32, %arg2: i32) -> (i32, i32) {
    %c0_i32 = arith.constant 0 : i32
    %c0_i32_0 = arith.constant 0 : i32
    return %c0_i32, %arg2 : i32, i32
  }
  func.func @transform_5(%arg0: i32, %arg1: i32, %arg2: i32) -> (i32, i32) {
    %c0_i32 = arith.constant 0 : i32
    %c0_i32_0 = arith.constant 0 : i32
    return %arg2, %c0_i32 : i32, i32
  }
  func.func @transform_6(%arg0: i32, %arg1: i32, %arg2: i32) -> (i32, i32) {
    %c0_i32 = arith.constant 0 : i32
    %c0_i32_0 = arith.constant 0 : i32
    %c0_i32_1 = arith.constant 0 : i32
    return %c0_i32, %c0_i32_0 : i32, i32
  }
  func.func @transform_7(%arg0: i32, %arg1: i32, %arg2: i32) -> (i32, i32, i32) {
    %c0_i32 = arith.constant 0 : i32
    %c0_i32_0 = arith.constant 0 : i32
    return %arg0, %arg1, %c0_i32 : i32, i32, i32
  }
}

</mosaic_0001>

<llo_original>
// kernel: _lambda_.3
$region0: #{_lambda_.3}
  #allocation0 [shape = 'u32[]', space=smem, size = 0x4, offset = 0x4, fixed_abs, tag = 'smem constant byte address 0x4 - core index']
  #allocation1 [shape = 'u32[144,128]{1,0:T(1,128)}', space=vmem, size = 0x12000, scoped, tag = 'internal scratch']
  %s0 = inlined_call_operand.vmem [shape: f32[2,8,32], index: 0, kind: input, shape index: {}]
  %s1 = inlined_call_operand.vmem [shape: f32[1,32], index: 1, kind: input, shape index: {}]
  %s2 = inlined_call_operand.vmem [shape: f32[1,32], index: 2, kind: input, shape index: {}]
  %s3 = inlined_call_operand.vmem [shape: bf16[32,64], index: 3, kind: input, shape index: {}]
  %s4 = inlined_call_operand.vmem [shape: f32[1,64], index: 4, kind: input, shape index: {}]
  %s5 = inlined_call_operand.vmem [shape: bf16[2,8,32], index: 5, kind: output, shape index: {0}]
  %s6 = inlined_call_operand.vmem [shape: bf16[2,8,32], index: 6, kind: output, shape index: {1}]
  %7 = xla_tuple %s5, %s6
  %s8 = sld [smem:[#allocation0]]
  $region61: #{_lambda_.3} parent=0
    _
  %s10 = ssub.s32 1, %s8
  %s11 = scalar_select 0, %s10, %s8
  loop: start=0, step=1, limit=4
  $region2: #{_lambda_.3} parent=0 // loop_pre_header
    _
  $region3: #{_lambda_.3} parent=0 // loop_header
    %s13 = sphi 0, %s17
    %p14 = scmp.ge.s32.totalorder %s13, 4
    %s20 = sphi 0, %s32
    %s21 = sphi 0, %s28
    %s22 = sphi 0, %s20
    %s23 = sphi 0, %s21
    %s24 = sphi 0, %s22
    %s25 = sphi 0, %s23
    %s37 = sphi 0, %s39
    %s40 = sphi 0, %s37
    %s41 = sphi 0, %s40
    %s57 = sphi 0, %s41
    %s61 = sphi 0, %s61
    %s63 = sphi 0, %s61
    %s64 = sphi 0, %s63
    %s78 = sphi 0, %s64
    %s82 = sphi 0, %s82
    %s84 = sphi 0, %s82
    %s85 = sphi 0, %s84
    %s99 = sphi 0, %s85
    %s103 = sphi 0, %s103
    %s105 = sphi 0, %s103
    %s106 = sphi 0, %s105
    %s120 = sphi 0, %s106
    %s124 = sphi 0, %s124
    %s126 = sphi 0, %s124
    %s127 = sphi 0, %s126
    %s141 = sphi 0, %s127
    %s149 = sphi 0, %s151
    %s152 = sphi 0, %s149
    %s153 = sphi 0, %s152
    %s169 = sphi 0, %s153
    %s177 = sphi 0, %s179
    %s180 = sphi 0, %s177
    %s181 = sphi 0, %s180
    %s197 = sphi 0, %s181
  $region4: #{_lambda_.3} parent=0 // loop_header_branch
    %16 = sbr.rel (%p14) target = $region8
  $region5: #{_lambda_.3} parent=0 // loop_body
    %s18 = ssub.s32 %s13, 1
    %s19 = ssub.s32 %s13, 2
    %s26 = sadd.s32 1, %s21
    %p27 = scmp.ge.s32.totalorder %s26, 1
    %s28 = scalar_select %p27, 0, %s26
    %s29 = sadd.s32 1, %s20
    %s30 = scalar_select %p27, %s29, %s20
    %p31 = scmp.ge.s32.totalorder %s30, 2
    %s32 = scalar_select %p31, 0, %s30
    %s33 = ssub.s32 %s20, %s32
    %s34 = ssub.s32 %s21, %s28
    %s35 = sor.u32 %s33, %s34
    %p36 = scmp.eq.s32.totalorder %s35, 0
    %s38 = sadd.s32 %s37, 1
    %s39 = scalar_select %p36, %s37, %s38
    %p42 = pneg %p36
    %p43 = scmp.eq.s32.totalorder %s13, 1
    %p44 = por %p42, %p43
    %p45 = scmp.ne.s32.totalorder %s37, %s40
    %p46 = scmp.eq.s32.totalorder %s13, 0
    %p47 = por %p45, %p46
    %p48 = scmp.ne.s32.totalorder %s37, %s40
    %p49 = scmp.eq.s32.totalorder %s18, 1
    %p50 = por %p48, %p49
    %p51 = scmp.ne.s32.totalorder %s40, %s41
    %p52 = scmp.eq.s32.totalorder %s18, 0
    %p53 = por %p51, %p52
    %p54 = scmp.ne.s32.totalorder %s40, %s41
    %p55 = scmp.eq.s32.totalorder %s19, 1
    %p56 = por %p54, %p55
    %p58 = scmp.ne.s32.totalorder %s41, %s57
    %p59 = scmp.eq.s32.totalorder %s19, 0
    %p60 = por %p58, %p59
    %s62 = sadd.s32 %s61, 1
    %p65 = scmp.eq.s32.totalorder %s13, 1
    %p66 = scmp.ne.s32.totalorder %s61, %s63
    %p67 = scmp.eq.s32.totalorder %s13, 0
    %p68 = por %p66, %p67
    %p69 = scmp.ne.s32.totalorder %s61, %s63
    %p70 = scmp.eq.s32.totalorder %s18, 1
    %p71 = por %p69, %p70
    %p72 = scmp.ne.s32.totalorder %s63, %s64
    %p73 = scmp.eq.s32.totalorder %s18, 0
    %p74 = por %p72, %p73
    %p75 = scmp.ne.s32.totalorder %s63, %s64
    %p76 = scmp.eq.s32.totalorder %s19, 1
    %p77 = por %p75, %p76
    %p79 = scmp.ne.s32.totalorder %s64, %s78
    %p80 = scmp.eq.s32.totalorder %s19, 0
    %p81 = por %p79, %p80
    %s83 = sadd.s32 %s82, 1
    %p86 = scmp.eq.s32.totalorder %s13, 1
    %p87 = scmp.ne.s32.totalorder %s82, %s84
    %p88 = scmp.eq.s32.totalorder %s13, 0
    %p89 = por %p87, %p88
    %p90 = scmp.ne.s32.totalorder %s82, %s84
    %p91 = scmp.eq.s32.totalorder %s18, 1
    %p92 = por %p90, %p91
    %p93 = scmp.ne.s32.totalorder %s84, %s85
    %p94 = scmp.eq.s32.totalorder %s18, 0
    %p95 = por %p93, %p94
    %p96 = scmp.ne.s32.totalorder %s84, %s85
    %p97 = scmp.eq.s32.totalorder %s19, 1
    %p98 = por %p96, %p97
    %p100 = scmp.ne.s32.totalorder %s85, %s99
    %p101 = scmp.eq.s32.totalorder %s19, 0
    %p102 = por %p100, %p101
    %s104 = sadd.s32 %s103, 1
    %p107 = scmp.eq.s32.totalorder %s13, 1
    %p108 = scmp.ne.s32.totalorder %s103, %s105
    %p109 = scmp.eq.s32.totalorder %s13, 0
    %p110 = por %p108, %p109
    %p111 = scmp.ne.s32.totalorder %s103, %s105
    %p112 = scmp.eq.s32.totalorder %s18, 1
    %p113 = por %p111, %p112
    %p114 = scmp.ne.s32.totalorder %s105, %s106
    %p115 = scmp.eq.s32.totalorder %s18, 0
    %p116 = por %p114, %p115
    %p117 = scmp.ne.s32.totalorder %s105, %s106
    %p118 = scmp.eq.s32.totalorder %s19, 1
    %p119 = por %p117, %p118
    %p121 = scmp.ne.s32.totalorder %s106, %s120
    %p122 = scmp.eq.s32.totalorder %s19, 0
    %p123 = por %p121, %p122
    %s125 = sadd.s32 %s124, 1
    %p128 = scmp.eq.s32.totalorder %s13, 1
    %p129 = scmp.ne.s32.totalorder %s124, %s126
    %p130 = scmp.eq.s32.totalorder %s13, 0
    %p131 = por %p129, %p130
    %p132 = scmp.ne.s32.totalorder %s124, %s126
    %p133 = scmp.eq.s32.totalorder %s18, 1
    %p134 = por %p132, %p133
    %p135 = scmp.ne.s32.totalorder %s126, %s127
    %p136 = scmp.eq.s32.totalorder %s18, 0
    %p137 = por %p135, %p136
    %p138 = scmp.ne.s32.totalorder %s126, %s127
    %p139 = scmp.eq.s32.totalorder %s19, 1
    %p140 = por %p138, %p139
    %p142 = scmp.ne.s32.totalorder %s127, %s141
    %p143 = scmp.eq.s32.totalorder %s19, 0
    %p144 = por %p142, %p143
    %s145 = ssub.s32 %s20, %s32
    %s146 = ssub.s32 %s21, %s28
    %s147 = sor.u32 %s145, %s146
    %p148 = scmp.eq.s32.totalorder %s147, 0
    %s150 = sadd.s32 %s149, 1
    %s151 = scalar_select %p148, %s149, %s150
    %p154 = pneg %p148
    %p155 = scmp.eq.s32.totalorder %s13, 1
    %p156 = por %p154, %p155
    %p157 = scmp.ne.s32.totalorder %s149, %s152
    %p158 = scmp.eq.s32.totalorder %s13, 0
    %p159 = por %p157, %p158
    %p160 = scmp.ne.s32.totalorder %s149, %s152
    %p161 = scmp.eq.s32.totalorder %s18, 1
    %p162 = por %p160, %p161
    %p163 = scmp.ne.s32.totalorder %s152, %s153
    %p164 = scmp.eq.s32.totalorder %s18, 0
    %p165 = por %p163, %p164
    %p166 = scmp.ne.s32.totalorder %s152, %s153
    %p167 = scmp.eq.s32.totalorder %s19, 1
    %p168 = por %p166, %p167
    %p170 = scmp.ne.s32.totalorder %s153, %s169
    %p171 = scmp.eq.s32.totalorder %s19, 0
    %p172 = por %p170, %p171
    %s173 = ssub.s32 %s20, %s32
    %s174 = ssub.s32 %s21, %s28
    %s175 = sor.u32 %s173, %s174
    %p176 = scmp.eq.s32.totalorder %s175, 0
    %s178 = sadd.s32 %s177, 1
    %s179 = scalar_select %p176, %s177, %s178
    %p182 = pneg %p176
    %p183 = scmp.eq.s32.totalorder %s13, 1
    %p184 = por %p182, %p183
    %p185 = scmp.ne.s32.totalorder %s177, %s180
    %p186 = scmp.eq.s32.totalorder %s13, 0
    %p187 = por %p185, %p186
    %p188 = scmp.ne.s32.totalorder %s177, %s180
    %p189 = scmp.eq.s32.totalorder %s18, 1
    %p190 = por %p188, %p189
    %p191 = scmp.ne.s32.totalorder %s180, %s181
    %p192 = scmp.eq.s32.totalorder %s18, 0
    %p193 = por %p191, %p192
    %p194 = scmp.ne.s32.totalorder %s180, %s181
    %p195 = scmp.eq.s32.totalorder %s19, 1
    %p196 = por %p194, %p195
    %p198 = scmp.ne.s32.totalorder %s181, %s197
    %p199 = scmp.eq.s32.totalorder %s19, 0
    %p200 = por %p198, %p199
    %p201 = scmp.le.s32.totalorder 1, %s13
    %p202 = scmp.lt.s32.totalorder %s13, 3
    %p203 = pnand %p201, %p202
    %p204 = pneg %p203
    // Predicated region
    $region9: #{_lambda_.3} parent=5 // pred_check
      _
    $region10: #{_lambda_.3} parent=5 // pred_check_branch
      %206 = sbr.rel (%p203) target = $region12
    $region11: #{_lambda_.3} parent=5 // pred_region
      %s207 = ssub.s32 %s13, 1
      // Predicated region
      $region13: #{_lambda_.3} parent=11 // pred_check
        %p208 = pneg %p74
      $region14: #{_lambda_.3} parent=11 // pred_check_branch
        %210 = sbr.rel (%p208) target = $region16
      $region15: #{_lambda_.3} parent=11 // pred_region
        _
      $region16: #{_lambda_.3} parent=11 // pred_fallthru
        _
      // Predicated region
      $region17: #{_lambda_.3} parent=11 // pred_check
        %p211 = pneg %p95
      $region18: #{_lambda_.3} parent=11 // pred_check_branch
        %213 = sbr.rel (%p211) target = $region20
      $region19: #{_lambda_.3} parent=11 // pred_region
        _
      $region20: #{_lambda_.3} parent=11 // pred_fallthru
        _
      // Predicated region
      $region21: #{_lambda_.3} parent=11 // pred_check
        %p214 = pneg %p116
      $region22: #{_lambda_.3} parent=11 // pred_check_branch
        %216 = sbr.rel (%p214) target = $region24
      $region23: #{_lambda_.3} parent=11 // pred_region
        _
      $region24: #{_lambda_.3} parent=11 // pred_fallthru
        _
      // Predicated region
      $region25: #{_lambda_.3} parent=11 // pred_check
        %p217 = pneg %p137
      $region26: #{_lambda_.3} parent=11 // pred_check_branch
        %219 = sbr.rel (%p217) target = $region28
      $region27: #{_lambda_.3} parent=11 // pred_region
        _
      $region28: #{_lambda_.3} parent=11 // pred_fallthru
        _
    $region12: #{_lambda_.3} parent=5 // pred_fallthru
      _
    %p220 = scmp.lt.s32.totalorder %s13, 2
    // Predicated region
    $region29: #{_lambda_.3} parent=5 // pred_check
      %p221 = pneg %p220
    $region30: #{_lambda_.3} parent=5 // pred_check_branch
      %223 = sbr.rel (%p221) target = $region32
    $region31: #{_lambda_.3} parent=5 // pred_region
      // Predicated region
      $region33: #{_lambda_.3} parent=31 // pred_check
        %p224 = pneg %p47
      $region34: #{_lambda_.3} parent=31 // pred_check_branch
        %226 = sbr.rel (%p224) target = $region36
      $region35: #{_lambda_.3} parent=31 // pred_region
        %p227 = scmp.lt.s32.totalorder %s20, 1
        %s228 = scalar_select %p227, %s20, 1
        %p229 = scmp.lt.s32.totalorder %s21, 0
        %s230 = scalar_select %p229, %s21, 0
        %s231 = sadd.s32 %s230, %s228
        %s232 = smul.addr %s231, 8
        %s233 = scalar_lea.vmem %s0, %s232
      $region36: #{_lambda_.3} parent=31 // pred_fallthru
        _
    $region32: #{_lambda_.3} parent=5 // pred_fallthru
      _
    %p234 = scmp.le.s32.totalorder 1, %s13
    %p235 = scmp.lt.s32.totalorder %s13, 3
    %p236 = pnand %p234, %p235
    %p237 = pneg %p236
    // Predicated region
    $region37: #{_lambda_.3} parent=5 // pred_check
      _
    $region38: #{_lambda_.3} parent=5 // pred_check_branch
      %239 = sbr.rel (%p236) target = $region40
    $region39: #{_lambda_.3} parent=5 // pred_region
      %s240 = ssub.s32 %s13, 1
      %p241 = scmp.lt.s32.totalorder %s22, 1
      %s242 = scalar_select %p241, %s22, 1
      %p243 = scmp.lt.s32.totalorder %s23, 0
      %s244 = scalar_select %p243, %s23, 0
      %s245 = sadd.s32 %s244, %s242
      %s246 = smul.addr %s245, 8
      %s247 = scalar_lea.vmem %s0, %s246
      %p248 = pneg %p53
      %p249 = pneg %p50
      %p250 = pneg %p74
      %p251 = pneg %p71
      %p252 = pneg %p95
      %p253 = pneg %p92
      %p254 = pneg %p116
      %p255 = pneg %p113
      %p256 = pneg %p137
      %p257 = pneg %p134
      %p258 = pneg %p165
      %p259 = pneg %p162
      %p260 = scmp.lt.s32.totalorder %s22, 1
      %s261 = scalar_select %p260, %s22, 1
      %p262 = scmp.lt.s32.totalorder %s23, 0
      %s263 = scalar_select %p262, %s23, 0
      %s264 = sadd.s32 %s263, %s261
      %s265 = smul.addr %s264, 4
      %s266 = scalar_lea.vmem %s5, %s265
      %p267 = pneg %p193
      %p268 = pneg %p190
      %p269 = scmp.lt.s32.totalorder %s22, 1
      %s270 = scalar_select %p269, %s22, 1
      %p271 = scmp.lt.s32.totalorder %s23, 0
      %s272 = scalar_select %p271, %s23, 0
      %s273 = sadd.s32 %s272, %s270
      %s274 = smul.addr %s273, 4
      %s275 = scalar_lea.vmem %s6, %s274
      %p276 = scmp.lt.s32.totalorder %s22, 1
      %s277 = scalar_select %p276, %s22, 1
      %p278 = scmp.lt.s32.totalorder %s23, 0
      %s279 = scalar_select %p278, %s23, 0
      %s280 = sadd.s32 %s279, %s277
      %s281 = smul.addr %s280, 8
      %s282 = scalar_lea.vmem %s0, %s281
      %p283 = scmp.lt.s32.totalorder %s22, 1
      %s284 = scalar_select %p283, %s22, 1
      %p285 = scmp.lt.s32.totalorder %s23, 0
      %s286 = scalar_select %p285, %s23, 0
      %s287 = sadd.s32 %s286, %s284
      %s288 = smul.addr %s287, 4
      %s289 = scalar_lea.vmem %s5, %s288
      %p290 = scmp.lt.s32.totalorder %s22, 1
      %s291 = scalar_select %p290, %s22, 1
      %p292 = scmp.lt.s32.totalorder %s23, 0
      %s293 = scalar_select %p292, %s23, 0
      %s294 = sadd.s32 %s293, %s291
      %s295 = smul.addr %s294, 4
      %s296 = scalar_lea.vmem %s6, %s295
      %v298 = vld [vmem:[%s282] sm:$0xff]
      %v299 = vld [vmem:[%s1] sm:$0x1]
      %v300 = vld [vmem:[%s2] sm:$0x1]
      %vm301 = vcmask 261120
      %v302 = vsel %vm301, %v298, 0.0
      %303 = vadd.xlane.f32.xlu0 %v302
      %v304 = vpop.xlane.xlu0 %303
      %v305 = vrcp.pop 32.0
      %v306 = vmul.f32 %v304, %v305
      %v307 = vsub.f32 %v298, %v306
      %v308 = vmul.f32 %v307, %v307
      %v309 = vsel %vm301, %v308, 0.0
      %310 = vadd.xlane.f32.xlu0 %v309
      %v311 = vpop.xlane.xlu0 %310
      %v312 = vmul.f32 %v311, %v305
      %v313 = vadd.f32 %v312, 1e-05
      %v314 = vrsqrt.pop %v313
      %v315 = vmul.f32 %v307, %v314
      %v317 = vlaneseq
      %v318 = vshrl.u32 %v317, 7
      %v319 = vsub.s32 0, %v318
      %v320 = vrot.slane %v299, %v319
      %v322 = vmul.f32 %v315, %v320
      %v324 = vlaneseq
      %v325 = vshrl.u32 %v324, 7
      %v326 = vsub.s32 0, %v325
      %v327 = vrot.slane %v300, %v326
      %v329 = vadd.f32 %v322, %v327
      %v330 = vpack.c.bf16 %v329, %v329
      %v331 = vld [vmem:[%s3] sm:$0xf]
      %v332 = vld [vmem:[%s3 + $0x4] sm:$0xf]
      %v333 = vld [vmem:[%s3 + $0x8] sm:$0xf]
      %v334 = vld [vmem:[%s3 + $0xc] sm:$0xf]
      %v335 = vld [vmem:[%s4] sm:$0x1]
      %v337 = vlaneseq
      %v338 = vshrl.u32 %v337, 7
      %v339 = vsub.s32 0, %v338
      %v340 = vrot.slane %v335, %v339
      %v346 = vunpack.c.l.b16 %v331
      %v347 = vunpack.c.l.b16 %v332
      %v348 = vunpack.c.l.b16 %v333
      %v349 = vunpack.c.l.b16 %v334
      %v350 = vpack.c.b16 %v347, %v346
      %v351 = vpack.c.b16 %v349, %v348
      %v355 = vsel %vm301, %v330, 0
      %357 = vmatprep.subr.bf16.mxu0 0
      %358 = vmatpush1.bf16.msra.mxu0 0
      %359 = vmatprep.subr.bf16.mxu0 0
      %360 = vmatpush1.bf16.msra.mxu0 0
      %361 = vmatprep.subr.bf16.mxu0 0
      %362 = vmatpush1.bf16.msra.mxu0 0
      %363 = vmatprep.subr.bf16.mxu0 0
      %364 = vmatpush1.bf16.msra.mxu0 0
      %365 = vmatprep.subr.bf16.mxu0 0
      %366 = vmatpush1.bf16.msra.mxu0 0
      %367 = vmatprep.subr.bf16.mxu0 0
      %368 = vmatpush1.bf16.msra.mxu0 0
      %369 = vmatprep.subr.bf16.mxu0 0
      %370 = vmatpush1.bf16.msra.mxu0 %v351
      %371 = vmatprep.subr.bf16.mxu0 0
      %372 = vmatpush1.bf16.msra.mxu0 %v350
      %373 = vmatprep.subr.bf16.mxu0 0
      %374 = vmatpush2.bf16.msra.mxu0 0
      %375 = vmatprep.subr.bf16.mxu0 0
      %376 = vmatpush2.bf16.msra.mxu0 0
      %377 = vmatprep.subr.bf16.mxu0 0
      %378 = vmatpush2.bf16.msra.mxu0 0
      %379 = vmatprep.subr.bf16.mxu0 0
      %380 = vmatpush2.bf16.msra.mxu0 0
      %381 = vmatprep.subr.bf16.mxu0 0
      %382 = vmatpush2.bf16.msra.mxu0 0
      %383 = vmatprep.subr.bf16.mxu0 0
      %384 = vmatpush2.bf16.msra.mxu0 0
      %385 = vmatprep.subr.bf16.mxu0 0
      %386 = vmatpush2.bf16.msra.mxu0 0
      %387 = vmatprep.subr.bf16.mxu0 0
      %388 = vmatpush2.bf16.msra.mxu0 0
      %389 = vmatprep.mubr.bf16.mxu0 0
      %390 = vmatmul.mubr.bf16.gmra.mxu0 %v355
      %v391 = vpop.f32.mrf.mxu0
      %v392 = vadd.f32 %v340, %v391
      %v393 = vpop.f32.mrf.mxu0
      %v394 = vpop.f32.mrf.mxu0
      %v395 = vpop.f32.mrf.mxu0
      %396 = vdwg.mxu0
      %v397 = vpack.c.bf16 %v392, %v392
      %vm398 = vcmask 257024
      %399 = vst.msk [vmem:[%s289] sm:$0xf] %vm398, %v397
      %v401 = vunpack.c.l.b16 %v397
      %v402 = vpack.c.b16 %v401, %v401
      %403 = vrot.lane.b32.xlu0 %v402, 96
      %v404 = vpop.permute.xlu0 %403
      %406 = vst.msk [vmem:[%s296] sm:$0xf] %vm398, %v404
      %p407 = scmp.lt.s32.totalorder %s22, 1
      %s408 = scalar_select %p407, %s22, 1
      %p409 = scmp.lt.s32.totalorder %s23, 0
      %s410 = scalar_select %p409, %s23, 0
      %s411 = sadd.s32 %s410, %s408
      %s412 = smul.addr %s411, 4
      %s413 = scalar_lea.vmem %s5, %s412
      %p414 = scmp.lt.s32.totalorder %s22, 1
      %s415 = scalar_select %p414, %s22, 1
      %p416 = scmp.lt.s32.totalorder %s23, 0
      %s417 = scalar_select %p416, %s23, 0
      %s418 = sadd.s32 %s417, %s415
      %s419 = smul.addr %s418, 4
      %s420 = scalar_lea.vmem %s6, %s419
      // Predicated region
      $region41: #{_lambda_.3} parent=39 // pred_check
        %p421 = pneg %p162
      $region42: #{_lambda_.3} parent=39 // pred_check_branch
        %423 = sbr.rel (%p421) target = $region44
      $region43: #{_lambda_.3} parent=39 // pred_region
        _
      $region44: #{_lambda_.3} parent=39 // pred_fallthru
        _
      // Predicated region
      $region45: #{_lambda_.3} parent=39 // pred_check
        %p424 = pneg %p190
      $region46: #{_lambda_.3} parent=39 // pred_check_branch
        %426 = sbr.rel (%p424) target = $region48
      $region47: #{_lambda_.3} parent=39 // pred_region
        _
      $region48: #{_lambda_.3} parent=39 // pred_fallthru
        _
    $region40: #{_lambda_.3} parent=5 // pred_fallthru
      _
    %p427 = scmp.le.s32.totalorder 2, %s13
    // Predicated region
    $region49: #{_lambda_.3} parent=5 // pred_check
      %p428 = pneg %p427
    $region50: #{_lambda_.3} parent=5 // pred_check_branch
      %430 = sbr.rel (%p428) target = $region52
    $region51: #{_lambda_.3} parent=5 // pred_region
      %s431 = ssub.s32 %s13, 2
      // Predicated region
      $region53: #{_lambda_.3} parent=51 // pred_check
        %p432 = pneg %p168
      $region54: #{_lambda_.3} parent=51 // pred_check_branch
        %434 = sbr.rel (%p432) target = $region56
      $region55: #{_lambda_.3} parent=51 // pred_region
        %p435 = scmp.lt.s32.totalorder %s24, 1
        %s436 = scalar_select %p435, %s24, 1
        %p437 = scmp.lt.s32.totalorder %s25, 0
        %s438 = scalar_select %p437, %s25, 0
        %s439 = sadd.s32 %s438, %s436
        %s440 = smul.addr %s439, 4
        %s441 = scalar_lea.vmem %s5, %s440
      $region56: #{_lambda_.3} parent=51 // pred_fallthru
        _
      // Predicated region
      $region57: #{_lambda_.3} parent=51 // pred_check
        %p442 = pneg %p196
      $region58: #{_lambda_.3} parent=51 // pred_check_branch
        %444 = sbr.rel (%p442) target = $region60
      $region59: #{_lambda_.3} parent=51 // pred_region
        %p445 = scmp.lt.s32.totalorder %s24, 1
        %s446 = scalar_select %p445, %s24, 1
        %p447 = scmp.lt.s32.totalorder %s25, 0
        %s448 = scalar_select %p447, %s25, 0
        %s449 = sadd.s32 %s448, %s446
        %s450 = smul.addr %s449, 4
        %s451 = scalar_lea.vmem %s6, %s450
      $region60: #{_lambda_.3} parent=51 // pred_fallthru
        _
    $region52: #{_lambda_.3} parent=5 // pred_fallthru
      _
  $region6: #{_lambda_.3} parent=0 // loop_footer
    %s17 = sadd.s32 1, %s13
  $region7: #{_lambda_.3} parent=0 // loop_footer_branch
    %12 = sbr.rel target = $region3
  $region8: #{_lambda_.3} parent=0 // loop_exit
    _

// kernel: _lambda_.4
$region0: #{_lambda_.4}
  #allocation0 [shape = 'u32[]', space=smem, size = 0x4, offset = 0x4, fixed_abs, tag = 'smem constant byte address 0x4 - core index']
  #allocation1 [shape = 'u32[144,128]{1,0:T(1,128)}', space=vmem, size = 0x12000, scoped, tag = 'internal scratch']
  #allocation2 [shape = 'bf16[8,32]{1,0:T(8,128)(2,1)}', space=vmem, size = 0x800, scoped, tag = 'scratch operand']
  #allocation3 [shape = 'f32[8,4]{1,0:T(8,128)}', space=vmem, size = 0x1000, scoped, tag = 'scratch operand']
  #allocation4 [shape = 'f32[8,4]{1,0:T(8,128)}', space=vmem, size = 0x1000, scoped, tag = 'scratch operand']
  #allocation5 [shape = 'f32[8,32]{1,0:T(8,128)}', space=vmem, size = 0x1000, scoped, tag = 'scratch operand']
  %s0 = inlined_call_operand.vmem [shape: f32[2,8,32], index: 0, kind: input, shape index: {}]
  %s1 = inlined_call_operand.vmem [shape: bf16[2,8,32], index: 1, kind: input, shape index: {}]
  %s2 = inlined_call_operand.vmem [shape: bf16[2,8,32], index: 2, kind: input, shape index: {}]
  %s3 = inlined_call_operand.vmem [shape: f32[1,32], index: 3, kind: input, shape index: {}]
  %s4 = inlined_call_operand.vmem [shape: f32[1,32], index: 4, kind: input, shape index: {}]
  %s5 = inlined_call_operand.vmem [shape: bf16[32,32], index: 5, kind: input, shape index: {}]
  %s6 = inlined_call_operand.vmem [shape: f32[1,32], index: 6, kind: input, shape index: {}]
  %s7 = inlined_call_operand.vmem [shape: bf16[32,32], index: 7, kind: input, shape index: {}]
  %s8 = inlined_call_operand.vmem [shape: f32[1,32], index: 8, kind: input, shape index: {}]
  %s9 = inlined_call_operand.vmem [shape: f32[2,8,32], index: 9, kind: output, shape index: {}]
  %s10 = sld [smem:[#allocation0]]
  $region77: #{_lambda_.4} parent=0
    _
  %s12 = ssub.s32 1, %s10
  %s13 = scalar_select 0, %s12, %s10
  loop: start=0, step=1, limit=4
  $region2: #{_lambda_.4} parent=0 // loop_pre_header
    _
  $region3: #{_lambda_.4} parent=0 // loop_header
    %s15 = sphi 0, %s19
    %p16 = scmp.ge.s32.totalorder %s15, 4
    %s22 = sphi 0, %s41
    %s23 = sphi 0, %s37
    %s24 = sphi 0, %s33
    %s25 = sphi 0, %s22
    %s26 = sphi 0, %s23
    %s27 = sphi 0, %s24
    %s28 = sphi 0, %s25
    %s29 = sphi 0, %s26
    %s30 = sphi 0, %s27
    %s46 = sphi 0, %s48
    %s49 = sphi 0, %s46
    %s50 = sphi 0, %s49
    %s66 = sphi 0, %s50
    %s74 = sphi 0, %s76
    %s77 = sphi 0, %s74
    %s78 = sphi 0, %s77
    %s94 = sphi 0, %s78
    %s102 = sphi 0, %s104
    %s105 = sphi 0, %s102
    %s106 = sphi 0, %s105
    %s122 = sphi 0, %s106
    %s126 = sphi 0, %s126
    %s128 = sphi 0, %s126
    %s129 = sphi 0, %s128
    %s143 = sphi 0, %s129
    %s147 = sphi 0, %s147
    %s149 = sphi 0, %s147
    %s150 = sphi 0, %s149
    %s164 = sphi 0, %s150
    %s168 = sphi 0, %s168
    %s170 = sphi 0, %s168
    %s171 = sphi 0, %s170
    %s185 = sphi 0, %s171
    %s189 = sphi 0, %s189
    %s191 = sphi 0, %s189
    %s192 = sphi 0, %s191
    %s206 = sphi 0, %s192
    %s210 = sphi 0, %s210
    %s212 = sphi 0, %s210
    %s213 = sphi 0, %s212
    %s227 = sphi 0, %s213
    %s231 = sphi 0, %s231
    %s233 = sphi 0, %s231
    %s234 = sphi 0, %s233
    %s248 = sphi 0, %s234
    %s256 = sphi 0, %s258
    %s259 = sphi 0, %s256
    %s260 = sphi 0, %s259
    %s276 = sphi 0, %s260
  $region4: #{_lambda_.4} parent=0 // loop_header_branch
    %18 = sbr.rel (%p16) target = $region8
  $region5: #{_lambda_.4} parent=0 // loop_body
    %s20 = ssub.s32 %s15, 1
    %s21 = ssub.s32 %s15, 2
    %s31 = sadd.s32 1, %s24
    %p32 = scmp.ge.s32.totalorder %s31, 1
    %s33 = scalar_select %p32, 0, %s31
    %s34 = sadd.s32 1, %s23
    %s35 = scalar_select %p32, %s34, %s23
    %p36 = scmp.ge.s32.totalorder %s35, 1
    %s37 = scalar_select %p36, 0, %s35
    %s38 = sadd.s32 1, %s22
    %s39 = scalar_select %p36, %s38, %s22
    %p40 = scmp.ge.s32.totalorder %s39, 2
    %s41 = scalar_select %p40, 0, %s39
    %s42 = ssub.s32 %s22, %s41
    %s43 = ssub.s32 %s23, %s37
    %s44 = sor.u32 %s42, %s43
    %p45 = scmp.eq.s32.totalorder %s44, 0
    %s47 = sadd.s32 %s46, 1
    %s48 = scalar_select %p45, %s46, %s47
    %p51 = pneg %p45
    %p52 = scmp.eq.s32.totalorder %s15, 1
    %p53 = por %p51, %p52
    %p54 = scmp.ne.s32.totalorder %s46, %s49
    %p55 = scmp.eq.s32.totalorder %s15, 0
    %p56 = por %p54, %p55
    %p57 = scmp.ne.s32.totalorder %s46, %s49
    %p58 = scmp.eq.s32.totalorder %s20, 1
    %p59 = por %p57, %p58
    %p60 = scmp.ne.s32.totalorder %s49, %s50
    %p61 = scmp.eq.s32.totalorder %s20, 0
    %p62 = por %p60, %p61
    %p63 = scmp.ne.s32.totalorder %s49, %s50
    %p64 = scmp.eq.s32.totalorder %s21, 1
    %p65 = por %p63, %p64
    %p67 = scmp.ne.s32.totalorder %s50, %s66
    %p68 = scmp.eq.s32.totalorder %s21, 0
    %p69 = por %p67, %p68
    %s70 = ssub.s32 %s22, %s41
    %s71 = ssub.s32 %s24, %s33
    %s72 = sor.u32 %s70, %s71
    %p73 = scmp.eq.s32.totalorder %s72, 0
    %s75 = sadd.s32 %s74, 1
    %s76 = scalar_select %p73, %s74, %s75
    %p79 = pneg %p73
    %p80 = scmp.eq.s32.totalorder %s15, 1
    %p81 = por %p79, %p80
    %p82 = scmp.ne.s32.totalorder %s74, %s77
    %p83 = scmp.eq.s32.totalorder %s15, 0
    %p84 = por %p82, %p83
    %p85 = scmp.ne.s32.totalorder %s74, %s77
    %p86 = scmp.eq.s32.totalorder %s20, 1
    %p87 = por %p85, %p86
    %p88 = scmp.ne.s32.totalorder %s77, %s78
    %p89 = scmp.eq.s32.totalorder %s20, 0
    %p90 = por %p88, %p89
    %p91 = scmp.ne.s32.totalorder %s77, %s78
    %p92 = scmp.eq.s32.totalorder %s21, 1
    %p93 = por %p91, %p92
    %p95 = scmp.ne.s32.totalorder %s78, %s94
    %p96 = scmp.eq.s32.totalorder %s21, 0
    %p97 = por %p95, %p96
    %s98 = ssub.s32 %s22, %s41
    %s99 = ssub.s32 %s24, %s33
    %s100 = sor.u32 %s98, %s99
    %p101 = scmp.eq.s32.totalorder %s100, 0
    %s103 = sadd.s32 %s102, 1
    %s104 = scalar_select %p101, %s102, %s103
    %p107 = pneg %p101
    %p108 = scmp.eq.s32.totalorder %s15, 1
    %p109 = por %p107, %p108
    %p110 = scmp.ne.s32.totalorder %s102, %s105
    %p111 = scmp.eq.s32.totalorder %s15, 0
    %p112 = por %p110, %p111
    %p113 = scmp.ne.s32.totalorder %s102, %s105
    %p114 = scmp.eq.s32.totalorder %s20, 1
    %p115 = por %p113, %p114
    %p116 = scmp.ne.s32.totalorder %s105, %s106
    %p117 = scmp.eq.s32.totalorder %s20, 0
    %p118 = por %p116, %p117
    %p119 = scmp.ne.s32.totalorder %s105, %s106
    %p120 = scmp.eq.s32.totalorder %s21, 1
    %p121 = por %p119, %p120
    %p123 = scmp.ne.s32.totalorder %s106, %s122
    %p124 = scmp.eq.s32.totalorder %s21, 0
    %p125 = por %p123, %p124
    %s127 = sadd.s32 %s126, 1
    %p130 = scmp.eq.s32.totalorder %s15, 1
    %p131 = scmp.ne.s32.totalorder %s126, %s128
    %p132 = scmp.eq.s32.totalorder %s15, 0
    %p133 = por %p131, %p132
    %p134 = scmp.ne.s32.totalorder %s126, %s128
    %p135 = scmp.eq.s32.totalorder %s20, 1
    %p136 = por %p134, %p135
    %p137 = scmp.ne.s32.totalorder %s128, %s129
    %p138 = scmp.eq.s32.totalorder %s20, 0
    %p139 = por %p137, %p138
    %p140 = scmp.ne.s32.totalorder %s128, %s129
    %p141 = scmp.eq.s32.totalorder %s21, 1
    %p142 = por %p140, %p141
    %p144 = scmp.ne.s32.totalorder %s129, %s143
    %p145 = scmp.eq.s32.totalorder %s21, 0
    %p146 = por %p144, %p145
    %s148 = sadd.s32 %s147, 1
    %p151 = scmp.eq.s32.totalorder %s15, 1
    %p152 = scmp.ne.s32.totalorder %s147, %s149
    %p153 = scmp.eq.s32.totalorder %s15, 0
    %p154 = por %p152, %p153
    %p155 = scmp.ne.s32.totalorder %s147, %s149
    %p156 = scmp.eq.s32.totalorder %s20, 1
    %p157 = por %p155, %p156
    %p158 = scmp.ne.s32.totalorder %s149, %s150
    %p159 = scmp.eq.s32.totalorder %s20, 0
    %p160 = por %p158, %p159
    %p161 = scmp.ne.s32.totalorder %s149, %s150
    %p162 = scmp.eq.s32.totalorder %s21, 1
    %p163 = por %p161, %p162
    %p165 = scmp.ne.s32.totalorder %s150, %s164
    %p166 = scmp.eq.s32.totalorder %s21, 0
    %p167 = por %p165, %p166
    %s169 = sadd.s32 %s168, 1
    %p172 = scmp.eq.s32.totalorder %s15, 1
    %p173 = scmp.ne.s32.totalorder %s168, %s170
    %p174 = scmp.eq.s32.totalorder %s15, 0
    %p175 = por %p173, %p174
    %p176 = scmp.ne.s32.totalorder %s168, %s170
    %p177 = scmp.eq.s32.totalorder %s20, 1
    %p178 = por %p176, %p177
    %p179 = scmp.ne.s32.totalorder %s170, %s171
    %p180 = scmp.eq.s32.totalorder %s20, 0
    %p181 = por %p179, %p180
    %p182 = scmp.ne.s32.totalorder %s170, %s171
    %p183 = scmp.eq.s32.totalorder %s21, 1
    %p184 = por %p182, %p183
    %p186 = scmp.ne.s32.totalorder %s171, %s185
    %p187 = scmp.eq.s32.totalorder %s21, 0
    %p188 = por %p186, %p187
    %s190 = sadd.s32 %s189, 1
    %p193 = scmp.eq.s32.totalorder %s15, 1
    %p194 = scmp.ne.s32.totalorder %s189, %s191
    %p195 = scmp.eq.s32.totalorder %s15, 0
    %p196 = por %p194, %p195
    %p197 = scmp.ne.s32.totalorder %s189, %s191
    %p198 = scmp.eq.s32.totalorder %s20, 1
    %p199 = por %p197, %p198
    %p200 = scmp.ne.s32.totalorder %s191, %s192
    %p201 = scmp.eq.s32.totalorder %s20, 0
    %p202 = por %p200, %p201
    %p203 = scmp.ne.s32.totalorder %s191, %s192
    %p204 = scmp.eq.s32.totalorder %s21, 1
    %p205 = por %p203, %p204
    %p207 = scmp.ne.s32.totalorder %s192, %s206
    %p208 = scmp.eq.s32.totalorder %s21, 0
    %p209 = por %p207, %p208
    %s211 = sadd.s32 %s210, 1
    %p214 = scmp.eq.s32.totalorder %s15, 1
    %p215 = scmp.ne.s32.totalorder %s210, %s212
    %p216 = scmp.eq.s32.totalorder %s15, 0
    %p217 = por %p215, %p216
    %p218 = scmp.ne.s32.totalorder %s210, %s212
    %p219 = scmp.eq.s32.totalorder %s20, 1
    %p220 = por %p218, %p219
    %p221 = scmp.ne.s32.totalorder %s212, %s213
    %p222 = scmp.eq.s32.totalorder %s20, 0
    %p223 = por %p221, %p222
    %p224 = scmp.ne.s32.totalorder %s212, %s213
    %p225 = scmp.eq.s32.totalorder %s21, 1
    %p226 = por %p224, %p225
    %p228 = scmp.ne.s32.totalorder %s213, %s227
    %p229 = scmp.eq.s32.totalorder %s21, 0
    %p230 = por %p228, %p229
    %s232 = sadd.s32 %s231, 1
    %p235 = scmp.eq.s32.totalorder %s15, 1
    %p236 = scmp.ne.s32.totalorder %s231, %s233
    %p237 = scmp.eq.s32.totalorder %s15, 0
    %p238 = por %p236, %p237
    %p239 = scmp.ne.s32.totalorder %s231, %s233
    %p240 = scmp.eq.s32.totalorder %s20, 1
    %p241 = por %p239, %p240
    %p242 = scmp.ne.s32.totalorder %s233, %s234
    %p243 = scmp.eq.s32.totalorder %s20, 0
    %p244 = por %p242, %p243
    %p245 = scmp.ne.s32.totalorder %s233, %s234
    %p246 = scmp.eq.s32.totalorder %s21, 1
    %p247 = por %p245, %p246
    %p249 = scmp.ne.s32.totalorder %s234, %s248
    %p250 = scmp.eq.s32.totalorder %s21, 0
    %p251 = por %p249, %p250
    %s252 = ssub.s32 %s22, %s41
    %s253 = ssub.s32 %s23, %s37
    %s254 = sor.u32 %s252, %s253
    %p255 = scmp.eq.s32.totalorder %s254, 0
    %s257 = sadd.s32 %s256, 1
    %s258 = scalar_select %p255, %s256, %s257
    %p261 = pneg %p255
    %p262 = scmp.eq.s32.totalorder %s15, 1
    %p263 = por %p261, %p262
    %p264 = scmp.ne.s32.totalorder %s256, %s259
    %p265 = scmp.eq.s32.totalorder %s15, 0
    %p266 = por %p264, %p265
    %p267 = scmp.ne.s32.totalorder %s256, %s259
    %p268 = scmp.eq.s32.totalorder %s20, 1
    %p269 = por %p267, %p268
    %p270 = scmp.ne.s32.totalorder %s259, %s260
    %p271 = scmp.eq.s32.totalorder %s20, 0
    %p272 = por %p270, %p271
    %p273 = scmp.ne.s32.totalorder %s259, %s260
    %p274 = scmp.eq.s32.totalorder %s21, 1
    %p275 = por %p273, %p274
    %p277 = scmp.ne.s32.totalorder %s260, %s276
    %p278 = scmp.eq.s32.totalorder %s21, 0
    %p279 = por %p277, %p278
    %p280 = scmp.le.s32.totalorder 1, %s15
    %p281 = scmp.lt.s32.totalorder %s15, 3
    %p282 = pnand %p280, %p281
    %p283 = pneg %p282
    // Predicated region
    $region9: #{_lambda_.4} parent=5 // pred_check
      _
    $region10: #{_lambda_.4} parent=5 // pred_check_branch
      %285 = sbr.rel (%p282) target = $region12
    $region11: #{_lambda_.4} parent=5 // pred_region
      %s286 = ssub.s32 %s15, 1
      // Predicated region
      $region13: #{_lambda_.4} parent=11 // pred_check
        %p287 = pneg %p139
      $region14: #{_lambda_.4} parent=11 // pred_check_branch
        %289 = sbr.rel (%p287) target = $region16
      $region15: #{_lambda_.4} parent=11 // pred_region
        _
      $region16: #{_lambda_.4} parent=11 // pred_fallthru
        _
      // Predicated region
      $region17: #{_lambda_.4} parent=11 // pred_check
        %p290 = pneg %p160
      $region18: #{_lambda_.4} parent=11 // pred_check_branch
        %292 = sbr.rel (%p290) target = $region20
      $region19: #{_lambda_.4} parent=11 // pred_region
        _
      $region20: #{_lambda_.4} parent=11 // pred_fallthru
        _
      // Predicated region
      $region21: #{_lambda_.4} parent=11 // pred_check
        %p293 = pneg %p181
      $region22: #{_lambda_.4} parent=11 // pred_check_branch
        %295 = sbr.rel (%p293) target = $region24
      $region23: #{_lambda_.4} parent=11 // pred_region
        _
      $region24: #{_lambda_.4} parent=11 // pred_fallthru
        _
      // Predicated region
      $region25: #{_lambda_.4} parent=11 // pred_check
        %p296 = pneg %p202
      $region26: #{_lambda_.4} parent=11 // pred_check_branch
        %298 = sbr.rel (%p296) target = $region28
      $region27: #{_lambda_.4} parent=11 // pred_region
        _
      $region28: #{_lambda_.4} parent=11 // pred_fallthru
        _
      // Predicated region
      $region29: #{_lambda_.4} parent=11 // pred_check
        %p299 = pneg %p223
      $region30: #{_lambda_.4} parent=11 // pred_check_branch
        %301 = sbr.rel (%p299) target = $region32
      $region31: #{_lambda_.4} parent=11 // pred_region
        _
      $region32: #{_lambda_.4} parent=11 // pred_fallthru
        _
      // Predicated region
      $region33: #{_lambda_.4} parent=11 // pred_check
        %p302 = pneg %p244
      $region34: #{_lambda_.4} parent=11 // pred_check_branch
        %304 = sbr.rel (%p302) target = $region36
      $region35: #{_lambda_.4} parent=11 // pred_region
        _
      $region36: #{_lambda_.4} parent=11 // pred_fallthru
        _
    $region12: #{_lambda_.4} parent=5 // pred_fallthru
      _
    %p305 = scmp.lt.s32.totalorder %s15, 2
    // Predicated region
    $region37: #{_lambda_.4} parent=5 // pred_check
      %p306 = pneg %p305
    $region38: #{_lambda_.4} parent=5 // pred_check_branch
      %308 = sbr.rel (%p306) target = $region40
    $region39: #{_lambda_.4} parent=5 // pred_region
      // Predicated region
      $region41: #{_lambda_.4} parent=39 // pred_check
        %p309 = pneg %p56
      $region42: #{_lambda_.4} parent=39 // pred_check_branch
        %311 = sbr.rel (%p309) target = $region44
      $region43: #{_lambda_.4} parent=39 // pred_region
        %p312 = scmp.lt.s32.totalorder %s22, 1
        %s313 = scalar_select %p312, %s22, 1
        %p314 = scmp.lt.s32.totalorder %s23, 0
        %s315 = scalar_select %p314, %s23, 0
        %s316 = sadd.s32 %s315, %s313
        %s317 = smul.addr %s316, 8
        %s318 = scalar_lea.vmem %s0, %s317
      $region44: #{_lambda_.4} parent=39 // pred_fallthru
        _
      // Predicated region
      $region45: #{_lambda_.4} parent=39 // pred_check
        %p319 = pneg %p84
      $region46: #{_lambda_.4} parent=39 // pred_check_branch
        %321 = sbr.rel (%p319) target = $region48
      $region47: #{_lambda_.4} parent=39 // pred_region
        %p322 = scmp.lt.s32.totalorder %s22, 1
        %s323 = scalar_select %p322, %s22, 1
        %p324 = scmp.lt.s32.totalorder %s24, 0
        %s325 = scalar_select %p324, %s24, 0
        %s326 = sadd.s32 %s325, %s323
        %s327 = smul.addr %s326, 4
        %s328 = scalar_lea.vmem %s1, %s327
      $region48: #{_lambda_.4} parent=39 // pred_fallthru
        _
      // Predicated region
      $region49: #{_lambda_.4} parent=39 // pred_check
        %p329 = pneg %p112
      $region50: #{_lambda_.4} parent=39 // pred_check_branch
        %331 = sbr.rel (%p329) target = $region52
      $region51: #{_lambda_.4} parent=39 // pred_region
        %p332 = scmp.lt.s32.totalorder %s22, 1
        %s333 = scalar_select %p332, %s22, 1
        %p334 = scmp.lt.s32.totalorder %s24, 0
        %s335 = scalar_select %p334, %s24, 0
        %s336 = sadd.s32 %s335, %s333
        %s337 = smul.addr %s336, 4
        %s338 = scalar_lea.vmem %s2, %s337
      $region52: #{_lambda_.4} parent=39 // pred_fallthru
        _
    $region40: #{_lambda_.4} parent=5 // pred_fallthru
      _
    %p339 = scmp.le.s32.totalorder 1, %s15
    %p340 = scmp.lt.s32.totalorder %s15, 3
    %p341 = pnand %p339, %p340
    %p342 = pneg %p341
    // Predicated region
    $region53: #{_lambda_.4} parent=5 // pred_check
      _
    $region54: #{_lambda_.4} parent=5 // pred_check_branch
      %344 = sbr.rel (%p341) target = $region56
    $region55: #{_lambda_.4} parent=5 // pred_region
      %s345 = ssub.s32 %s15, 1
      %p346 = scmp.lt.s32.totalorder %s25, 1
      %s347 = scalar_select %p346, %s25, 1
      %p348 = scmp.lt.s32.totalorder %s26, 0
      %s349 = scalar_select %p348, %s26, 0
      %s350 = sadd.s32 %s349, %s347
      %s351 = smul.addr %s350, 8
      %s352 = scalar_lea.vmem %s0, %s351
      %p353 = pneg %p62
      %p354 = pneg %p59
      %p355 = scmp.lt.s32.totalorder %s25, 1
      %s356 = scalar_select %p355, %s25, 1
      %p357 = scmp.lt.s32.totalorder %s27, 0
      %s358 = scalar_select %p357, %s27, 0
      %s359 = sadd.s32 %s358, %s356
      %s360 = smul.addr %s359, 4
      %s361 = scalar_lea.vmem %s1, %s360
      %p362 = pneg %p90
      %p363 = pneg %p87
      %p364 = scmp.lt.s32.totalorder %s25, 1
      %s365 = scalar_select %p364, %s25, 1
      %p366 = scmp.lt.s32.totalorder %s27, 0
      %s367 = scalar_select %p366, %s27, 0
      %s368 = sadd.s32 %s367, %s365
      %s369 = smul.addr %s368, 4
      %s370 = scalar_lea.vmem %s2, %s369
      %p371 = pneg %p118
      %p372 = pneg %p115
      %p373 = pneg %p139
      %p374 = pneg %p136
      %p375 = pneg %p160
      %p376 = pneg %p157
      %p377 = pneg %p181
      %p378 = pneg %p178
      %p379 = pneg %p202
      %p380 = pneg %p199
      %p381 = pneg %p223
      %p382 = pneg %p220
      %p383 = pneg %p244
      %p384 = pneg %p241
      %p385 = pneg %p272
      %p386 = pneg %p269
      %p387 = scmp.lt.s32.totalorder %s25, 1
      %s388 = scalar_select %p387, %s25, 1
      %p389 = scmp.lt.s32.totalorder %s26, 0
      %s390 = scalar_select %p389, %s26, 0
      %s391 = sadd.s32 %s390, %s388
      %s392 = smul.addr %s391, 8
      %s393 = scalar_lea.vmem %s9, %s392
      %p394 = scmp.lt.s32.totalorder %s25, 1
      %s395 = scalar_select %p394, %s25, 1
      %p396 = scmp.lt.s32.totalorder %s26, 0
      %s397 = scalar_select %p396, %s26, 0
      %s398 = sadd.s32 %s397, %s395
      %s399 = smul.addr %s398, 8
      %s400 = scalar_lea.vmem %s0, %s399
      %p401 = scmp.lt.s32.totalorder %s25, 1
      %s402 = scalar_select %p401, %s25, 1
      %p403 = scmp.lt.s32.totalorder %s27, 0
      %s404 = scalar_select %p403, %s27, 0
      %s405 = sadd.s32 %s404, %s402
      %s406 = smul.addr %s405, 4
      %s407 = scalar_lea.vmem %s1, %s406
      %p408 = scmp.lt.s32.totalorder %s25, 1
      %s409 = scalar_select %p408, %s25, 1
      %p410 = scmp.lt.s32.totalorder %s27, 0
      %s411 = scalar_select %p410, %s27, 0
      %s412 = sadd.s32 %s411, %s409
      %s413 = smul.addr %s412, 4
      %s414 = scalar_lea.vmem %s2, %s413
      %p415 = scmp.lt.s32.totalorder %s25, 1
      %s416 = scalar_select %p415, %s25, 1
      %p417 = scmp.lt.s32.totalorder %s26, 0
      %s418 = scalar_select %p417, %s26, 0
      %s419 = sadd.s32 %s418, %s416
      %s420 = smul.addr %s419, 8
      %s421 = scalar_lea.vmem %s9, %s420
      %p423 = scmp.eq.s32.totalorder %s27, 0
      // Predicated region
      $region57: #{_lambda_.4} parent=55 // pred_check
        %p424 = pneg %p423
      $region58: #{_lambda_.4} parent=55 // pred_check_branch
        %426 = sbr.rel (%p424) target = $region60
      $region59: #{_lambda_.4} parent=55 // pred_region
        %v427 = vld [vmem:[%s400] sm:$0xff]
        %v428 = vld [vmem:[%s3] sm:$0x1]
        %v429 = vld [vmem:[%s4] sm:$0x1]
        %vm430 = vcmask 261120
        %v431 = vsel %vm430, %v427, 0.0
        %432 = vadd.xlane.f32.xlu0 %v431
        %v433 = vpop.xlane.xlu0 %432
        %v434 = vrcp.pop 32.0
        %v435 = vmul.f32 %v433, %v434
        %v436 = vsub.f32 %v427, %v435
        %v437 = vmul.f32 %v436, %v436
        %v438 = vsel %vm430, %v437, 0.0
        %439 = vadd.xlane.f32.xlu0 %v438
        %v440 = vpop.xlane.xlu0 %439
        %v441 = vmul.f32 %v440, %v434
        %v442 = vadd.f32 %v441, 1e-05
        %v443 = vrsqrt.pop %v442
        %v444 = vmul.f32 %v436, %v443
        %v446 = vlaneseq
        %v447 = vshrl.u32 %v446, 7
        %v448 = vsub.s32 0, %v447
        %v449 = vrot.slane %v428, %v448
        %v451 = vmul.f32 %v444, %v449
        %v453 = vlaneseq
        %v454 = vshrl.u32 %v453, 7
        %v455 = vsub.s32 0, %v454
        %v456 = vrot.slane %v429, %v455
        %v458 = vadd.f32 %v451, %v456
        %v459 = vpack.c.bf16 %v458, %v458
        %v460 = vld [vmem:[%s5] sm:$0xf]
        %v461 = vld [vmem:[%s5 + $0x4] sm:$0xf]
        %v462 = vld [vmem:[%s5 + $0x8] sm:$0xf]
        %v463 = vld [vmem:[%s5 + $0xc] sm:$0xf]
        %v464 = vld [vmem:[%s6] sm:$0x1]
        %v466 = vlaneseq
        %v467 = vshrl.u32 %v466, 7
        %v468 = vsub.s32 0, %v467
        %v469 = vrot.slane %v464, %v468
        %v475 = vunpack.c.l.b16 %v460
        %v476 = vunpack.c.l.b16 %v461
        %v477 = vunpack.c.l.b16 %v462
        %v478 = vunpack.c.l.b16 %v463
        %v479 = vpack.c.b16 %v476, %v475
        %v480 = vpack.c.b16 %v478, %v477
        %v484 = vsel %vm430, %v459, 0
        %486 = vmatprep.subr.bf16.mxu0 0
        %487 = vmatpush1.bf16.msra.mxu0 0
        %488 = vmatprep.subr.bf16.mxu0 0
        %489 = vmatpush1.bf16.msra.mxu0 0
        %490 = vmatprep.subr.bf16.mxu0 0
        %491 = vmatpush1.bf16.msra.mxu0 0
        %492 = vmatprep.subr.bf16.mxu0 0
        %493 = vmatpush1.bf16.msra.mxu0 0
        %494 = vmatprep.subr.bf16.mxu0 0
        %495 = vmatpush1.bf16.msra.mxu0 0
        %496 = vmatprep.subr.bf16.mxu0 0
        %497 = vmatpush1.bf16.msra.mxu0 0
        %498 = vmatprep.subr.bf16.mxu0 0
        %499 = vmatpush1.bf16.msra.mxu0 %v480
        %500 = vmatprep.subr.bf16.mxu0 0
        %501 = vmatpush1.bf16.msra.mxu0 %v479
        %502 = vmatprep.subr.bf16.mxu0 0
        %503 = vmatpush2.bf16.msra.mxu0 0
        %504 = vmatprep.subr.bf16.mxu0 0
        %505 = vmatpush2.bf16.msra.mxu0 0
        %506 = vmatprep.subr.bf16.mxu0 0
        %507 = vmatpush2.bf16.msra.mxu0 0
        %508 = vmatprep.subr.bf16.mxu0 0
        %509 = vmatpush2.bf16.msra.mxu0 0
        %510 = vmatprep.subr.bf16.mxu0 0
        %511 = vmatpush2.bf16.msra.mxu0 0
        %512 = vmatprep.subr.bf16.mxu0 0
        %513 = vmatpush2.bf16.msra.mxu0 0
        %514 = vmatprep.subr.bf16.mxu0 0
        %515 = vmatpush2.bf16.msra.mxu0 0
        %516 = vmatprep.subr.bf16.mxu0 0
        %517 = vmatpush2.bf16.msra.mxu0 0
        %518 = vmatprep.mubr.bf16.mxu0 0
        %519 = vmatmul.mubr.bf16.gmra.mxu0 %v484
        %v520 = vpop.f32.mrf.mxu0
        %v521 = vadd.f32 %v469, %v520
        %v522 = vpop.f32.mrf.mxu0
        %v523 = vpop.f32.mrf.mxu0
        %v524 = vpop.f32.mrf.mxu0
        %525 = vdwg.mxu0
        %v526 = vpack.c.bf16 %v521, %v521
        %vm527 = vcmask 257024
        %528 = vst.msk [vmem:[#allocation2] sm:$0xf] %vm527, %v526
        %vm529 = vcmask 31744
        %530 = vst.msk [vmem:[#allocation3] sm:$0xff] %vm529, -inf
        %531 = vst.msk [vmem:[#allocation4] sm:$0xff] %vm529, 0.0
        %532 = vst.msk [vmem:[#allocation5] sm:$0xff] %vm430, 0.0
      $region60: #{_lambda_.4} parent=55 // pred_fallthru
        _
      %v533 = vld [vmem:[%s407] sm:$0xf]
      %v534 = vld [vmem:[%s414] sm:$0xf]
      %v535 = vld [vmem:[#allocation2] sm:$0xf]
      %vm536 = vcmask 64512
      %v538 = vsel %vm536, %v535, 0
      %v541 = vsel %vm536, %v533, 0
      %543 = vmatprep.subr.bf16.mxu0 0
      %544 = vmatpush1.bf16.xpose.msra.mxu0 0
      %545 = vmatprep.subr.bf16.mxu0 0
      %546 = vmatpush1.bf16.xpose.msra.mxu0 0
      %547 = vmatprep.subr.bf16.mxu0 0
      %548 = vmatpush1.bf16.xpose.msra.mxu0 0
      %549 = vmatprep.subr.bf16.mxu0 0
      %550 = vmatpush1.bf16.xpose.msra.mxu0 0
      %551 = vmatprep.subr.bf16.mxu0 0
      %552 = vmatpush1.bf16.xpose.msra.mxu0 0
      %553 = vmatprep.subr.bf16.mxu0 0
      %554 = vmatpush1.bf16.xpose.msra.mxu0 0
      %555 = vmatprep.subr.bf16.mxu0 0
      %556 = vmatpush1.bf16.xpose.msra.mxu0 0
      %557 = vmatprep.subr.bf16.mxu0 0
      %558 = vmatpush1.bf16.xpose.msra.mxu0 %v541
      %559 = vmatprep.subr.bf16.mxu0 0
      %560 = vmatpush2.bf16.xpose.msra.mxu0 0
      %561 = vmatprep.subr.bf16.mxu0 0
      %562 = vmatpush2.bf16.xpose.msra.mxu0 0
      %563 = vmatprep.subr.bf16.mxu0 0
      %564 = vmatpush2.bf16.xpose.msra.mxu0 0
      %565 = vmatprep.subr.bf16.mxu0 0
      %566 = vmatpush2.bf16.xpose.msra.mxu0 0
      %567 = vmatprep.subr.bf16.mxu0 0
      %568 = vmatpush2.bf16.xpose.msra.mxu0 0
      %569 = vmatprep.subr.bf16.mxu0 0
      %570 = vmatpush2.bf16.xpose.msra.mxu0 0
      %571 = vmatprep.subr.bf16.mxu0 0
      %572 = vmatpush2.bf16.xpose.msra.mxu0 0
      %573 = vmatprep.subr.bf16.mxu0 0
      %574 = vmatpush2.bf16.xpose.msra.mxu0 0
      %575 = vmatprep.mubr.bf16.mxu0 0
      %576 = vmatmul.mubr.bf16.gmra.mxu0 %v538
      %v577 = vpop.f32.mrf.mxu0
      %v578 = vadd.f32 0.0, %v577
      %v579 = vpop.f32.mrf.mxu0
      %v580 = vpop.f32.mrf.mxu0
      %v581 = vpop.f32.mrf.mxu0
      %582 = vdwg.mxu0
      %v583 = vld [vmem:[#allocation3] sm:$0xff]
      %v584 = vsel %vm536, %v578, -inf
      %585 = vmax.xlane.f32.xlu0 %v584
      %v586 = vpop.xlane.xlu0 %585
      %v587 = vmax.f32 %v583, %v586
      %v588 = vsub.f32 %v583, %v587
      %v589 = vmul.f32 %v588, 1.442695
      %v590 = vpow.pop %v589
      %592 = vset.pattern.permute.xlu0 0
      %593 = vperm.xlu0 %592, %v587
      %v594 = vpop.permute.xlu0 %593
      %v596 = vsub.f32 %v578, %v594
      %v597 = vmul.f32 %v596, 1.442695
      %v598 = vpow.pop %v597
      %v599 = vld [vmem:[#allocation4] sm:$0xff]
      %v600 = vmul.f32 %v590, %v599
      %v601 = vsel %vm536, %v598, 0.0
      %602 = vadd.xlane.f32.xlu0 %v601
      %v603 = vpop.xlane.xlu0 %602
      %v604 = vadd.f32 %v600, %v603
      %vm605 = vcmask 7168
      %606 = vst.msk [vmem:[#allocation4] sm:$0xff] %vm605, %v604
      %v607 = vpack.c.bf16 %v598, %v598
      %v609 = vsel %vm536, %v607, 0
      %vm611 = vcmask 1043456
      %v613 = vsel %vm611, %v534, 0
      %615 = vmatprep.subr.bf16.mxu0 0
      %616 = vmatpush1.bf16.msra.mxu0 0
      %617 = vmatprep.subr.bf16.mxu0 0
      %618 = vmatpush1.bf16.msra.mxu0 0
      %619 = vmatprep.subr.bf16.mxu0 0
      %620 = vmatpush1.bf16.msra.mxu0 0
      %621 = vmatprep.subr.bf16.mxu0 0
      %622 = vmatpush1.bf16.msra.mxu0 0
      %623 = vmatprep.subr.bf16.mxu0 0
      %624 = vmatpush1.bf16.msra.mxu0 0
      %625 = vmatprep.subr.bf16.mxu0 0
      %626 = vmatpush1.bf16.msra.mxu0 0
      %627 = vmatprep.subr.bf16.mxu0 0
      %628 = vmatpush1.bf16.msra.mxu0 0
      %629 = vmatprep.subr.bf16.mxu0 0
      %630 = vmatpush1.bf16.msra.mxu0 %v613
      %631 = vmatprep.subr.bf16.mxu0 0
      %632 = vmatpush2.bf16.msra.mxu0 0
      %633 = vmatprep.subr.bf16.mxu0 0
      %634 = vmatpush2.bf16.msra.mxu0 0
      %635 = vmatprep.subr.bf16.mxu0 0
      %636 = vmatpush2.bf16.msra.mxu0 0
      %637 = vmatprep.subr.bf16.mxu0 0
      %638 = vmatpush2.bf16.msra.mxu0 0
      %639 = vmatprep.subr.bf16.mxu0 0
      %640 = vmatpush2.bf16.msra.mxu0 0
      %641 = vmatprep.subr.bf16.mxu0 0
      %642 = vmatpush2.bf16.msra.mxu0 0
      %643 = vmatprep.subr.bf16.mxu0 0
      %644 = vmatpush2.bf16.msra.mxu0 0
      %645 = vmatprep.subr.bf16.mxu0 0
      %646 = vmatpush2.bf16.msra.mxu0 0
      %647 = vmatprep.mubr.bf16.mxu0 0
      %648 = vmatmul.mubr.bf16.gmra.mxu0 %v609
      %v649 = vpop.f32.mrf.mxu0
      %v650 = vadd.f32 0.0, %v649
      %v651 = vpop.f32.mrf.mxu0
      %v652 = vpop.f32.mrf.mxu0
      %v653 = vpop.f32.mrf.mxu0
      %654 = vdwg.mxu0
      %v655 = vld [vmem:[#allocation5] sm:$0xff]
      %657 = vset.pattern.permute.xlu0 0
      %658 = vperm.xlu0 %657, %v590
      %v659 = vpop.permute.xlu0 %658
      %v661 = vmul.f32 %v659, %v655
      %v662 = vadd.f32 %v661, %v650
      %663 = vst.msk [vmem:[#allocation5] sm:$0xff] %vm536, %v662
      %664 = vst.msk [vmem:[#allocation3] sm:$0xff] %vm605, %v587
      %v665 = vld [vmem:[#allocation2] sm:$0xf]
      %v667 = vunpack.c.l.b16 %v665
      %v668 = vpack.c.b16 %v667, %v667
      %669 = vrot.lane.b32.xlu0 %v668, 120
      %v670 = vpop.permute.xlu0 %669
      %v672 = vunpack.c.l.b16 %v533
      %v673 = vpack.c.b16 %v672, %v672
      %674 = vrot.lane.b32.xlu0 %v673, 120
      %v675 = vpop.permute.xlu0 %674
      %v677 = vsel %vm536, %v670, 0
      %v680 = vsel %vm536, %v675, 0
      %682 = vmatprep.subr.bf16.mxu0 0
      %683 = vmatpush1.bf16.xpose.msra.mxu0 0
      %684 = vmatprep.subr.bf16.mxu0 0
      %685 = vmatpush1.bf16.xpose.msra.mxu0 0
      %686 = vmatprep.subr.bf16.mxu0 0
      %687 = vmatpush1.bf16.xpose.msra.mxu0 0
      %688 = vmatprep.subr.bf16.mxu0 0
      %689 = vmatpush1.bf16.xpose.msra.mxu0 0
      %690 = vmatprep.subr.bf16.mxu0 0
      %691 = vmatpush1.bf16.xpose.msra.mxu0 0
      %692 = vmatprep.subr.bf16.mxu0 0
      %693 = vmatpush1.bf16.xpose.msra.mxu0 0
      %694 = vmatprep.subr.bf16.mxu0 0
      %695 = vmatpush1.bf16.xpose.msra.mxu0 0
      %696 = vmatprep.subr.bf16.mxu0 0
      %697 = vmatpush1.bf16.xpose.msra.mxu0 %v680
      %698 = vmatprep.subr.bf16.mxu0 0
      %699 = vmatpush2.bf16.xpose.msra.mxu0 0
      %700 = vmatprep.subr.bf16.mxu0 0
      %701 = vmatpush2.bf16.xpose.msra.mxu0 0
      %702 = vmatprep.subr.bf16.mxu0 0
      %703 = vmatpush2.bf16.xpose.msra.mxu0 0
      %704 = vmatprep.subr.bf16.mxu0 0
      %705 = vmatpush2.bf16.xpose.msra.mxu0 0
      %706 = vmatprep.subr.bf16.mxu0 0
      %707 = vmatpush2.bf16.xpose.msra.mxu0 0
      %708 = vmatprep.subr.bf16.mxu0 0
      %709 = vmatpush2.bf16.xpose.msra.mxu0 0
      %710 = vmatprep.subr.bf16.mxu0 0
      %711 = vmatpush2.bf16.xpose.msra.mxu0 0
      %712 = vmatprep.subr.bf16.mxu0 0
      %713 = vmatpush2.bf16.xpose.msra.mxu0 0
      %714 = vmatprep.mubr.bf16.mxu0 0
      %715 = vmatmul.mubr.bf16.gmra.mxu0 %v677
      %v716 = vpop.f32.mrf.mxu0
      %v717 = vadd.f32 0.0, %v716
      %v718 = vpop.f32.mrf.mxu0
      %v719 = vpop.f32.mrf.mxu0
      %v720 = vpop.f32.mrf.mxu0
      %721 = vdwg.mxu0
      %v722 = vld [vmem:[#allocation3] sm:$0xff]
      %v723 = vsel %vm536, %v717, -inf
      %724 = vmax.xlane.f32.xlu0 %v723
      %v725 = vpop.xlane.xlu0 %724
      %v726 = vmax.f32 %v722, %v725
      %v727 = vsub.f32 %v722, %v726
      %v728 = vmul.f32 %v727, 1.442695
      %v729 = vpow.pop %v728
      %731 = vset.pattern.permute.xlu0 1
      %732 = vperm.xlu0 %731, %v726
      %v733 = vpop.permute.xlu0 %732
      %v735 = vsub.f32 %v717, %v733
      %v736 = vmul.f32 %v735, 1.442695
      %v737 = vpow.pop %v736
      %v738 = vld [vmem:[#allocation4] sm:$0xff]
      %v739 = vmul.f32 %v729, %v738
      %v740 = vsel %vm536, %v737, 0.0
      %741 = vadd.xlane.f32.xlu0 %v740
      %v742 = vpop.xlane.xlu0 %741
      %v743 = vadd.f32 %v739, %v742
      %vm744 = vcmask 15368
      %745 = vst.msk [vmem:[#allocation4] sm:$0xff] %vm744, %v743
      %v746 = vpack.c.bf16 %v737, %v737
      %v748 = vunpack.c.l.b16 %v534
      %v749 = vpack.c.b16 %v748, %v748
      %750 = vrot.lane.b32.xlu0 %v749, 120
      %v751 = vpop.permute.xlu0 %750
      %v753 = vsel %vm536, %v746, 0
      %v756 = vsel %vm611, %v751, 0
      %758 = vmatprep.subr.bf16.mxu0 0
      %759 = vmatpush1.bf16.msra.mxu0 0
      %760 = vmatprep.subr.bf16.mxu0 0
      %761 = vmatpush1.bf16.msra.mxu0 0
      %762 = vmatprep.subr.bf16.mxu0 0
      %763 = vmatpush1.bf16.msra.mxu0 0
      %764 = vmatprep.subr.bf16.mxu0 0
      %765 = vmatpush1.bf16.msra.mxu0 0
      %766 = vmatprep.subr.bf16.mxu0 0
      %767 = vmatpush1.bf16.msra.mxu0 0
      %768 = vmatprep.subr.bf16.mxu0 0
      %769 = vmatpush1.bf16.msra.mxu0 0
      %770 = vmatprep.subr.bf16.mxu0 0
      %771 = vmatpush1.bf16.msra.mxu0 0
      %772 = vmatprep.subr.bf16.mxu0 0
      %773 = vmatpush1.bf16.msra.mxu0 %v756
      %774 = vmatprep.subr.bf16.mxu0 0
      %775 = vmatpush2.bf16.msra.mxu0 0
      %776 = vmatprep.subr.bf16.mxu0 0
      %777 = vmatpush2.bf16.msra.mxu0 0
      %778 = vmatprep.subr.bf16.mxu0 0
      %779 = vmatpush2.bf16.msra.mxu0 0
      %780 = vmatprep.subr.bf16.mxu0 0
      %781 = vmatpush2.bf16.msra.mxu0 0
      %782 = vmatprep.subr.bf16.mxu0 0
      %783 = vmatpush2.bf16.msra.mxu0 0
      %784 = vmatprep.subr.bf16.mxu0 0
      %785 = vmatpush2.bf16.msra.mxu0 0
      %786 = vmatprep.subr.bf16.mxu0 0
      %787 = vmatpush2.bf16.msra.mxu0 0
      %788 = vmatprep.subr.bf16.mxu0 0
      %789 = vmatpush2.bf16.msra.mxu0 0
      %790 = vmatprep.mubr.bf16.mxu0 0
      %791 = vmatmul.mubr.bf16.gmra.mxu0 %v753
      %v792 = vpop.f32.mrf.mxu0
      %v793 = vadd.f32 0.0, %v792
      %v794 = vpop.f32.mrf.mxu0
      %v795 = vpop.f32.mrf.mxu0
      %v796 = vpop.f32.mrf.mxu0
      %797 = vdwg.mxu0
      %v798 = vld [vmem:[#allocation5] sm:$0xff]
      %800 = vset.pattern.permute.xlu0 1
      %801 = vperm.xlu0 %800, %v729
      %v802 = vpop.permute.xlu0 %801
      %v804 = vmul.f32 %v802, %v798
      %806 = vrot.lane.b32.xlu0 %v793, 8
      %v807 = vpop.permute.xlu0 %806
      %v809 = vadd.f32 %v804, %v807
      %vm810 = vcmask 130112
      %811 = vst.msk [vmem:[#allocation5] sm:$0xff] %vm810, %v809
      %812 = vst.msk [vmem:[#allocation3] sm:$0xff] %vm744, %v726
      %v813 = vld [vmem:[#allocation2] sm:$0xf]
      %v815 = vunpack.c.l.b16 %v813
      %v816 = vpack.c.b16 %v815, %v815
      %817 = vrot.lane.b32.xlu0 %v816, 112
      %v818 = vpop.permute.xlu0 %817
      %819 = vrot.lane.b32.xlu0 %v673, 112
      %v820 = vpop.permute.xlu0 %819
      %v822 = vsel %vm536, %v818, 0
      %v825 = vsel %vm536, %v820, 0
      %827 = vmatprep.subr.bf16.mxu0 0
      %828 = vmatpush1.bf16.xpose.msra.mxu0 0
      %829 = vmatprep.subr.bf16.mxu0 0
      %830 = vmatpush1.bf16.xpose.msra.mxu0 0
      %831 = vmatprep.subr.bf16.mxu0 0
      %832 = vmatpush1.bf16.xpose.msra.mxu0 0
      %833 = vmatprep.subr.bf16.mxu0 0
      %834 = vmatpush1.bf16.xpose.msra.mxu0 0
      %835 = vmatprep.subr.bf16.mxu0 0
      %836 = vmatpush1.bf16.xpose.msra.mxu0 0
      %837 = vmatprep.subr.bf16.mxu0 0
      %838 = vmatpush1.bf16.xpose.msra.mxu0 0
      %839 = vmatprep.subr.bf16.mxu0 0
      %840 = vmatpush1.bf16.xpose.msra.mxu0 0
      %841 = vmatprep.subr.bf16.mxu0 0
      %842 = vmatpush1.bf16.xpose.msra.mxu0 %v825
      %843 = vmatprep.subr.bf16.mxu0 0
      %844 = vmatpush2.bf16.xpose.msra.mxu0 0
      %845 = vmatprep.subr.bf16.mxu0 0
      %846 = vmatpush2.bf16.xpose.msra.mxu0 0
      %847 = vmatprep.subr.bf16.mxu0 0
      %848 = vmatpush2.bf16.xpose.msra.mxu0 0
      %849 = vmatprep.subr.bf16.mxu0 0
      %850 = vmatpush2.bf16.xpose.msra.mxu0 0
      %851 = vmatprep.subr.bf16.mxu0 0
      %852 = vmatpush2.bf16.xpose.msra.mxu0 0
      %853 = vmatprep.subr.bf16.mxu0 0
      %854 = vmatpush2.bf16.xpose.msra.mxu0 0
      %855 = vmatprep.subr.bf16.mxu0 0
      %856 = vmatpush2.bf16.xpose.msra.mxu0 0
      %857 = vmatprep.subr.bf16.mxu0 0
      %858 = vmatpush2.bf16.xpose.msra.mxu0 0
      %859 = vmatprep.mubr.bf16.mxu0 0
      %860 = vmatmul.mubr.bf16.gmra.mxu0 %v822
      %v861 = vpop.f32.mrf.mxu0
      %v862 = vadd.f32 0.0, %v861
      %v863 = vpop.f32.mrf.mxu0
      %v864 = vpop.f32.mrf.mxu0
      %v865 = vpop.f32.mrf.mxu0
      %866 = vdwg.mxu0
      %v867 = vld [vmem:[#allocation3] sm:$0xff]
      %v868 = vsel %vm536, %v862, -inf
      %869 = vmax.xlane.f32.xlu0 %v868
      %v870 = vpop.xlane.xlu0 %869
      %v871 = vmax.f32 %v867, %v870
      %v872 = vsub.f32 %v867, %v871
      %v873 = vmul.f32 %v872, 1.442695
      %v874 = vpow.pop %v873
      %876 = vset.pattern.permute.xlu0 2
      %877 = vperm.xlu0 %876, %v871
      %v878 = vpop.permute.xlu0 %877
      %v880 = vsub.f32 %v862, %v878
      %v881 = vmul.f32 %v880, 1.442695
      %v882 = vpow.pop %v881
      %v883 = vld [vmem:[#allocation4] sm:$0xff]
      %v884 = vmul.f32 %v874, %v883
      %v885 = vsel %vm536, %v882, 0.0
      %886 = vadd.xlane.f32.xlu0 %v885
      %v887 = vpop.xlane.xlu0 %886
      %v888 = vadd.f32 %v884, %v887
      %vm889 = vcmask 23568
      %890 = vst.msk [vmem:[#allocation4] sm:$0xff] %vm889, %v888
      %v891 = vpack.c.bf16 %v882, %v882
      %892 = vrot.lane.b32.xlu0 %v749, 112
      %v893 = vpop.permute.xlu0 %892
      %v895 = vsel %vm536, %v891, 0
      %v898 = vsel %vm611, %v893, 0
      %900 = vmatprep.subr.bf16.mxu0 0
      %901 = vmatpush1.bf16.msra.mxu0 0
      %902 = vmatprep.subr.bf16.mxu0 0
      %903 = vmatpush1.bf16.msra.mxu0 0
      %904 = vmatprep.subr.bf16.mxu0 0
      %905 = vmatpush1.bf16.msra.mxu0 0
      %906 = vmatprep.subr.bf16.mxu0 0
      %907 = vmatpush1.bf16.msra.mxu0 0
      %908 = vmatprep.subr.bf16.mxu0 0
      %909 = vmatpush1.bf16.msra.mxu0 0
      %910 = vmatprep.subr.bf16.mxu0 0
      %911 = vmatpush1.bf16.msra.mxu0 0
      %912 = vmatprep.subr.bf16.mxu0 0
      %913 = vmatpush1.bf16.msra.mxu0 0
      %914 = vmatprep.subr.bf16.mxu0 0
      %915 = vmatpush1.bf16.msra.mxu0 %v898
      %916 = vmatprep.subr.bf16.mxu0 0
      %917 = vmatpush2.bf16.msra.mxu0 0
      %918 = vmatprep.subr.bf16.mxu0 0
      %919 = vmatpush2.bf16.msra.mxu0 0
      %920 = vmatprep.subr.bf16.mxu0 0
      %921 = vmatpush2.bf16.msra.mxu0 0
      %922 = vmatprep.subr.bf16.mxu0 0
      %923 = vmatpush2.bf16.msra.mxu0 0
      %924 = vmatprep.subr.bf16.mxu0 0
      %925 = vmatpush2.bf16.msra.mxu0 0
      %926 = vmatprep.subr.bf16.mxu0 0
      %927 = vmatpush2.bf16.msra.mxu0 0
      %928 = vmatprep.subr.bf16.mxu0 0
      %929 = vmatpush2.bf16.msra.mxu0 0
      %930 = vmatprep.subr.bf16.mxu0 0
      %931 = vmatpush2.bf16.msra.mxu0 0
      %932 = vmatprep.mubr.bf16.mxu0 0
      %933 = vmatmul.mubr.bf16.gmra.mxu0 %v895
      %v934 = vpop.f32.mrf.mxu0
      %v935 = vadd.f32 0.0, %v934
      %v936 = vpop.f32.mrf.mxu0
      %v937 = vpop.f32.mrf.mxu0
      %v938 = vpop.f32.mrf.mxu0
      %939 = vdwg.mxu0
      %v940 = vld [vmem:[#allocation5] sm:$0xff]
      %942 = vset.pattern.permute.xlu0 2
      %943 = vperm.xlu0 %942, %v874
      %v944 = vpop.permute.xlu0 %943
      %v946 = vmul.f32 %v944, %v940
      %948 = vrot.lane.b32.xlu0 %v935, 16
      %v949 = vpop.permute.xlu0 %948
      %v951 = vadd.f32 %v946, %v949
      %vm952 = vcmask 195712
      %953 = vst.msk [vmem:[#allocation5] sm:$0xff] %vm952, %v951
      %954 = vst.msk [vmem:[#allocation3] sm:$0xff] %vm889, %v871
      %v955 = vld [vmem:[#allocation2] sm:$0xf]
      %v957 = vunpack.c.l.b16 %v955
      %v958 = vpack.c.b16 %v957, %v957
      %959 = vrot.lane.b32.xlu0 %v958, 104
      %v960 = vpop.permute.xlu0 %959
      %961 = vrot.lane.b32.xlu0 %v673, 104
      %v962 = vpop.permute.xlu0 %961
      %v964 = vsel %vm536, %v960, 0
      %v967 = vsel %vm536, %v962, 0
      %969 = vmatprep.subr.bf16.mxu0 0
      %970 = vmatpush1.bf16.xpose.msra.mxu0 0
      %971 = vmatprep.subr.bf16.mxu0 0
      %972 = vmatpush1.bf16.xpose.msra.mxu0 0
      %973 = vmatprep.subr.bf16.mxu0 0
      %974 = vmatpush1.bf16.xpose.msra.mxu0 0
      %975 = vmatprep.subr.bf16.mxu0 0
      %976 = vmatpush1.bf16.xpose.msra.mxu0 0
      %977 = vmatprep.subr.bf16.mxu0 0
      %978 = vmatpush1.bf16.xpose.msra.mxu0 0
      %979 = vmatprep.subr.bf16.mxu0 0
      %980 = vmatpush1.bf16.xpose.msra.mxu0 0
      %981 = vmatprep.subr.bf16.mxu0 0
      %982 = vmatpush1.bf16.xpose.msra.mxu0 0
      %983 = vmatprep.subr.bf16.mxu0 0
      %984 = vmatpush1.bf16.xpose.msra.mxu0 %v967
      %985 = vmatprep.subr.bf16.mxu0 0
      %986 = vmatpush2.bf16.xpose.msra.mxu0 0
      %987 = vmatprep.subr.bf16.mxu0 0
      %988 = vmatpush2.bf16.xpose.msra.mxu0 0
      %989 = vmatprep.subr.bf16.mxu0 0
      %990 = vmatpush2.bf16.xpose.msra.mxu0 0
      %991 = vmatprep.subr.bf16.mxu0 0
      %992 = vmatpush2.bf16.xpose.msra.mxu0 0
      %993 = vmatprep.subr.bf16.mxu0 0
      %994 = vmatpush2.bf16.xpose.msra.mxu0 0
      %995 = vmatprep.subr.bf16.mxu0 0
      %996 = vmatpush2.bf16.xpose.msra.mxu0 0
      %997 = vmatprep.subr.bf16.mxu0 0
      %998 = vmatpush2.bf16.xpose.msra.mxu0 0
      %999 = vmatprep.subr.bf16.mxu0 0
      %1000 = vmatpush2.bf16.xpose.msra.mxu0 0
      %1001 = vmatprep.mubr.bf16.mxu0 0
      %1002 = vmatmul.mubr.bf16.gmra.mxu0 %v964
      %v1003 = vpop.f32.mrf.mxu0
      %v1004 = vadd.f32 0.0, %v1003
      %v1005 = vpop.f32.mrf.mxu0
      %v1006 = vpop.f32.mrf.mxu0
      %v1007 = vpop.f32.mrf.mxu0
      %1008 = vdwg.mxu0
      %v1009 = vld [vmem:[#allocation3] sm:$0xff]
      %v1010 = vsel %vm536, %v1004, -inf
      %1011 = vmax.xlane.f32.xlu0 %v1010
      %v1012 = vpop.xlane.xlu0 %1011
      %v1013 = vmax.f32 %v1009, %v1012
      %v1014 = vsub.f32 %v1009, %v1013
      %v1015 = vmul.f32 %v1014, 1.442695
      %v1016 = vpow.pop %v1015
      %1018 = vset.pattern.permute.xlu0 3
      %1019 = vperm.xlu0 %1018, %v1013
      %v1020 = vpop.permute.xlu0 %1019
      %v1022 = vsub.f32 %v1004, %v1020
      %v1023 = vmul.f32 %v1022, 1.442695
      %v1024 = vpow.pop %v1023
      %v1025 = vld [vmem:[#allocation4] sm:$0xff]
      %v1026 = vmul.f32 %v1016, %v1025
      %v1027 = vsel %vm536, %v1024, 0.0
      %1028 = vadd.xlane.f32.xlu0 %v1027
      %v1029 = vpop.xlane.xlu0 %1028
      %v1030 = vadd.f32 %v1026, %v1029
      %vm1031 = vcmask 31768
      %1032 = vst.msk [vmem:[#allocation4] sm:$0xff] %vm1031, %v1030
      %v1033 = vpack.c.bf16 %v1024, %v1024
      %1034 = vrot.lane.b32.xlu0 %v749, 104
      %v1035 = vpop.permute.xlu0 %1034
      %v1037 = vsel %vm536, %v1033, 0
      %v1040 = vsel %vm611, %v1035, 0
      %1042 = vmatprep.subr.bf16.mxu0 0
      %1043 = vmatpush1.bf16.msra.mxu0 0
      %1044 = vmatprep.subr.bf16.mxu0 0
      %1045 = vmatpush1.bf16.msra.mxu0 0
      %1046 = vmatprep.subr.bf16.mxu0 0
      %1047 = vmatpush1.bf16.msra.mxu0 0
      %1048 = vmatprep.subr.bf16.mxu0 0
      %1049 = vmatpush1.bf16.msra.mxu0 0
      %1050 = vmatprep.subr.bf16.mxu0 0
      %1051 = vmatpush1.bf16.msra.mxu0 0
      %1052 = vmatprep.subr.bf16.mxu0 0
      %1053 = vmatpush1.bf16.msra.mxu0 0
      %1054 = vmatprep.subr.bf16.mxu0 0
      %1055 = vmatpush1.bf16.msra.mxu0 0
      %1056 = vmatprep.subr.bf16.mxu0 0
      %1057 = vmatpush1.bf16.msra.mxu0 %v1040
      %1058 = vmatprep.subr.bf16.mxu0 0
      %1059 = vmatpush2.bf16.msra.mxu0 0
      %1060 = vmatprep.subr.bf16.mxu0 0
      %1061 = vmatpush2.bf16.msra.mxu0 0
      %1062 = vmatprep.subr.bf16.mxu0 0
      %1063 = vmatpush2.bf16.msra.mxu0 0
      %1064 = vmatprep.subr.bf16.mxu0 0
      %1065 = vmatpush2.bf16.msra.mxu0 0
      %1066 = vmatprep.subr.bf16.mxu0 0
      %1067 = vmatpush2.bf16.msra.mxu0 0
      %1068 = vmatprep.subr.bf16.mxu0 0
      %1069 = vmatpush2.bf16.msra.mxu0 0
      %1070 = vmatprep.subr.bf16.mxu0 0
      %1071 = vmatpush2.bf16.msra.mxu0 0
      %1072 = vmatprep.subr.bf16.mxu0 0
      %1073 = vmatpush2.bf16.msra.mxu0 0
      %1074 = vmatprep.mubr.bf16.mxu0 0
      %1075 = vmatmul.mubr.bf16.gmra.mxu0 %v1037
      %v1076 = vpop.f32.mrf.mxu0
      %v1077 = vadd.f32 0.0, %v1076
      %v1078 = vpop.f32.mrf.mxu0
      %v1079 = vpop.f32.mrf.mxu0
      %v1080 = vpop.f32.mrf.mxu0
      %1081 = vdwg.mxu0
      %v1082 = vld [vmem:[#allocation5] sm:$0xff]
      %1084 = vset.pattern.permute.xlu0 3
      %1085 = vperm.xlu0 %1084, %v1016
      %v1086 = vpop.permute.xlu0 %1085
      %v1088 = vmul.f32 %v1086, %v1082
      %1090 = vrot.lane.b32.xlu0 %v1077, 24
      %v1091 = vpop.permute.xlu0 %1090
      %v1093 = vadd.f32 %v1088, %v1091
      %vm1094 = vcmask 261312
      %1095 = vst.msk [vmem:[#allocation5] sm:$0xff] %vm1094, %v1093
      %1096 = vst.msk [vmem:[#allocation3] sm:$0xff] %vm1031, %v1013
      // Predicated region
      $region61: #{_lambda_.4} parent=55 // pred_check
        %p1097 = pneg %p423
      $region62: #{_lambda_.4} parent=55 // pred_check_branch
        %1099 = sbr.rel (%p1097) target = $region64
      $region63: #{_lambda_.4} parent=55 // pred_region
        %v1100 = vld [vmem:[#allocation5] sm:$0xff]
        %v1101 = vld [vmem:[#allocation4] sm:$0xff]
        %1103 = vset.pattern.permute.xlu0 0
        %1104 = vperm.xlu0 %1103, %v1101
        %v1105 = vpop.permute.xlu0 %1104
        %v1107 = vrcp.pop %v1105
        %v1108 = vmul.f32 %v1100, %v1107
        %1109 = vst.msk [vmem:[#allocation5] sm:$0xff] %vm536, %v1108
        %v1110 = vld [vmem:[#allocation5] sm:$0xff]
        %v1111 = vld [vmem:[#allocation4] sm:$0xff]
        %1113 = vset.pattern.permute.xlu0 1
        %1114 = vperm.xlu0 %1113, %v1111
        %v1115 = vpop.permute.xlu0 %1114
        %v1117 = vrcp.pop %v1115
        %v1118 = vmul.f32 %v1110, %v1117
        %1119 = vst.msk [vmem:[#allocation5] sm:$0xff] %vm810, %v1118
        %v1120 = vld [vmem:[#allocation5] sm:$0xff]
        %v1121 = vld [vmem:[#allocation4] sm:$0xff]
        %1123 = vset.pattern.permute.xlu0 2
        %1124 = vperm.xlu0 %1123, %v1121
        %v1125 = vpop.permute.xlu0 %1124
        %v1127 = vrcp.pop %v1125
        %v1128 = vmul.f32 %v1120, %v1127
        %1129 = vst.msk [vmem:[#allocation5] sm:$0xff] %vm952, %v1128
        %v1130 = vld [vmem:[#allocation5] sm:$0xff]
        %v1131 = vld [vmem:[#allocation4] sm:$0xff]
        %1133 = vset.pattern.permute.xlu0 3
        %1134 = vperm.xlu0 %1133, %v1131
        %v1135 = vpop.permute.xlu0 %1134
        %v1137 = vrcp.pop %v1135
        %v1138 = vmul.f32 %v1130, %v1137
        %1139 = vst.msk [vmem:[#allocation5] sm:$0xff] %vm1094, %v1138
        %v1140 = vld [vmem:[#allocation5] sm:$0xff]
        %v1141 = vpack.c.bf16 %v1140, %v1140
        %v1142 = vld [vmem:[%s7] sm:$0xf]
        %v1143 = vld [vmem:[%s7 + $0x4] sm:$0xf]
        %v1144 = vld [vmem:[%s7 + $0x8] sm:$0xf]
        %v1145 = vld [vmem:[%s7 + $0xc] sm:$0xf]
        %v1146 = vld [vmem:[%s8] sm:$0x1]
        %v1148 = vlaneseq
        %v1149 = vshrl.u32 %v1148, 7
        %v1150 = vsub.s32 0, %v1149
        %v1151 = vrot.slane %v1146, %v1150
        %v1157 = vunpack.c.l.b16 %v1142
        %v1158 = vunpack.c.l.b16 %v1143
        %v1159 = vunpack.c.l.b16 %v1144
        %v1160 = vunpack.c.l.b16 %v1145
        %v1161 = vpack.c.b16 %v1158, %v1157
        %v1162 = vpack.c.b16 %v1160, %v1159
        %vm1165 = vcmask 261120
        %v1167 = vsel %vm1165, %v1141, 0
        %1169 = vmatprep.subr.bf16.mxu0 0
        %1170 = vmatpush1.bf16.msra.mxu0 0
        %1171 = vmatprep.subr.bf16.mxu0 0
        %1172 = vmatpush1.bf16.msra.mxu0 0
        %1173 = vmatprep.subr.bf16.mxu0 0
        %1174 = vmatpush1.bf16.msra.mxu0 0
        %1175 = vmatprep.subr.bf16.mxu0 0
        %1176 = vmatpush1.bf16.msra.mxu0 0
        %1177 = vmatprep.subr.bf16.mxu0 0
        %1178 = vmatpush1.bf16.msra.mxu0 0
        %1179 = vmatprep.subr.bf16.mxu0 0
        %1180 = vmatpush1.bf16.msra.mxu0 0
        %1181 = vmatprep.subr.bf16.mxu0 0
        %1182 = vmatpush1.bf16.msra.mxu0 %v1162
        %1183 = vmatprep.subr.bf16.mxu0 0
        %1184 = vmatpush1.bf16.msra.mxu0 %v1161
        %1185 = vmatprep.subr.bf16.mxu0 0
        %1186 = vmatpush2.bf16.msra.mxu0 0
        %1187 = vmatprep.subr.bf16.mxu0 0
        %1188 = vmatpush2.bf16.msra.mxu0 0
        %1189 = vmatprep.subr.bf16.mxu0 0
        %1190 = vmatpush2.bf16.msra.mxu0 0
        %1191 = vmatprep.subr.bf16.mxu0 0
        %1192 = vmatpush2.bf16.msra.mxu0 0
        %1193 = vmatprep.subr.bf16.mxu0 0
        %1194 = vmatpush2.bf16.msra.mxu0 0
        %1195 = vmatprep.subr.bf16.mxu0 0
        %1196 = vmatpush2.bf16.msra.mxu0 0
        %1197 = vmatprep.subr.bf16.mxu0 0
        %1198 = vmatpush2.bf16.msra.mxu0 0
        %1199 = vmatprep.subr.bf16.mxu0 0
        %1200 = vmatpush2.bf16.msra.mxu0 0
        %1201 = vmatprep.mubr.bf16.mxu0 0
        %1202 = vmatmul.mubr.bf16.gmra.mxu0 %v1167
        %v1203 = vpop.f32.mrf.mxu0
        %v1204 = vadd.f32 %v1151, %v1203
        %v1205 = vpop.f32.mrf.mxu0
        %v1206 = vpop.f32.mrf.mxu0
        %v1207 = vpop.f32.mrf.mxu0
        %1208 = vdwg.mxu0
        %v1209 = vld [vmem:[%s400] sm:$0xff]
        %v1210 = vadd.f32 %v1209, %v1204
        %1211 = vst.msk [vmem:[%s421] sm:$0xff] %vm1165, %v1210
      $region64: #{_lambda_.4} parent=55 // pred_fallthru
        _
      %p1212 = scmp.lt.s32.totalorder %s25, 1
      %s1213 = scalar_select %p1212, %s25, 1
      %p1214 = scmp.lt.s32.totalorder %s26, 0
      %s1215 = scalar_select %p1214, %s26, 0
      %s1216 = sadd.s32 %s1215, %s1213
      %s1217 = smul.addr %s1216, 8
      %s1218 = scalar_lea.vmem %s9, %s1217
      // Predicated region
      $region65: #{_lambda_.4} parent=55 // pred_check
        %p1219 = pneg %p269
      $region66: #{_lambda_.4} parent=55 // pred_check_branch
        %1221 = sbr.rel (%p1219) target = $region68
      $region67: #{_lambda_.4} parent=55 // pred_region
        _
      $region68: #{_lambda_.4} parent=55 // pred_fallthru
        _
    $region56: #{_lambda_.4} parent=5 // pred_fallthru
      _
    %p1222 = scmp.le.s32.totalorder 2, %s15
    // Predicated region
    $region69: #{_lambda_.4} parent=5 // pred_check
      %p1223 = pneg %p1222
    $region70: #{_lambda_.4} parent=5 // pred_check_branch
      %1225 = sbr.rel (%p1223) target = $region72
    $region71: #{_lambda_.4} parent=5 // pred_region
      %s1226 = ssub.s32 %s15, 2
      // Predicated region
      $region73: #{_lambda_.4} parent=71 // pred_check
        %p1227 = pneg %p275
      $region74: #{_lambda_.4} parent=71 // pred_check_branch
        %1229 = sbr.rel (%p1227) target = $region76
      $region75: #{_lambda_.4} parent=71 // pred_region
        %p1230 = scmp.lt.s32.totalorder %s28, 1
        %s1231 = scalar_select %p1230, %s28, 1
        %p1232 = scmp.lt.s32.totalorder %s29, 0
        %s1233 = scalar_select %p1232, %s29, 0
        %s1234 = sadd.s32 %s1233, %s1231
        %s1235 = smul.addr %s1234, 8
        %s1236 = scalar_lea.vmem %s9, %s1235
      $region76: #{_lambda_.4} parent=71 // pred_fallthru
        _
    $region72: #{_lambda_.4} parent=5 // pred_fallthru
      _
  $region6: #{_lambda_.4} parent=0 // loop_footer
    %s19 = sadd.s32 1, %s15
  $region7: #{_lambda_.4} parent=0 // loop_footer_branch
    %14 = sbr.rel target = $region3
  $region8: #{_lambda_.4} parent=0 // loop_exit
    _

// kernel: _lambda_.5
$region0: #{_lambda_.5}
  #allocation0 [shape = 'u32[]', space=smem, size = 0x4, offset = 0x4, fixed_abs, tag = 'smem constant byte address 0x4 - core index']
  #allocation1 [shape = 'u32[144,128]{1,0:T(1,128)}', space=vmem, size = 0x12000, scoped, tag = 'internal scratch']
  #allocation2 [shape = 'bf16[8,32]{1,0:T(8,128)(2,1)}', space=vmem, size = 0x800, scoped, tag = 'scratch operand']
  #allocation3 [shape = 'f32[8,32]{1,0:T(8,128)}', space=vmem, size = 0x1000, scoped, tag = 'scratch operand']
  %s0 = inlined_call_operand.vmem [shape: f32[2,8,32], index: 0, kind: input, shape index: {}]
  %s1 = inlined_call_operand.vmem [shape: f32[1,32], index: 1, kind: input, shape index: {}]
  %s2 = inlined_call_operand.vmem [shape: f32[1,32], index: 2, kind: input, shape index: {}]
  %s3 = inlined_call_operand.vmem [shape: bf16[32,128], index: 3, kind: input, shape index: {}]
  %s4 = inlined_call_operand.vmem [shape: f32[1,128], index: 4, kind: input, shape index: {}]
  %s5 = inlined_call_operand.vmem [shape: bf16[128,32], index: 5, kind: input, shape index: {}]
  %s6 = inlined_call_operand.vmem [shape: f32[1,32], index: 6, kind: input, shape index: {}]
  %s7 = inlined_call_operand.vmem [shape: f32[2,8,32], index: 7, kind: output, shape index: {}]
  %s8 = sld [smem:[#allocation0]]
  $region69: #{_lambda_.5} parent=0
    _
  %s10 = ssub.s32 1, %s8
  %s11 = scalar_select 0, %s10, %s8
  loop: start=0, step=1, limit=4
  $region2: #{_lambda_.5} parent=0 // loop_pre_header
    _
  $region3: #{_lambda_.5} parent=0 // loop_header
    %s13 = sphi 0, %s17
    %p14 = scmp.ge.s32.totalorder %s13, 4
    %s20 = sphi 0, %s39
    %s21 = sphi 0, %s35
    %s22 = sphi 0, %s31
    %s23 = sphi 0, %s20
    %s24 = sphi 0, %s21
    %s25 = sphi 0, %s22
    %s26 = sphi 0, %s23
    %s27 = sphi 0, %s24
    %s28 = sphi 0, %s25
    %s44 = sphi 0, %s46
    %s47 = sphi 0, %s44
    %s48 = sphi 0, %s47
    %s64 = sphi 0, %s48
    %s68 = sphi 0, %s68
    %s70 = sphi 0, %s68
    %s71 = sphi 0, %s70
    %s85 = sphi 0, %s71
    %s89 = sphi 0, %s89
    %s91 = sphi 0, %s89
    %s92 = sphi 0, %s91
    %s106 = sphi 0, %s92
    %s112 = sphi 0, %s114
    %s115 = sphi 0, %s112
    %s116 = sphi 0, %s115
    %s132 = sphi 0, %s116
    %s138 = sphi 0, %s140
    %s141 = sphi 0, %s138
    %s142 = sphi 0, %s141
    %s158 = sphi 0, %s142
    %s164 = sphi 0, %s166
    %s167 = sphi 0, %s164
    %s168 = sphi 0, %s167
    %s184 = sphi 0, %s168
    %s188 = sphi 0, %s188
    %s190 = sphi 0, %s188
    %s191 = sphi 0, %s190
    %s205 = sphi 0, %s191
    %s213 = sphi 0, %s215
    %s216 = sphi 0, %s213
    %s217 = sphi 0, %s216
    %s233 = sphi 0, %s217
  $region4: #{_lambda_.5} parent=0 // loop_header_branch
    %16 = sbr.rel (%p14) target = $region8
  $region5: #{_lambda_.5} parent=0 // loop_body
    %s18 = ssub.s32 %s13, 1
    %s19 = ssub.s32 %s13, 2
    %s29 = sadd.s32 1, %s22
    %p30 = scmp.ge.s32.totalorder %s29, 1
    %s31 = scalar_select %p30, 0, %s29
    %s32 = sadd.s32 1, %s21
    %s33 = scalar_select %p30, %s32, %s21
    %p34 = scmp.ge.s32.totalorder %s33, 1
    %s35 = scalar_select %p34, 0, %s33
    %s36 = sadd.s32 1, %s20
    %s37 = scalar_select %p34, %s36, %s20
    %p38 = scmp.ge.s32.totalorder %s37, 2
    %s39 = scalar_select %p38, 0, %s37
    %s40 = ssub.s32 %s20, %s39
    %s41 = ssub.s32 %s21, %s35
    %s42 = sor.u32 %s40, %s41
    %p43 = scmp.eq.s32.totalorder %s42, 0
    %s45 = sadd.s32 %s44, 1
    %s46 = scalar_select %p43, %s44, %s45
    %p49 = pneg %p43
    %p50 = scmp.eq.s32.totalorder %s13, 1
    %p51 = por %p49, %p50
    %p52 = scmp.ne.s32.totalorder %s44, %s47
    %p53 = scmp.eq.s32.totalorder %s13, 0
    %p54 = por %p52, %p53
    %p55 = scmp.ne.s32.totalorder %s44, %s47
    %p56 = scmp.eq.s32.totalorder %s18, 1
    %p57 = por %p55, %p56
    %p58 = scmp.ne.s32.totalorder %s47, %s48
    %p59 = scmp.eq.s32.totalorder %s18, 0
    %p60 = por %p58, %p59
    %p61 = scmp.ne.s32.totalorder %s47, %s48
    %p62 = scmp.eq.s32.totalorder %s19, 1
    %p63 = por %p61, %p62
    %p65 = scmp.ne.s32.totalorder %s48, %s64
    %p66 = scmp.eq.s32.totalorder %s19, 0
    %p67 = por %p65, %p66
    %s69 = sadd.s32 %s68, 1
    %p72 = scmp.eq.s32.totalorder %s13, 1
    %p73 = scmp.ne.s32.totalorder %s68, %s70
    %p74 = scmp.eq.s32.totalorder %s13, 0
    %p75 = por %p73, %p74
    %p76 = scmp.ne.s32.totalorder %s68, %s70
    %p77 = scmp.eq.s32.totalorder %s18, 1
    %p78 = por %p76, %p77
    %p79 = scmp.ne.s32.totalorder %s70, %s71
    %p80 = scmp.eq.s32.totalorder %s18, 0
    %p81 = por %p79, %p80
    %p82 = scmp.ne.s32.totalorder %s70, %s71
    %p83 = scmp.eq.s32.totalorder %s19, 1
    %p84 = por %p82, %p83
    %p86 = scmp.ne.s32.totalorder %s71, %s85
    %p87 = scmp.eq.s32.totalorder %s19, 0
    %p88 = por %p86, %p87
    %s90 = sadd.s32 %s89, 1
    %p93 = scmp.eq.s32.totalorder %s13, 1
    %p94 = scmp.ne.s32.totalorder %s89, %s91
    %p95 = scmp.eq.s32.totalorder %s13, 0
    %p96 = por %p94, %p95
    %p97 = scmp.ne.s32.totalorder %s89, %s91
    %p98 = scmp.eq.s32.totalorder %s18, 1
    %p99 = por %p97, %p98
    %p100 = scmp.ne.s32.totalorder %s91, %s92
    %p101 = scmp.eq.s32.totalorder %s18, 0
    %p102 = por %p100, %p101
    %p103 = scmp.ne.s32.totalorder %s91, %s92
    %p104 = scmp.eq.s32.totalorder %s19, 1
    %p105 = por %p103, %p104
    %p107 = scmp.ne.s32.totalorder %s92, %s106
    %p108 = scmp.eq.s32.totalorder %s19, 0
    %p109 = por %p107, %p108
    %s110 = ssub.s32 %s22, %s31
    %p111 = scmp.eq.s32.totalorder %s110, 0
    %s113 = sadd.s32 %s112, 1
    %s114 = scalar_select %p111, %s112, %s113
    %p117 = pneg %p111
    %p118 = scmp.eq.s32.totalorder %s13, 1
    %p119 = por %p117, %p118
    %p120 = scmp.ne.s32.totalorder %s112, %s115
    %p121 = scmp.eq.s32.totalorder %s13, 0
    %p122 = por %p120, %p121
    %p123 = scmp.ne.s32.totalorder %s112, %s115
    %p124 = scmp.eq.s32.totalorder %s18, 1
    %p125 = por %p123, %p124
    %p126 = scmp.ne.s32.totalorder %s115, %s116
    %p127 = scmp.eq.s32.totalorder %s18, 0
    %p128 = por %p126, %p127
    %p129 = scmp.ne.s32.totalorder %s115, %s116
    %p130 = scmp.eq.s32.totalorder %s19, 1
    %p131 = por %p129, %p130
    %p133 = scmp.ne.s32.totalorder %s116, %s132
    %p134 = scmp.eq.s32.totalorder %s19, 0
    %p135 = por %p133, %p134
    %s136 = ssub.s32 %s22, %s31
    %p137 = scmp.eq.s32.totalorder %s136, 0
    %s139 = sadd.s32 %s138, 1
    %s140 = scalar_select %p137, %s138, %s139
    %p143 = pneg %p137
    %p144 = scmp.eq.s32.totalorder %s13, 1
    %p145 = por %p143, %p144
    %p146 = scmp.ne.s32.totalorder %s138, %s141
    %p147 = scmp.eq.s32.totalorder %s13, 0
    %p148 = por %p146, %p147
    %p149 = scmp.ne.s32.totalorder %s138, %s141
    %p150 = scmp.eq.s32.totalorder %s18, 1
    %p151 = por %p149, %p150
    %p152 = scmp.ne.s32.totalorder %s141, %s142
    %p153 = scmp.eq.s32.totalorder %s18, 0
    %p154 = por %p152, %p153
    %p155 = scmp.ne.s32.totalorder %s141, %s142
    %p156 = scmp.eq.s32.totalorder %s19, 1
    %p157 = por %p155, %p156
    %p159 = scmp.ne.s32.totalorder %s142, %s158
    %p160 = scmp.eq.s32.totalorder %s19, 0
    %p161 = por %p159, %p160
    %s162 = ssub.s32 %s22, %s31
    %p163 = scmp.eq.s32.totalorder %s162, 0
    %s165 = sadd.s32 %s164, 1
    %s166 = scalar_select %p163, %s164, %s165
    %p169 = pneg %p163
    %p170 = scmp.eq.s32.totalorder %s13, 1
    %p171 = por %p169, %p170
    %p172 = scmp.ne.s32.totalorder %s164, %s167
    %p173 = scmp.eq.s32.totalorder %s13, 0
    %p174 = por %p172, %p173
    %p175 = scmp.ne.s32.totalorder %s164, %s167
    %p176 = scmp.eq.s32.totalorder %s18, 1
    %p177 = por %p175, %p176
    %p178 = scmp.ne.s32.totalorder %s167, %s168
    %p179 = scmp.eq.s32.totalorder %s18, 0
    %p180 = por %p178, %p179
    %p181 = scmp.ne.s32.totalorder %s167, %s168
    %p182 = scmp.eq.s32.totalorder %s19, 1
    %p183 = por %p181, %p182
    %p185 = scmp.ne.s32.totalorder %s168, %s184
    %p186 = scmp.eq.s32.totalorder %s19, 0
    %p187 = por %p185, %p186
    %s189 = sadd.s32 %s188, 1
    %p192 = scmp.eq.s32.totalorder %s13, 1
    %p193 = scmp.ne.s32.totalorder %s188, %s190
    %p194 = scmp.eq.s32.totalorder %s13, 0
    %p195 = por %p193, %p194
    %p196 = scmp.ne.s32.totalorder %s188, %s190
    %p197 = scmp.eq.s32.totalorder %s18, 1
    %p198 = por %p196, %p197
    %p199 = scmp.ne.s32.totalorder %s190, %s191
    %p200 = scmp.eq.s32.totalorder %s18, 0
    %p201 = por %p199, %p200
    %p202 = scmp.ne.s32.totalorder %s190, %s191
    %p203 = scmp.eq.s32.totalorder %s19, 1
    %p204 = por %p202, %p203
    %p206 = scmp.ne.s32.totalorder %s191, %s205
    %p207 = scmp.eq.s32.totalorder %s19, 0
    %p208 = por %p206, %p207
    %s209 = ssub.s32 %s20, %s39
    %s210 = ssub.s32 %s21, %s35
    %s211 = sor.u32 %s209, %s210
    %p212 = scmp.eq.s32.totalorder %s211, 0
    %s214 = sadd.s32 %s213, 1
    %s215 = scalar_select %p212, %s213, %s214
    %p218 = pneg %p212
    %p219 = scmp.eq.s32.totalorder %s13, 1
    %p220 = por %p218, %p219
    %p221 = scmp.ne.s32.totalorder %s213, %s216
    %p222 = scmp.eq.s32.totalorder %s13, 0
    %p223 = por %p221, %p222
    %p224 = scmp.ne.s32.totalorder %s213, %s216
    %p225 = scmp.eq.s32.totalorder %s18, 1
    %p226 = por %p224, %p225
    %p227 = scmp.ne.s32.totalorder %s216, %s217
    %p228 = scmp.eq.s32.totalorder %s18, 0
    %p229 = por %p227, %p228
    %p230 = scmp.ne.s32.totalorder %s216, %s217
    %p231 = scmp.eq.s32.totalorder %s19, 1
    %p232 = por %p230, %p231
    %p234 = scmp.ne.s32.totalorder %s217, %s233
    %p235 = scmp.eq.s32.totalorder %s19, 0
    %p236 = por %p234, %p235
    %p237 = scmp.le.s32.totalorder 1, %s13
    %p238 = scmp.lt.s32.totalorder %s13, 3
    %p239 = pnand %p237, %p238
    %p240 = pneg %p239
    // Predicated region
    $region9: #{_lambda_.5} parent=5 // pred_check
      _
    $region10: #{_lambda_.5} parent=5 // pred_check_branch
      %242 = sbr.rel (%p239) target = $region12
    $region11: #{_lambda_.5} parent=5 // pred_region
      %s243 = ssub.s32 %s13, 1
      // Predicated region
      $region13: #{_lambda_.5} parent=11 // pred_check
        %p244 = pneg %p81
      $region14: #{_lambda_.5} parent=11 // pred_check_branch
        %246 = sbr.rel (%p244) target = $region16
      $region15: #{_lambda_.5} parent=11 // pred_region
        _
      $region16: #{_lambda_.5} parent=11 // pred_fallthru
        _
      // Predicated region
      $region17: #{_lambda_.5} parent=11 // pred_check
        %p247 = pneg %p102
      $region18: #{_lambda_.5} parent=11 // pred_check_branch
        %249 = sbr.rel (%p247) target = $region20
      $region19: #{_lambda_.5} parent=11 // pred_region
        _
      $region20: #{_lambda_.5} parent=11 // pred_fallthru
        _
      // Predicated region
      $region21: #{_lambda_.5} parent=11 // pred_check
        %p250 = pneg %p128
      $region22: #{_lambda_.5} parent=11 // pred_check_branch
        %252 = sbr.rel (%p250) target = $region24
      $region23: #{_lambda_.5} parent=11 // pred_region
        %p253 = scmp.lt.s32.totalorder %s25, 0
        %s254 = scalar_select %p253, %s25, 0
        %s255 = smul.addr %s254, 4
        %s256 = scalar_lea.vmem %s3, %s255
      $region24: #{_lambda_.5} parent=11 // pred_fallthru
        _
      // Predicated region
      $region25: #{_lambda_.5} parent=11 // pred_check
        %p257 = pneg %p154
      $region26: #{_lambda_.5} parent=11 // pred_check_branch
        %259 = sbr.rel (%p257) target = $region28
      $region27: #{_lambda_.5} parent=11 // pred_region
        %p260 = scmp.lt.s32.totalorder %s25, 0
        %s261 = scalar_select %p260, %s25, 0
        %s262 = scalar_lea.vmem %s4, %s261
      $region28: #{_lambda_.5} parent=11 // pred_fallthru
        _
      // Predicated region
      $region29: #{_lambda_.5} parent=11 // pred_check
        %p263 = pneg %p180
      $region30: #{_lambda_.5} parent=11 // pred_check_branch
        %265 = sbr.rel (%p263) target = $region32
      $region31: #{_lambda_.5} parent=11 // pred_region
        %s266 = smul.u32 16, %s25
        %p267 = scmp.lt.s32.totalorder %s266, 15
        %s268 = scalar_select %p267, %s266, 15
        %s269 = smul.addr %s268, 4
        %s270 = scalar_lea.vmem %s5, %s269
        %s271 = smul.u32 16, %s25
      $region32: #{_lambda_.5} parent=11 // pred_fallthru
        _
      // Predicated region
      $region33: #{_lambda_.5} parent=11 // pred_check
        %p272 = pneg %p201
      $region34: #{_lambda_.5} parent=11 // pred_check_branch
        %274 = sbr.rel (%p272) target = $region36
      $region35: #{_lambda_.5} parent=11 // pred_region
        _
      $region36: #{_lambda_.5} parent=11 // pred_fallthru
        _
    $region12: #{_lambda_.5} parent=5 // pred_fallthru
      _
    %p275 = scmp.lt.s32.totalorder %s13, 2
    // Predicated region
    $region37: #{_lambda_.5} parent=5 // pred_check
      %p276 = pneg %p275
    $region38: #{_lambda_.5} parent=5 // pred_check_branch
      %278 = sbr.rel (%p276) target = $region40
    $region39: #{_lambda_.5} parent=5 // pred_region
      // Predicated region
      $region41: #{_lambda_.5} parent=39 // pred_check
        %p279 = pneg %p54
      $region42: #{_lambda_.5} parent=39 // pred_check_branch
        %281 = sbr.rel (%p279) target = $region44
      $region43: #{_lambda_.5} parent=39 // pred_region
        %p282 = scmp.lt.s32.totalorder %s20, 1
        %s283 = scalar_select %p282, %s20, 1
        %p284 = scmp.lt.s32.totalorder %s21, 0
        %s285 = scalar_select %p284, %s21, 0
        %s286 = sadd.s32 %s285, %s283
        %s287 = smul.addr %s286, 8
        %s288 = scalar_lea.vmem %s0, %s287
      $region44: #{_lambda_.5} parent=39 // pred_fallthru
        _
    $region40: #{_lambda_.5} parent=5 // pred_fallthru
      _
    %p289 = scmp.le.s32.totalorder 1, %s13
    %p290 = scmp.lt.s32.totalorder %s13, 3
    %p291 = pnand %p289, %p290
    %p292 = pneg %p291
    // Predicated region
    $region45: #{_lambda_.5} parent=5 // pred_check
      _
    $region46: #{_lambda_.5} parent=5 // pred_check_branch
      %294 = sbr.rel (%p291) target = $region48
    $region47: #{_lambda_.5} parent=5 // pred_region
      %s295 = ssub.s32 %s13, 1
      %p296 = scmp.lt.s32.totalorder %s23, 1
      %s297 = scalar_select %p296, %s23, 1
      %p298 = scmp.lt.s32.totalorder %s24, 0
      %s299 = scalar_select %p298, %s24, 0
      %s300 = sadd.s32 %s299, %s297
      %s301 = smul.addr %s300, 8
      %s302 = scalar_lea.vmem %s0, %s301
      %p303 = pneg %p60
      %p304 = pneg %p57
      %p305 = pneg %p81
      %p306 = pneg %p78
      %p307 = pneg %p102
      %p308 = pneg %p99
      %p309 = scmp.lt.s32.totalorder %s25, 0
      %s310 = scalar_select %p309, %s25, 0
      %s311 = smul.addr %s310, 4
      %s312 = scalar_lea.vmem %s3, %s311
      %p313 = pneg %p128
      %p314 = pneg %p125
      %p315 = scmp.lt.s32.totalorder %s25, 0
      %s316 = scalar_select %p315, %s25, 0
      %s317 = scalar_lea.vmem %s4, %s316
      %p318 = pneg %p154
      %p319 = pneg %p151
      %s320 = smul.u32 16, %s25
      %p321 = scmp.lt.s32.totalorder %s320, 15
      %s322 = scalar_select %p321, %s320, 15
      %s323 = smul.addr %s322, 4
      %s324 = scalar_lea.vmem %s5, %s323
      %p325 = pneg %p180
      %p326 = pneg %p177
      %p327 = pneg %p201
      %p328 = pneg %p198
      %p329 = pneg %p229
      %p330 = pneg %p226
      %p331 = scmp.lt.s32.totalorder %s23, 1
      %s332 = scalar_select %p331, %s23, 1
      %p333 = scmp.lt.s32.totalorder %s24, 0
      %s334 = scalar_select %p333, %s24, 0
      %s335 = sadd.s32 %s334, %s332
      %s336 = smul.addr %s335, 8
      %s337 = scalar_lea.vmem %s7, %s336
      %p338 = scmp.lt.s32.totalorder %s23, 1
      %s339 = scalar_select %p338, %s23, 1
      %p340 = scmp.lt.s32.totalorder %s24, 0
      %s341 = scalar_select %p340, %s24, 0
      %s342 = sadd.s32 %s341, %s339
      %s343 = smul.addr %s342, 8
      %s344 = scalar_lea.vmem %s0, %s343
      %p345 = scmp.lt.s32.totalorder %s25, 0
      %s346 = scalar_select %p345, %s25, 0
      %s347 = smul.addr %s346, 4
      %s348 = scalar_lea.vmem %s3, %s347
      %p349 = scmp.lt.s32.totalorder %s25, 0
      %s350 = scalar_select %p349, %s25, 0
      %s351 = scalar_lea.vmem %s4, %s350
      %s352 = smul.u32 16, %s25
      %p353 = scmp.lt.s32.totalorder %s352, 15
      %s354 = scalar_select %p353, %s352, 15
      %s355 = smul.addr %s354, 4
      %s356 = scalar_lea.vmem %s5, %s355
      %s357 = smul.u32 16, %s25
      %p358 = scmp.lt.s32.totalorder %s23, 1
      %s359 = scalar_select %p358, %s23, 1
      %p360 = scmp.lt.s32.totalorder %s24, 0
      %s361 = scalar_select %p360, %s24, 0
      %s362 = sadd.s32 %s361, %s359
      %s363 = smul.addr %s362, 8
      %s364 = scalar_lea.vmem %s7, %s363
      %p366 = scmp.eq.s32.totalorder %s25, 0
      // Predicated region
      $region49: #{_lambda_.5} parent=47 // pred_check
        %p367 = pneg %p366
      $region50: #{_lambda_.5} parent=47 // pred_check_branch
        %369 = sbr.rel (%p367) target = $region52
      $region51: #{_lambda_.5} parent=47 // pred_region
        %v370 = vld [vmem:[%s344] sm:$0xff]
        %v371 = vld [vmem:[%s1] sm:$0x1]
        %v372 = vld [vmem:[%s2] sm:$0x1]
        %vm373 = vcmask 261120
        %v374 = vsel %vm373, %v370, 0.0
        %375 = vadd.xlane.f32.xlu0 %v374
        %v376 = vpop.xlane.xlu0 %375
        %v377 = vrcp.pop 32.0
        %v378 = vmul.f32 %v376, %v377
        %v379 = vsub.f32 %v370, %v378
        %v380 = vmul.f32 %v379, %v379
        %v381 = vsel %vm373, %v380, 0.0
        %382 = vadd.xlane.f32.xlu0 %v381
        %v383 = vpop.xlane.xlu0 %382
        %v384 = vmul.f32 %v383, %v377
        %v385 = vadd.f32 %v384, 1e-05
        %v386 = vrsqrt.pop %v385
        %v387 = vmul.f32 %v379, %v386
        %v389 = vlaneseq
        %v390 = vshrl.u32 %v389, 7
        %v391 = vsub.s32 0, %v390
        %v392 = vrot.slane %v371, %v391
        %v394 = vmul.f32 %v387, %v392
        %v396 = vlaneseq
        %v397 = vshrl.u32 %v396, 7
        %v398 = vsub.s32 0, %v397
        %v399 = vrot.slane %v372, %v398
        %v401 = vadd.f32 %v394, %v399
        %v402 = vpack.c.bf16 %v401, %v401
        %vm403 = vcmask 257024
        %404 = vst.msk [vmem:[#allocation2] sm:$0xf] %vm403, %v402
        %405 = vst.msk [vmem:[#allocation3] sm:$0xff] %vm373, 0.0
      $region52: #{_lambda_.5} parent=47 // pred_fallthru
        _
      %v406 = vld [vmem:[#allocation2] sm:$0xf]
      %v407 = vld [vmem:[%s348] sm:$0xf]
      %v408 = vld [vmem:[%s348 + $0x4] sm:$0xf]
      %v409 = vld [vmem:[%s348 + $0x8] sm:$0xf]
      %v410 = vld [vmem:[%s348 + $0xc] sm:$0xf]
      %v411 = vld [vmem:[%s351] sm:$0x1]
      %v413 = vlaneseq
      %v414 = vshrl.u32 %v413, 7
      %v415 = vsub.s32 0, %v414
      %v416 = vrot.slane %v411, %v415
      %v422 = vunpack.c.l.b16 %v407
      %v423 = vunpack.c.l.b16 %v408
      %v424 = vunpack.c.l.b16 %v409
      %v425 = vunpack.c.l.b16 %v410
      %v426 = vpack.c.b16 %v423, %v422
      %v427 = vpack.c.b16 %v425, %v424
      %vm430 = vcmask 261120
      %v432 = vsel %vm430, %v406, 0
      %434 = vmatprep.subr.bf16.mxu0 0
      %435 = vmatpush1.bf16.msra.mxu0 0
      %436 = vmatprep.subr.bf16.mxu0 0
      %437 = vmatpush1.bf16.msra.mxu0 0
      %438 = vmatprep.subr.bf16.mxu0 0
      %439 = vmatpush1.bf16.msra.mxu0 0
      %440 = vmatprep.subr.bf16.mxu0 0
      %441 = vmatpush1.bf16.msra.mxu0 0
      %442 = vmatprep.subr.bf16.mxu0 0
      %443 = vmatpush1.bf16.msra.mxu0 0
      %444 = vmatprep.subr.bf16.mxu0 0
      %445 = vmatpush1.bf16.msra.mxu0 0
      %446 = vmatprep.subr.bf16.mxu0 0
      %447 = vmatpush1.bf16.msra.mxu0 %v427
      %448 = vmatprep.subr.bf16.mxu0 0
      %449 = vmatpush1.bf16.msra.mxu0 %v426
      %450 = vmatprep.subr.bf16.mxu0 0
      %451 = vmatpush2.bf16.msra.mxu0 0
      %452 = vmatprep.subr.bf16.mxu0 0
      %453 = vmatpush2.bf16.msra.mxu0 0
      %454 = vmatprep.subr.bf16.mxu0 0
      %455 = vmatpush2.bf16.msra.mxu0 0
      %456 = vmatprep.subr.bf16.mxu0 0
      %457 = vmatpush2.bf16.msra.mxu0 0
      %458 = vmatprep.subr.bf16.mxu0 0
      %459 = vmatpush2.bf16.msra.mxu0 0
      %460 = vmatprep.subr.bf16.mxu0 0
      %461 = vmatpush2.bf16.msra.mxu0 0
      %462 = vmatprep.subr.bf16.mxu0 0
      %463 = vmatpush2.bf16.msra.mxu0 0
      %464 = vmatprep.subr.bf16.mxu0 0
      %465 = vmatpush2.bf16.msra.mxu0 0
      %466 = vmatprep.mubr.bf16.mxu0 0
      %467 = vmatmul.mubr.bf16.gmra.mxu0 %v432
      %v468 = vpop.f32.mrf.mxu0
      %v469 = vadd.f32 %v416, %v468
      %v470 = vpop.f32.mrf.mxu0
      %v471 = vpop.f32.mrf.mxu0
      %v472 = vpop.f32.mrf.mxu0
      %473 = vdwg.mxu0
      %v474 = vmul.f32 %v469, 0.5
      %v475 = vmul.f32 %v469, %v469
      %v476 = vmul.f32 %v475, %v469
      %v477 = vmul.f32 %v476, 0.044715
      %v478 = vadd.f32 %v469, %v477
      %v479 = vmul.f32 %v478, 0.7978846
      %v480 = vtanh.pop %v479
      %v481 = vadd.f32 %v480, 1.0
      %v482 = vmul.f32 %v474, %v481
      %v483 = vpack.c.bf16 %v482, %v482
      %v484 = vld [vmem:[#allocation3] sm:$0xff]
      %v485 = vld [vmem:[%s356] sm:$0xf]
      %v486 = vld [vmem:[%s356 + $0x4] sm:$0xf]
      %v487 = vld [vmem:[%s356 + $0x8] sm:$0xf]
      %v488 = vld [vmem:[%s356 + $0xc] sm:$0xf]
      %v489 = vld [vmem:[%s356 + $0x10] sm:$0xf]
      %v490 = vld [vmem:[%s356 + $0x14] sm:$0xf]
      %v491 = vld [vmem:[%s356 + $0x18] sm:$0xf]
      %v492 = vld [vmem:[%s356 + $0x1c] sm:$0xf]
      %v493 = vld [vmem:[%s356 + $0x20] sm:$0xf]
      %v494 = vld [vmem:[%s356 + $0x24] sm:$0xf]
      %v495 = vld [vmem:[%s356 + $0x28] sm:$0xf]
      %v496 = vld [vmem:[%s356 + $0x2c] sm:$0xf]
      %v497 = vld [vmem:[%s356 + $0x30] sm:$0xf]
      %v498 = vld [vmem:[%s356 + $0x34] sm:$0xf]
      %v499 = vld [vmem:[%s356 + $0x38] sm:$0xf]
      %v500 = vld [vmem:[%s356 + $0x3c] sm:$0xf]
      %v517 = vunpack.c.l.b16 %v485
      %v518 = vunpack.c.l.b16 %v486
      %v519 = vunpack.c.l.b16 %v487
      %v520 = vunpack.c.l.b16 %v488
      %v521 = vunpack.c.l.b16 %v489
      %v522 = vunpack.c.l.b16 %v490
      %v523 = vunpack.c.l.b16 %v491
      %v524 = vunpack.c.l.b16 %v492
      %v525 = vunpack.c.l.b16 %v493
      %v526 = vunpack.c.l.b16 %v494
      %v527 = vunpack.c.l.b16 %v495
      %v528 = vunpack.c.l.b16 %v496
      %v529 = vunpack.c.l.b16 %v497
      %v530 = vunpack.c.l.b16 %v498
      %v531 = vunpack.c.l.b16 %v499
      %v532 = vunpack.c.l.b16 %v500
      %v533 = vpack.c.b16 %v518, %v517
      %v534 = vpack.c.b16 %v520, %v519
      %v535 = vpack.c.b16 %v522, %v521
      %v536 = vpack.c.b16 %v524, %v523
      %v537 = vpack.c.b16 %v526, %v525
      %v538 = vpack.c.b16 %v528, %v527
      %v539 = vpack.c.b16 %v530, %v529
      %v540 = vpack.c.b16 %v532, %v531
      %549 = vmatprep.subr.bf16.mxu0 0
      %550 = vmatpush1.bf16.msra.mxu0 %v540
      %551 = vmatprep.subr.bf16.mxu0 0
      %552 = vmatpush1.bf16.msra.mxu0 %v539
      %553 = vmatprep.subr.bf16.mxu0 0
      %554 = vmatpush1.bf16.msra.mxu0 %v538
      %555 = vmatprep.subr.bf16.mxu0 0
      %556 = vmatpush1.bf16.msra.mxu0 %v537
      %557 = vmatprep.subr.bf16.mxu0 0
      %558 = vmatpush1.bf16.msra.mxu0 %v536
      %559 = vmatprep.subr.bf16.mxu0 0
      %560 = vmatpush1.bf16.msra.mxu0 %v535
      %561 = vmatprep.subr.bf16.mxu0 0
      %562 = vmatpush1.bf16.msra.mxu0 %v534
      %563 = vmatprep.subr.bf16.mxu0 0
      %564 = vmatpush1.bf16.msra.mxu0 %v533
      %565 = vmatprep.subr.bf16.mxu0 0
      %566 = vmatpush2.bf16.msra.mxu0 0
      %567 = vmatprep.subr.bf16.mxu0 0
      %568 = vmatpush2.bf16.msra.mxu0 0
      %569 = vmatprep.subr.bf16.mxu0 0
      %570 = vmatpush2.bf16.msra.mxu0 0
      %571 = vmatprep.subr.bf16.mxu0 0
      %572 = vmatpush2.bf16.msra.mxu0 0
      %573 = vmatprep.subr.bf16.mxu0 0
      %574 = vmatpush2.bf16.msra.mxu0 0
      %575 = vmatprep.subr.bf16.mxu0 0
      %576 = vmatpush2.bf16.msra.mxu0 0
      %577 = vmatprep.subr.bf16.mxu0 0
      %578 = vmatpush2.bf16.msra.mxu0 0
      %579 = vmatprep.subr.bf16.mxu0 0
      %580 = vmatpush2.bf16.msra.mxu0 0
      %581 = vmatprep.mubr.bf16.mxu0 0
      %582 = vmatmul.mubr.bf16.gmra.mxu0 %v483
      %v583 = vpop.f32.mrf.mxu0
      %v584 = vadd.f32 0.0, %v583
      %v585 = vpop.f32.mrf.mxu0
      %v586 = vpop.f32.mrf.mxu0
      %v587 = vpop.f32.mrf.mxu0
      %588 = vdwg.mxu0
      %v589 = vadd.f32 %v484, %v584
      %590 = vst.msk [vmem:[#allocation3] sm:$0xff] %vm430, %v589
      // Predicated region
      $region53: #{_lambda_.5} parent=47 // pred_check
        %p591 = pneg %p366
      $region54: #{_lambda_.5} parent=47 // pred_check_branch
        %593 = sbr.rel (%p591) target = $region56
      $region55: #{_lambda_.5} parent=47 // pred_region
        %v594 = vld [vmem:[%s344] sm:$0xff]
        %v595 = vld [vmem:[#allocation3] sm:$0xff]
        %v596 = vadd.f32 %v594, %v595
        %v597 = vld [vmem:[%s6] sm:$0x1]
        %v599 = vlaneseq
        %v600 = vshrl.u32 %v599, 7
        %v601 = vsub.s32 0, %v600
        %v602 = vrot.slane %v597, %v601
        %v604 = vadd.f32 %v596, %v602
        %605 = vst.msk [vmem:[%s364] sm:$0xff] %vm430, %v604
      $region56: #{_lambda_.5} parent=47 // pred_fallthru
        _
      %p606 = scmp.lt.s32.totalorder %s23, 1
      %s607 = scalar_select %p606, %s23, 1
      %p608 = scmp.lt.s32.totalorder %s24, 0
      %s609 = scalar_select %p608, %s24, 0
      %s610 = sadd.s32 %s609, %s607
      %s611 = smul.addr %s610, 8
      %s612 = scalar_lea.vmem %s7, %s611
      // Predicated region
      $region57: #{_lambda_.5} parent=47 // pred_check
        %p613 = pneg %p226
      $region58: #{_lambda_.5} parent=47 // pred_check_branch
        %615 = sbr.rel (%p613) target = $region60
      $region59: #{_lambda_.5} parent=47 // pred_region
        _
      $region60: #{_lambda_.5} parent=47 // pred_fallthru
        _
    $region48: #{_lambda_.5} parent=5 // pred_fallthru
      _
    %p616 = scmp.le.s32.totalorder 2, %s13
    // Predicated region
    $region61: #{_lambda_.5} parent=5 // pred_check
      %p617 = pneg %p616
    $region62: #{_lambda_.5} parent=5 // pred_check_branch
      %619 = sbr.rel (%p617) target = $region64
    $region63: #{_lambda_.5} parent=5 // pred_region
      %s620 = ssub.s32 %s13, 2
      // Predicated region
      $region65: #{_lambda_.5} parent=63 // pred_check
        %p621 = pneg %p232
      $region66: #{_lambda_.5} parent=63 // pred_check_branch
        %623 = sbr.rel (%p621) target = $region68
      $region67: #{_lambda_.5} parent=63 // pred_region
        %p624 = scmp.lt.s32.totalorder %s26, 1
        %s625 = scalar_select %p624, %s26, 1
        %p626 = scmp.lt.s32.totalorder %s27, 0
        %s627 = scalar_select %p626, %s27, 0
        %s628 = sadd.s32 %s627, %s625
        %s629 = smul.addr %s628, 8
        %s630 = scalar_lea.vmem %s7, %s629
      $region68: #{_lambda_.5} parent=63 // pred_fallthru
        _
    $region64: #{_lambda_.5} parent=5 // pred_fallthru
      _
  $region6: #{_lambda_.5} parent=0 // loop_footer
    %s17 = sadd.s32 1, %s13
  $region7: #{_lambda_.5} parent=0 // loop_footer_branch
    %12 = sbr.rel target = $region3
  $region8: #{_lambda_.5} parent=0 // loop_exit
    _

</llo_original>
